<compile_context>
chip_gen: v5e
topology: v5e:2x2
jax: 0.10.0
libtpu: 0.0.40
codegen_flags: <defaults>
</compile_context>

<pallas_src>
import functools

import jax
import jax.numpy as jnp
from jax import lax
from jax.experimental import pallas as pl
from jax.experimental.pallas import tpu as pltpu


# ----------------------------------------------------------------------------- kernel

def _recip(x):
    """EUP approx reciprocal refined with one Newton step (~f32 accurate, no divide)."""
    r = pl.reciprocal(x, approx=True)
    return r * (2.0 - x * r)


def _danet_kernel(gamma_ref, x_ref, mask_ref, wc_ref, sc_ref, bc_ref,
                  a_ref, kqb_ref, wv_ref, bv_ref, wo_ref, bo_ref, o_ref, *, H, W):
    """Fused DANet forward for one batch element. x: (1, N, C), N = H*W (channels last)."""
    x = x_ref[0]                                   # (N, C)
    N = H * W

    def conv3x3_bn_relu(inp, layer):
        """3x3 'same' conv as 9 shifted matmul-accumulates + folded BN + ReLU."""
        acc = None
        t = 0
        for dy in (-1, 0, 1):
            for dx in (-1, 0, 1):
                off = dy * W + dx
                if off == 0:
                    shifted = inp
                else:
                    # shifted[n] = inp[(n + off) mod N]; out-of-image taps masked below.
                    shifted = pltpu.roll(inp, shift=(-off) % N, axis=0)
                if not (dy == 0 and dx == 0):
                    shifted = shifted * mask_ref[t]
                term = jnp.dot(shifted, wc_ref[layer, t],
                               preferred_element_type=jnp.float32)
                acc = term if acc is None else acc + term
                t += 1
        return jnp.maximum(acc * sc_ref[layer] + bc_ref[layer], 0.0)

    g_pam = gamma_ref[0]
    g_cam = gamma_ref[1]

    # ---------- Position Attention branch: conv2pam -> PAM -> pam2conv
    p_in = conv3x3_bn_relu(x, 0)
    # energy = q k^T with q/k projections folded into A = Wq Wk^T and kqb = bq Wk^T
    # (row-constant bias terms cancel in the row softmax).
    xa = jnp.dot(p_in, a_ref[...], preferred_element_type=jnp.float32) + kqb_ref[...]
    vproj = jnp.dot(p_in, wv_ref[...], preferred_element_type=jnp.float32) + bv_ref[...]
    energy = lax.dot_general(xa, p_in, (((1,), (1,)), ((), ())),
                             preferred_element_type=jnp.float32)        # (N, N)
    energy = energy - jnp.max(energy, axis=-1, keepdims=True)
    pexp = jnp.exp(energy)
    attn = pexp * _recip(jnp.sum(pexp, axis=-1, keepdims=True))
    pam_att = g_pam * jnp.dot(attn, vproj, preferred_element_type=jnp.float32) + p_in
    pam_feat = conv3x3_bn_relu(pam_att, 2)

    # ---------- Channel Attention branch: conv2cam -> CAM -> cam2conv
    c_in = conv3x3_bn_relu(x, 1)
    cen = lax.dot_general(c_in, c_in, (((0,), (0,)), ((), ())),
                          preferred_element_type=jnp.float32)           # (C, C)
    cen = jnp.max(cen, axis=-1, keepdims=True) - cen
    cen = cen - jnp.max(cen, axis=-1, keepdims=True)
    cexp = jnp.exp(cen)
    cattn = cexp * _recip(jnp.sum(cexp, axis=-1, keepdims=True))
    cam_att = g_cam * lax.dot_general(c_in, cattn, (((1,), (1,)), ((), ())),
                                      preferred_element_type=jnp.float32) + c_in
    cam_feat = conv3x3_bn_relu(cam_att, 3)

    # ---------- feats_sum + 1x1 conv head (Dropout2d == identity in eval mode)
    feats = pam_feat + cam_feat
    o_ref[0] = jnp.dot(feats, wo_ref[...], preferred_element_type=jnp.float32) + bo_ref[...]


# ----------------------------------------------------------------------------- wrapper

def danet_forward(x_nchw, p):
    x = jnp.transpose(x_nchw, (0, 2, 3, 1))                # NCHW -> NHWC
    B, H, W, C = x.shape
    N = H * W
    NC = p["w_out"].shape[1]

    # Stack the four conv blocks: [conv2pam, conv2cam, pam2conv, cam2conv].
    wc = jnp.stack([p["w_c2p"], p["w_c2c"], p["w_p2c"], p["w_cc2c"]]).reshape(4, 9, C, C)
    sc = jnp.stack([p["s_c2p"], p["s_c2c"], p["s_p2c"], p["s_cc2c"]])   # (4, 1, C)
    bc = jnp.stack([p["b_c2p"], p["b_c2c"], p["b_p2c"], p["b_cc2c"]])   # (4, 1, C)

    # Fold PAM q/k projections (see kernel): A = Wq Wk^T, kqb = bq Wk^T.
    a_mat = p["wq"] @ p["wk"].T                                         # (C, C)
    kqb = p["bq"] @ p["wk"].T                                           # (1, C)

    # Precomputed boundary masks for the 9 conv taps on the flattened H*W axis.
    h_idx = jnp.repeat(jnp.arange(H), W)
    w_idx = jnp.tile(jnp.arange(W), H)
    masks = []
    for dy in (-1, 0, 1):
        for dx in (-1, 0, 1):
            masks.append((h_idx + dy >= 0) & (h_idx + dy < H) &
                         (w_idx + dx >= 0) & (w_idx + dx < W))
    conv_mask = jnp.stack(masks).astype(jnp.float32).reshape(9, N, 1)

    gammas = jnp.asarray([p["gamma_pam"], p["gamma_cam"]], dtype=jnp.float32)

    kern = functools.partial(_danet_kernel, H=H, W=W)
    out = pl.pallas_call(
        kern,
        out_shape=jax.ShapeDtypeStruct((B, N, NC), jnp.float32),
        grid=(B,),
        in_specs=[
            pl.BlockSpec(memory_space=pltpu.MemorySpace.SMEM),     # gammas (2,)
            pl.BlockSpec((1, N, C), lambda b: (b, 0, 0)),          # x (per batch)
            pl.BlockSpec((9, N, 1), lambda b: (0, 0, 0)),          # conv boundary masks
            pl.BlockSpec((4, 9, C, C), lambda b: (0, 0, 0, 0)),    # conv weights
            pl.BlockSpec((4, 1, C), lambda b: (0, 0, 0)),          # folded BN scales
            pl.BlockSpec((4, 1, C), lambda b: (0, 0, 0)),          # folded BN biases
            pl.BlockSpec((C, C), lambda b: (0, 0)),                # A = Wq Wk^T
            pl.BlockSpec((1, C), lambda b: (0, 0)),                # bq Wk^T
            pl.BlockSpec((C, C), lambda b: (0, 0)),                # Wv
            pl.BlockSpec((1, C), lambda b: (0, 0)),                # bv
            pl.BlockSpec((C, NC), lambda b: (0, 0)),               # head weight
            pl.BlockSpec((1, NC), lambda b: (0, 0)),               # head bias
        ],
        out_specs=pl.BlockSpec((1, N, NC), lambda b: (b, 0, 0)),
        compiler_params=pltpu.CompilerParams(
            dimension_semantics=("parallel",)),
    )(gammas, x.reshape(B, N, C), conv_mask, wc, sc, bc,
      a_mat, kqb, p["wv"], p["bv"], p["w_out"], p["b_out"])

    out = out.reshape(B, H, W, NC)
    return jnp.transpose(out, (0, 3, 1, 2))                # NHWC -> NCHW


# ----------------------------------------------------------------------------- pure-JAX reference

def _im2col3x3(x_nhwc):
    B, H, W, C = x_nhwc.shape
    xp = jnp.pad(x_nhwc, ((0, 0), (1, 1), (1, 1), (0, 0)))
    patches = jnp.concatenate(
        [xp[:, dy:dy + H, dx:dx + W, :] for dy in range(3) for dx in range(3)], axis=-1)
    return patches.reshape(B * H * W, 9 * C)


def _ref_conv(x_nhwc, w_mat, scale, bias):
    B, H, W, C = x_nhwc.shape
    y = _im2col3x3(x_nhwc) @ w_mat
    return jnp.maximum(y * scale + bias, 0.0).reshape(B, H, W, C)


def danet_reference(x_nchw, p):
    x = jnp.transpose(x_nchw, (0, 2, 3, 1))
    B, H, W, C = x.shape
    N = H * W

    pam_in = _ref_conv(x, p["w_c2p"], p["s_c2p"], p["b_c2p"]).reshape(B, N, C)
    q = pam_in @ p["wq"] + p["bq"]
    k = pam_in @ p["wk"] + p["bk"]
    v = pam_in @ p["wv"] + p["bv"]
    attn = jax.nn.softmax(jnp.einsum("bnc,bmc->bnm", q, k), axis=-1)
    pam_att = p["gamma_pam"] * jnp.einsum("bnm,bmc->bnc", attn, v) + pam_in
    pam_feat = _ref_conv(pam_att.reshape(B, H, W, C), p["w_p2c"], p["s_p2c"], p["b_p2c"])

    cam_in = _ref_conv(x, p["w_c2c"], p["s_c2c"], p["b_c2c"]).reshape(B, N, C)
    energy = jnp.einsum("bnc,bnd->bcd", cam_in, cam_in)
    energy_new = jnp.max(energy, axis=-1, keepdims=True) - energy
    attn_c = jax.nn.softmax(energy_new, axis=-1)
    cam_att = p["gamma_cam"] * jnp.einsum("bcd,bnd->bnc", attn_c, cam_in) + cam_in
    cam_feat = _ref_conv(cam_att.reshape(B, H, W, C), p["w_cc2c"], p["s_cc2c"], p["b_cc2c"])

    feats = (pam_feat + cam_feat).reshape(B * N, C)
    out = feats @ p["w_out"] + p["b_out"]
    return jnp.transpose(out.reshape(B, H, W, -1), (0, 3, 1, 2))


# ----------------------------------------------------------------------------- main

if __name__ == "__main__":
    B, C, H, W = 2, 32, 8, 8          # inter_channel=32 (scaled down from 512)
    N_CLASSES = 8
    C8 = C // 8

    key = jax.random.PRNGKey(0)
    keys = jax.random.split(key, 24)
    ki = iter(keys)

    def conv_params(k):
        kw, ks, kb = jax.random.split(k, 3)
        w = jax.random.normal(kw, (9 * C, C), jnp.float32) * 0.05
        scale = 1.0 + 0.1 * jax.random.normal(ks, (1, C), jnp.float32)
        bias = 0.05 * jax.random.normal(kb, (1, C), jnp.float32)
        return w, scale, bias

    p = {}
    p["w_c2p"], p["s_c2p"], p["b_c2p"] = conv_params(next(ki))
    p["w_c2c"], p["s_c2c"], p["b_c2c"] = conv_params(next(ki))
    p["w_p2c"], p["s_p2c"], p["b_p2c"] = conv_params(next(ki))
    p["w_cc2c"], p["s_cc2c"], p["b_cc2c"] = conv_params(next(ki))

    p["wq"] = jax.random.normal(next(ki), (C, C8), jnp.float32) * 0.1
    p["bq"] = 0.02 * jax.random.normal(next(ki), (1, C8), jnp.float32)
    p["wk"] = jax.random.normal(next(ki), (C, C8), jnp.float32) * 0.1
    p["bk"] = 0.02 * jax.random.normal(next(ki), (1, C8), jnp.float32)
    p["wv"] = jax.random.normal(next(ki), (C, C), jnp.float32) * 0.1
    p["bv"] = 0.02 * jax.random.normal(next(ki), (1, C), jnp.float32)
    # PyTorch inits gamma=0; nonzero deterministic values exercise the attention paths.
    p["gamma_pam"] = 0.75
    p["gamma_cam"] = 0.6

    p["w_out"] = jax.random.normal(next(ki), (C, N_CLASSES), jnp.float32) * 0.1
    p["b_out"] = 0.02 * jax.random.normal(next(ki), (1, N_CLASSES), jnp.float32)

    x = jax.random.normal(next(ki), (B, C, H, W), jnp.float32)

    out = jax.block_until_ready(danet_forward(x, p))
    ref = jax.block_until_ready(danet_reference(x, p))

    assert out.shape == (B, N_CLASSES, H, W), out.shape
    # 5e-3 tolerance: approx-reciprocal (+Newton) softmax and the folded Wq Wk^T
    # reassociation introduce only ~1e-4-level differences vs the reference.
    assert jnp.allclose(out, ref, rtol=5e-3, atol=5e-3), (
        float(jnp.max(jnp.abs(out - ref))))

    print("KERNEL_OK")
</pallas_src>

<mosaic_0001>
module attributes {stable_mosaic.version = 11 : i64} {
  func.func @_danet_kernel(%arg0: i32, %arg1: memref<2xf32, #tpu.memory_space<smem>>, %arg2: memref<1x64x32xf32, #tpu.memory_space<vmem>>, %arg3: memref<9x64x1xf32, #tpu.memory_space<vmem>>, %arg4: memref<4x9x32x32xf32, #tpu.memory_space<vmem>>, %arg5: memref<4x1x32xf32, #tpu.memory_space<vmem>>, %arg6: memref<4x1x32xf32, #tpu.memory_space<vmem>>, %arg7: memref<32x32xf32, #tpu.memory_space<vmem>>, %arg8: memref<1x32xf32, #tpu.memory_space<vmem>>, %arg9: memref<32x32xf32, #tpu.memory_space<vmem>>, %arg10: memref<1x32xf32, #tpu.memory_space<vmem>>, %arg11: memref<32x8xf32, #tpu.memory_space<vmem>>, %arg12: memref<1x8xf32, #tpu.memory_space<vmem>>, %arg13: memref<1x64x8xf32, #tpu.memory_space<vmem>>) attributes {dimension_semantics = [#tpu.dimension_semantics<parallel>], iteration_bounds = array<i64: 2>, scalar_prefetch = 0 : i64, scratch_operands = 0 : i64, tpu.core_type = #tpu.core_type<tc>, window_params = [{transform_indices = @transform_0, window_bounds = array<i64: 2>}, {transform_indices = @transform_1, window_bounds = array<i64: 1, 64, 32>}, {pipeline_mode = #tpu.pipeline_mode<synchronous>, transform_indices = @transform_2, window_bounds = array<i64: 9, 64, 1>}, {pipeline_mode = #tpu.pipeline_mode<synchronous>, transform_indices = @transform_3, window_bounds = array<i64: 4, 9, 32, 32>}, {pipeline_mode = #tpu.pipeline_mode<synchronous>, transform_indices = @transform_4, window_bounds = array<i64: 4, 1, 32>}, {pipeline_mode = #tpu.pipeline_mode<synchronous>, transform_indices = @transform_5, window_bounds = array<i64: 4, 1, 32>}, {pipeline_mode = #tpu.pipeline_mode<synchronous>, transform_indices = @transform_6, window_bounds = array<i64: 32, 32>}, {pipeline_mode = #tpu.pipeline_mode<synchronous>, transform_indices = @transform_7, window_bounds = array<i64: 1, 32>}, {pipeline_mode = #tpu.pipeline_mode<synchronous>, transform_indices = @transform_8, window_bounds = array<i64: 32, 32>}, {pipeline_mode = #tpu.pipeline_mode<synchronous>, transform_indices = @transform_9, window_bounds = array<i64: 1, 32>}, {pipeline_mode = #tpu.pipeline_mode<synchronous>, transform_indices = @transform_10, window_bounds = array<i64: 32, 8>}, {pipeline_mode = #tpu.pipeline_mode<synchronous>, transform_indices = @transform_11, window_bounds = array<i64: 1, 8>}, {transform_indices = @transform_12, window_bounds = array<i64: 1, 64, 8>}]} {
    %c0 = arith.constant 0 : index
    %c0_0 = arith.constant 0 : index
    %c0_1 = arith.constant 0 : index
    %0 = vector.load %arg2[%c0, %c0_0, %c0_1] : memref<1x64x32xf32, #tpu.memory_space<vmem>>, vector<1x64x32xf32>
    %1 = vector.shape_cast %0 : vector<1x64x32xf32> to vector<64x32xf32>
    %c0_2 = arith.constant 0 : index
    %2 = memref.load %arg1[%c0_2] : memref<2xf32, #tpu.memory_space<smem>>
    %c1 = arith.constant 1 : index
    %3 = memref.load %arg1[%c1] : memref<2xf32, #tpu.memory_space<smem>>
    %c9_i32 = arith.constant 9 : i32
    %4 = tpu.dynamic_rotate %1 by %c9_i32 dim 0 : vector<64x32xf32>, i32 -> vector<64x32xf32>
    %c0_3 = arith.constant 0 : index
    %c0_4 = arith.constant 0 : index
    %c0_5 = arith.constant 0 : index
    %5 = vector.load %arg3[%c0_3, %c0_4, %c0_5] : memref<9x64x1xf32, #tpu.memory_space<vmem>>, vector<1x64x1xf32>
    %6 = vector.shape_cast %5 : vector<1x64x1xf32> to vector<64x1xf32>
    %7 = vector.broadcast %6 : vector<64x1xf32> to vector<64x32xf32>
    %8 = arith.mulf %4, %7 : vector<64x32xf32>
    %c0_6 = arith.constant 0 : index
    %c0_7 = arith.constant 0 : index
    %c0_8 = arith.constant 0 : index
    %c0_9 = arith.constant 0 : index
    %9 = vector.load %arg4[%c0_6, %c0_7, %c0_8, %c0_9] : memref<4x9x32x32xf32, #tpu.memory_space<vmem>>, vector<1x1x32x32xf32>
    %10 = vector.shape_cast %9 : vector<1x1x32x32xf32> to vector<32x32xf32>
    %cst = arith.constant dense<0.000000e+00> : vector<64x32xf32>
    %11 = tpu.matmul %8, %10, %cst {dimension_numbers = #tpu.dot_dimension_numbers<[1], [0], [0], [1], [0, 0, 1, 1], [], []>} : vector<64x32xf32>, vector<32x32xf32>, vector<64x32xf32> -> vector<64x32xf32>
    %c8_i32 = arith.constant 8 : i32
    %12 = tpu.dynamic_rotate %1 by %c8_i32 dim 0 : vector<64x32xf32>, i32 -> vector<64x32xf32>
    %c1_10 = arith.constant 1 : index
    %c0_11 = arith.constant 0 : index
    %c0_12 = arith.constant 0 : index
    %13 = vector.load %arg3[%c1_10, %c0_11, %c0_12] : memref<9x64x1xf32, #tpu.memory_space<vmem>>, vector<1x64x1xf32>
    %14 = vector.shape_cast %13 : vector<1x64x1xf32> to vector<64x1xf32>
    %15 = vector.broadcast %14 : vector<64x1xf32> to vector<64x32xf32>
    %16 = arith.mulf %12, %15 : vector<64x32xf32>
    %c0_13 = arith.constant 0 : index
    %c1_14 = arith.constant 1 : index
    %c0_15 = arith.constant 0 : index
    %c0_16 = arith.constant 0 : index
    %17 = vector.load %arg4[%c0_13, %c1_14, %c0_15, %c0_16] : memref<4x9x32x32xf32, #tpu.memory_space<vmem>>, vector<1x1x32x32xf32>
    %18 = vector.shape_cast %17 : vector<1x1x32x32xf32> to vector<32x32xf32>
    %cst_17 = arith.constant dense<0.000000e+00> : vector<64x32xf32>
    %19 = tpu.matmul %16, %18, %cst_17 {dimension_numbers = #tpu.dot_dimension_numbers<[1], [0], [0], [1], [0, 0, 1, 1], [], []>} : vector<64x32xf32>, vector<32x32xf32>, vector<64x32xf32> -> vector<64x32xf32>
    %20 = arith.addf %11, %19 : vector<64x32xf32>
    %c7_i32 = arith.constant 7 : i32
    %21 = tpu.dynamic_rotate %1 by %c7_i32 dim 0 : vector<64x32xf32>, i32 -> vector<64x32xf32>
    %c2 = arith.constant 2 : index
    %c0_18 = arith.constant 0 : index
    %c0_19 = arith.constant 0 : index
    %22 = vector.load %arg3[%c2, %c0_18, %c0_19] : memref<9x64x1xf32, #tpu.memory_space<vmem>>, vector<1x64x1xf32>
    %23 = vector.shape_cast %22 : vector<1x64x1xf32> to vector<64x1xf32>
    %24 = vector.broadcast %23 : vector<64x1xf32> to vector<64x32xf32>
    %25 = arith.mulf %21, %24 : vector<64x32xf32>
    %c0_20 = arith.constant 0 : index
    %c2_21 = arith.constant 2 : index
    %c0_22 = arith.constant 0 : index
    %c0_23 = arith.constant 0 : index
    %26 = vector.load %arg4[%c0_20, %c2_21, %c0_22, %c0_23] : memref<4x9x32x32xf32, #tpu.memory_space<vmem>>, vector<1x1x32x32xf32>
    %27 = vector.shape_cast %26 : vector<1x1x32x32xf32> to vector<32x32xf32>
    %cst_24 = arith.constant dense<0.000000e+00> : vector<64x32xf32>
    %28 = tpu.matmul %25, %27, %cst_24 {dimension_numbers = #tpu.dot_dimension_numbers<[1], [0], [0], [1], [0, 0, 1, 1], [], []>} : vector<64x32xf32>, vector<32x32xf32>, vector<64x32xf32> -> vector<64x32xf32>
    %29 = arith.addf %20, %28 : vector<64x32xf32>
    %c1_i32 = arith.constant 1 : i32
    %30 = tpu.dynamic_rotate %1 by %c1_i32 dim 0 : vector<64x32xf32>, i32 -> vector<64x32xf32>
    %c3 = arith.constant 3 : index
    %c0_25 = arith.constant 0 : index
    %c0_26 = arith.constant 0 : index
    %31 = vector.load %arg3[%c3, %c0_25, %c0_26] : memref<9x64x1xf32, #tpu.memory_space<vmem>>, vector<1x64x1xf32>
    %32 = vector.shape_cast %31 : vector<1x64x1xf32> to vector<64x1xf32>
    %33 = vector.broadcast %32 : vector<64x1xf32> to vector<64x32xf32>
    %34 = arith.mulf %30, %33 : vector<64x32xf32>
    %c0_27 = arith.constant 0 : index
    %c3_28 = arith.constant 3 : index
    %c0_29 = arith.constant 0 : index
    %c0_30 = arith.constant 0 : index
    %35 = vector.load %arg4[%c0_27, %c3_28, %c0_29, %c0_30] : memref<4x9x32x32xf32, #tpu.memory_space<vmem>>, vector<1x1x32x32xf32>
    %36 = vector.shape_cast %35 : vector<1x1x32x32xf32> to vector<32x32xf32>
    %cst_31 = arith.constant dense<0.000000e+00> : vector<64x32xf32>
    %37 = tpu.matmul %34, %36, %cst_31 {dimension_numbers = #tpu.dot_dimension_numbers<[1], [0], [0], [1], [0, 0, 1, 1], [], []>} : vector<64x32xf32>, vector<32x32xf32>, vector<64x32xf32> -> vector<64x32xf32>
    %38 = arith.addf %29, %37 : vector<64x32xf32>
    %c0_32 = arith.constant 0 : index
    %c4 = arith.constant 4 : index
    %c0_33 = arith.constant 0 : index
    %c0_34 = arith.constant 0 : index
    %39 = vector.load %arg4[%c0_32, %c4, %c0_33, %c0_34] : memref<4x9x32x32xf32, #tpu.memory_space<vmem>>, vector<1x1x32x32xf32>
    %40 = vector.shape_cast %39 : vector<1x1x32x32xf32> to vector<32x32xf32>
    %cst_35 = arith.constant dense<0.000000e+00> : vector<64x32xf32>
    %41 = tpu.matmul %1, %40, %cst_35 {dimension_numbers = #tpu.dot_dimension_numbers<[1], [0], [0], [1], [0, 0, 1, 1], [], []>} : vector<64x32xf32>, vector<32x32xf32>, vector<64x32xf32> -> vector<64x32xf32>
    %42 = arith.addf %38, %41 : vector<64x32xf32>
    %c63_i32 = arith.constant 63 : i32
    %43 = tpu.dynamic_rotate %1 by %c63_i32 dim 0 : vector<64x32xf32>, i32 -> vector<64x32xf32>
    %c5 = arith.constant 5 : index
    %c0_36 = arith.constant 0 : index
    %c0_37 = arith.constant 0 : index
    %44 = vector.load %arg3[%c5, %c0_36, %c0_37] : memref<9x64x1xf32, #tpu.memory_space<vmem>>, vector<1x64x1xf32>
    %45 = vector.shape_cast %44 : vector<1x64x1xf32> to vector<64x1xf32>
    %46 = vector.broadcast %45 : vector<64x1xf32> to vector<64x32xf32>
    %47 = arith.mulf %43, %46 : vector<64x32xf32>
    %c0_38 = arith.constant 0 : index
    %c5_39 = arith.constant 5 : index
    %c0_40 = arith.constant 0 : index
    %c0_41 = arith.constant 0 : index
    %48 = vector.load %arg4[%c0_38, %c5_39, %c0_40, %c0_41] : memref<4x9x32x32xf32, #tpu.memory_space<vmem>>, vector<1x1x32x32xf32>
    %49 = vector.shape_cast %48 : vector<1x1x32x32xf32> to vector<32x32xf32>
    %cst_42 = arith.constant dense<0.000000e+00> : vector<64x32xf32>
    %50 = tpu.matmul %47, %49, %cst_42 {dimension_numbers = #tpu.dot_dimension_numbers<[1], [0], [0], [1], [0, 0, 1, 1], [], []>} : vector<64x32xf32>, vector<32x32xf32>, vector<64x32xf32> -> vector<64x32xf32>
    %51 = arith.addf %42, %50 : vector<64x32xf32>
    %c57_i32 = arith.constant 57 : i32
    %52 = tpu.dynamic_rotate %1 by %c57_i32 dim 0 : vector<64x32xf32>, i32 -> vector<64x32xf32>
    %c6 = arith.constant 6 : index
    %c0_43 = arith.constant 0 : index
    %c0_44 = arith.constant 0 : index
    %53 = vector.load %arg3[%c6, %c0_43, %c0_44] : memref<9x64x1xf32, #tpu.memory_space<vmem>>, vector<1x64x1xf32>
    %54 = vector.shape_cast %53 : vector<1x64x1xf32> to vector<64x1xf32>
    %55 = vector.broadcast %54 : vector<64x1xf32> to vector<64x32xf32>
    %56 = arith.mulf %52, %55 : vector<64x32xf32>
    %c0_45 = arith.constant 0 : index
    %c6_46 = arith.constant 6 : index
    %c0_47 = arith.constant 0 : index
    %c0_48 = arith.constant 0 : index
    %57 = vector.load %arg4[%c0_45, %c6_46, %c0_47, %c0_48] : memref<4x9x32x32xf32, #tpu.memory_space<vmem>>, vector<1x1x32x32xf32>
    %58 = vector.shape_cast %57 : vector<1x1x32x32xf32> to vector<32x32xf32>
    %cst_49 = arith.constant dense<0.000000e+00> : vector<64x32xf32>
    %59 = tpu.matmul %56, %58, %cst_49 {dimension_numbers = #tpu.dot_dimension_numbers<[1], [0], [0], [1], [0, 0, 1, 1], [], []>} : vector<64x32xf32>, vector<32x32xf32>, vector<64x32xf32> -> vector<64x32xf32>
    %60 = arith.addf %51, %59 : vector<64x32xf32>
    %c56_i32 = arith.constant 56 : i32
    %61 = tpu.dynamic_rotate %1 by %c56_i32 dim 0 : vector<64x32xf32>, i32 -> vector<64x32xf32>
    %c7 = arith.constant 7 : index
    %c0_50 = arith.constant 0 : index
    %c0_51 = arith.constant 0 : index
    %62 = vector.load %arg3[%c7, %c0_50, %c0_51] : memref<9x64x1xf32, #tpu.memory_space<vmem>>, vector<1x64x1xf32>
    %63 = vector.shape_cast %62 : vector<1x64x1xf32> to vector<64x1xf32>
    %64 = vector.broadcast %63 : vector<64x1xf32> to vector<64x32xf32>
    %65 = arith.mulf %61, %64 : vector<64x32xf32>
    %c0_52 = arith.constant 0 : index
    %c7_53 = arith.constant 7 : index
    %c0_54 = arith.constant 0 : index
    %c0_55 = arith.constant 0 : index
    %66 = vector.load %arg4[%c0_52, %c7_53, %c0_54, %c0_55] : memref<4x9x32x32xf32, #tpu.memory_space<vmem>>, vector<1x1x32x32xf32>
    %67 = vector.shape_cast %66 : vector<1x1x32x32xf32> to vector<32x32xf32>
    %cst_56 = arith.constant dense<0.000000e+00> : vector<64x32xf32>
    %68 = tpu.matmul %65, %67, %cst_56 {dimension_numbers = #tpu.dot_dimension_numbers<[1], [0], [0], [1], [0, 0, 1, 1], [], []>} : vector<64x32xf32>, vector<32x32xf32>, vector<64x32xf32> -> vector<64x32xf32>
    %69 = arith.addf %60, %68 : vector<64x32xf32>
    %c55_i32 = arith.constant 55 : i32
    %70 = tpu.dynamic_rotate %1 by %c55_i32 dim 0 : vector<64x32xf32>, i32 -> vector<64x32xf32>
    %c8 = arith.constant 8 : index
    %c0_57 = arith.constant 0 : index
    %c0_58 = arith.constant 0 : index
    %71 = vector.load %arg3[%c8, %c0_57, %c0_58] : memref<9x64x1xf32, #tpu.memory_space<vmem>>, vector<1x64x1xf32>
    %72 = vector.shape_cast %71 : vector<1x64x1xf32> to vector<64x1xf32>
    %73 = vector.broadcast %72 : vector<64x1xf32> to vector<64x32xf32>
    %74 = arith.mulf %70, %73 : vector<64x32xf32>
    %c0_59 = arith.constant 0 : index
    %c8_60 = arith.constant 8 : index
    %c0_61 = arith.constant 0 : index
    %c0_62 = arith.constant 0 : index
    %75 = vector.load %arg4[%c0_59, %c8_60, %c0_61, %c0_62] : memref<4x9x32x32xf32, #tpu.memory_space<vmem>>, vector<1x1x32x32xf32>
    %76 = vector.shape_cast %75 : vector<1x1x32x32xf32> to vector<32x32xf32>
    %cst_63 = arith.constant dense<0.000000e+00> : vector<64x32xf32>
    %77 = tpu.matmul %74, %76, %cst_63 {dimension_numbers = #tpu.dot_dimension_numbers<[1], [0], [0], [1], [0, 0, 1, 1], [], []>} : vector<64x32xf32>, vector<32x32xf32>, vector<64x32xf32> -> vector<64x32xf32>
    %78 = arith.addf %69, %77 : vector<64x32xf32>
    %c0_64 = arith.constant 0 : index
    %c0_65 = arith.constant 0 : index
    %c0_66 = arith.constant 0 : index
    %79 = vector.load %arg5[%c0_64, %c0_65, %c0_66] : memref<4x1x32xf32, #tpu.memory_space<vmem>>, vector<1x1x32xf32>
    %80 = vector.shape_cast %79 : vector<1x1x32xf32> to vector<1x32xf32>
    %81 = vector.broadcast %80 : vector<1x32xf32> to vector<64x32xf32>
    %82 = arith.mulf %78, %81 : vector<64x32xf32>
    %c0_67 = arith.constant 0 : index
    %c0_68 = arith.constant 0 : index
    %c0_69 = arith.constant 0 : index
    %83 = vector.load %arg6[%c0_67, %c0_68, %c0_69] : memref<4x1x32xf32, #tpu.memory_space<vmem>>, vector<1x1x32xf32>
    %84 = vector.shape_cast %83 : vector<1x1x32xf32> to vector<1x32xf32>
    %85 = vector.broadcast %84 : vector<1x32xf32> to vector<64x32xf32>
    %86 = arith.addf %82, %85 : vector<64x32xf32>
    %cst_70 = arith.constant 0.000000e+00 : f32
    %87 = vector.broadcast %cst_70 : f32 to vector<64x32xf32>
    %88 = arith.maximumf %86, %87 : vector<64x32xf32>
    %c0_71 = arith.constant 0 : index
    %c0_72 = arith.constant 0 : index
    %89 = vector.load %arg7[%c0_71, %c0_72] : memref<32x32xf32, #tpu.memory_space<vmem>>, vector<32x32xf32>
    %cst_73 = arith.constant dense<0.000000e+00> : vector<64x32xf32>
    %90 = tpu.matmul %88, %89, %cst_73 {dimension_numbers = #tpu.dot_dimension_numbers<[1], [0], [0], [1], [0, 0, 1, 1], [], []>} : vector<64x32xf32>, vector<32x32xf32>, vector<64x32xf32> -> vector<64x32xf32>
    %c0_74 = arith.constant 0 : index
    %c0_75 = arith.constant 0 : index
    %91 = vector.load %arg8[%c0_74, %c0_75] : memref<1x32xf32, #tpu.memory_space<vmem>>, vector<1x32xf32>
    %92 = vector.broadcast %91 : vector<1x32xf32> to vector<64x32xf32>
    %93 = arith.addf %90, %92 : vector<64x32xf32>
    %c0_76 = arith.constant 0 : index
    %c0_77 = arith.constant 0 : index
    %94 = vector.load %arg9[%c0_76, %c0_77] : memref<32x32xf32, #tpu.memory_space<vmem>>, vector<32x32xf32>
    %cst_78 = arith.constant dense<0.000000e+00> : vector<64x32xf32>
    %95 = tpu.matmul %88, %94, %cst_78 {dimension_numbers = #tpu.dot_dimension_numbers<[1], [0], [0], [1], [0, 0, 1, 1], [], []>} : vector<64x32xf32>, vector<32x32xf32>, vector<64x32xf32> -> vector<64x32xf32>
    %c0_79 = arith.constant 0 : index
    %c0_80 = arith.constant 0 : index
    %96 = vector.load %arg10[%c0_79, %c0_80] : memref<1x32xf32, #tpu.memory_space<vmem>>, vector<1x32xf32>
    %97 = vector.broadcast %96 : vector<1x32xf32> to vector<64x32xf32>
    %98 = arith.addf %95, %97 : vector<64x32xf32>
    %cst_81 = arith.constant dense<0.000000e+00> : vector<64x64xf32>
    %99 = tpu.matmul %93, %88, %cst_81 {dimension_numbers = #tpu.dot_dimension_numbers<[1], [1], [0], [0], [0, 0, 1, 0], [], []>} : vector<64x32xf32>, vector<64x32xf32>, vector<64x64xf32> -> vector<64x64xf32>
    %cst_82 = arith.constant dense<0xFF800000> : vector<64xf32>
    %100 = vector.multi_reduction <maximumf>, %99, %cst_82 [1] : vector<64x64xf32> to vector<64xf32>
    %101 = vector.shape_cast %100 : vector<64xf32> to vector<64x1xf32>
    %102 = vector.broadcast %101 : vector<64x1xf32> to vector<64x64xf32>
    %103 = arith.subf %99, %102 : vector<64x64xf32>
    %104 = math.exp %103 : vector<64x64xf32>
    %cst_83 = arith.constant dense<0.000000e+00> : vector<64xf32>
    %105 = vector.multi_reduction <add>, %104, %cst_83 [1] : vector<64x64xf32> to vector<64xf32>
    %106 = vector.shape_cast %105 : vector<64xf32> to vector<64x1xf32>
    %107 = tpu.reciprocal %106 {approx = true} : vector<64x1xf32> -> vector<64x1xf32>
    %108 = arith.mulf %106, %107 : vector<64x1xf32>
    %cst_84 = arith.constant 2.000000e+00 : f32
    %109 = vector.broadcast %cst_84 : f32 to vector<64x1xf32>
    %110 = arith.subf %109, %108 : vector<64x1xf32>
    %111 = arith.mulf %107, %110 : vector<64x1xf32>
    %112 = vector.broadcast %111 : vector<64x1xf32> to vector<64x64xf32>
    %113 = arith.mulf %104, %112 : vector<64x64xf32>
    %cst_85 = arith.constant dense<0.000000e+00> : vector<64x32xf32>
    %114 = tpu.matmul %113, %98, %cst_85 {dimension_numbers = #tpu.dot_dimension_numbers<[1], [0], [0], [1], [0, 0, 1, 1], [], []>} : vector<64x64xf32>, vector<64x32xf32>, vector<64x32xf32> -> vector<64x32xf32>
    %115 = vector.broadcast %2 : f32 to vector<64x32xf32>
    %116 = arith.mulf %115, %114 : vector<64x32xf32>
    %117 = arith.addf %116, %88 : vector<64x32xf32>
    %c9_i32_86 = arith.constant 9 : i32
    %118 = tpu.dynamic_rotate %117 by %c9_i32_86 dim 0 : vector<64x32xf32>, i32 -> vector<64x32xf32>
    %c0_87 = arith.constant 0 : index
    %c0_88 = arith.constant 0 : index
    %c0_89 = arith.constant 0 : index
    %119 = vector.load %arg3[%c0_87, %c0_88, %c0_89] : memref<9x64x1xf32, #tpu.memory_space<vmem>>, vector<1x64x1xf32>
    %120 = vector.shape_cast %119 : vector<1x64x1xf32> to vector<64x1xf32>
    %121 = vector.broadcast %120 : vector<64x1xf32> to vector<64x32xf32>
    %122 = arith.mulf %118, %121 : vector<64x32xf32>
    %c2_90 = arith.constant 2 : index
    %c0_91 = arith.constant 0 : index
    %c0_92 = arith.constant 0 : index
    %c0_93 = arith.constant 0 : index
    %123 = vector.load %arg4[%c2_90, %c0_91, %c0_92, %c0_93] : memref<4x9x32x32xf32, #tpu.memory_space<vmem>>, vector<1x1x32x32xf32>
    %124 = vector.shape_cast %123 : vector<1x1x32x32xf32> to vector<32x32xf32>
    %cst_94 = arith.constant dense<0.000000e+00> : vector<64x32xf32>
    %125 = tpu.matmul %122, %124, %cst_94 {dimension_numbers = #tpu.dot_dimension_numbers<[1], [0], [0], [1], [0, 0, 1, 1], [], []>} : vector<64x32xf32>, vector<32x32xf32>, vector<64x32xf32> -> vector<64x32xf32>
    %c8_i32_95 = arith.constant 8 : i32
    %126 = tpu.dynamic_rotate %117 by %c8_i32_95 dim 0 : vector<64x32xf32>, i32 -> vector<64x32xf32>
    %c1_96 = arith.constant 1 : index
    %c0_97 = arith.constant 0 : index
    %c0_98 = arith.constant 0 : index
    %127 = vector.load %arg3[%c1_96, %c0_97, %c0_98] : memref<9x64x1xf32, #tpu.memory_space<vmem>>, vector<1x64x1xf32>
    %128 = vector.shape_cast %127 : vector<1x64x1xf32> to vector<64x1xf32>
    %129 = vector.broadcast %128 : vector<64x1xf32> to vector<64x32xf32>
    %130 = arith.mulf %126, %129 : vector<64x32xf32>
    %c2_99 = arith.constant 2 : index
    %c1_100 = arith.constant 1 : index
    %c0_101 = arith.constant 0 : index
    %c0_102 = arith.constant 0 : index
    %131 = vector.load %arg4[%c2_99, %c1_100, %c0_101, %c0_102] : memref<4x9x32x32xf32, #tpu.memory_space<vmem>>, vector<1x1x32x32xf32>
    %132 = vector.shape_cast %131 : vector<1x1x32x32xf32> to vector<32x32xf32>
    %cst_103 = arith.constant dense<0.000000e+00> : vector<64x32xf32>
    %133 = tpu.matmul %130, %132, %cst_103 {dimension_numbers = #tpu.dot_dimension_numbers<[1], [0], [0], [1], [0, 0, 1, 1], [], []>} : vector<64x32xf32>, vector<32x32xf32>, vector<64x32xf32> -> vector<64x32xf32>
    %134 = arith.addf %125, %133 : vector<64x32xf32>
    %c7_i32_104 = arith.constant 7 : i32
    %135 = tpu.dynamic_rotate %117 by %c7_i32_104 dim 0 : vector<64x32xf32>, i32 -> vector<64x32xf32>
    %c2_105 = arith.constant 2 : index
    %c0_106 = arith.constant 0 : index
    %c0_107 = arith.constant 0 : index
    %136 = vector.load %arg3[%c2_105, %c0_106, %c0_107] : memref<9x64x1xf32, #tpu.memory_space<vmem>>, vector<1x64x1xf32>
    %137 = vector.shape_cast %136 : vector<1x64x1xf32> to vector<64x1xf32>
    %138 = vector.broadcast %137 : vector<64x1xf32> to vector<64x32xf32>
    %139 = arith.mulf %135, %138 : vector<64x32xf32>
    %c2_108 = arith.constant 2 : index
    %c2_109 = arith.constant 2 : index
    %c0_110 = arith.constant 0 : index
    %c0_111 = arith.constant 0 : index
    %140 = vector.load %arg4[%c2_108, %c2_109, %c0_110, %c0_111] : memref<4x9x32x32xf32, #tpu.memory_space<vmem>>, vector<1x1x32x32xf32>
    %141 = vector.shape_cast %140 : vector<1x1x32x32xf32> to vector<32x32xf32>
    %cst_112 = arith.constant dense<0.000000e+00> : vector<64x32xf32>
    %142 = tpu.matmul %139, %141, %cst_112 {dimension_numbers = #tpu.dot_dimension_numbers<[1], [0], [0], [1], [0, 0, 1, 1], [], []>} : vector<64x32xf32>, vector<32x32xf32>, vector<64x32xf32> -> vector<64x32xf32>
    %143 = arith.addf %134, %142 : vector<64x32xf32>
    %c1_i32_113 = arith.constant 1 : i32
    %144 = tpu.dynamic_rotate %117 by %c1_i32_113 dim 0 : vector<64x32xf32>, i32 -> vector<64x32xf32>
    %c3_114 = arith.constant 3 : index
    %c0_115 = arith.constant 0 : index
    %c0_116 = arith.constant 0 : index
    %145 = vector.load %arg3[%c3_114, %c0_115, %c0_116] : memref<9x64x1xf32, #tpu.memory_space<vmem>>, vector<1x64x1xf32>
    %146 = vector.shape_cast %145 : vector<1x64x1xf32> to vector<64x1xf32>
    %147 = vector.broadcast %146 : vector<64x1xf32> to vector<64x32xf32>
    %148 = arith.mulf %144, %147 : vector<64x32xf32>
    %c2_117 = arith.constant 2 : index
    %c3_118 = arith.constant 3 : index
    %c0_119 = arith.constant 0 : index
    %c0_120 = arith.constant 0 : index
    %149 = vector.load %arg4[%c2_117, %c3_118, %c0_119, %c0_120] : memref<4x9x32x32xf32, #tpu.memory_space<vmem>>, vector<1x1x32x32xf32>
    %150 = vector.shape_cast %149 : vector<1x1x32x32xf32> to vector<32x32xf32>
    %cst_121 = arith.constant dense<0.000000e+00> : vector<64x32xf32>
    %151 = tpu.matmul %148, %150, %cst_121 {dimension_numbers = #tpu.dot_dimension_numbers<[1], [0], [0], [1], [0, 0, 1, 1], [], []>} : vector<64x32xf32>, vector<32x32xf32>, vector<64x32xf32> -> vector<64x32xf32>
    %152 = arith.addf %143, %151 : vector<64x32xf32>
    %c2_122 = arith.constant 2 : index
    %c4_123 = arith.constant 4 : index
    %c0_124 = arith.constant 0 : index
    %c0_125 = arith.constant 0 : index
    %153 = vector.load %arg4[%c2_122, %c4_123, %c0_124, %c0_125] : memref<4x9x32x32xf32, #tpu.memory_space<vmem>>, vector<1x1x32x32xf32>
    %154 = vector.shape_cast %153 : vector<1x1x32x32xf32> to vector<32x32xf32>
    %cst_126 = arith.constant dense<0.000000e+00> : vector<64x32xf32>
    %155 = tpu.matmul %117, %154, %cst_126 {dimension_numbers = #tpu.dot_dimension_numbers<[1], [0], [0], [1], [0, 0, 1, 1], [], []>} : vector<64x32xf32>, vector<32x32xf32>, vector<64x32xf32> -> vector<64x32xf32>
    %156 = arith.addf %152, %155 : vector<64x32xf32>
    %c63_i32_127 = arith.constant 63 : i32
    %157 = tpu.dynamic_rotate %117 by %c63_i32_127 dim 0 : vector<64x32xf32>, i32 -> vector<64x32xf32>
    %c5_128 = arith.constant 5 : index
    %c0_129 = arith.constant 0 : index
    %c0_130 = arith.constant 0 : index
    %158 = vector.load %arg3[%c5_128, %c0_129, %c0_130] : memref<9x64x1xf32, #tpu.memory_space<vmem>>, vector<1x64x1xf32>
    %159 = vector.shape_cast %158 : vector<1x64x1xf32> to vector<64x1xf32>
    %160 = vector.broadcast %159 : vector<64x1xf32> to vector<64x32xf32>
    %161 = arith.mulf %157, %160 : vector<64x32xf32>
    %c2_131 = arith.constant 2 : index
    %c5_132 = arith.constant 5 : index
    %c0_133 = arith.constant 0 : index
    %c0_134 = arith.constant 0 : index
    %162 = vector.load %arg4[%c2_131, %c5_132, %c0_133, %c0_134] : memref<4x9x32x32xf32, #tpu.memory_space<vmem>>, vector<1x1x32x32xf32>
    %163 = vector.shape_cast %162 : vector<1x1x32x32xf32> to vector<32x32xf32>
    %cst_135 = arith.constant dense<0.000000e+00> : vector<64x32xf32>
    %164 = tpu.matmul %161, %163, %cst_135 {dimension_numbers = #tpu.dot_dimension_numbers<[1], [0], [0], [1], [0, 0, 1, 1], [], []>} : vector<64x32xf32>, vector<32x32xf32>, vector<64x32xf32> -> vector<64x32xf32>
    %165 = arith.addf %156, %164 : vector<64x32xf32>
    %c57_i32_136 = arith.constant 57 : i32
    %166 = tpu.dynamic_rotate %117 by %c57_i32_136 dim 0 : vector<64x32xf32>, i32 -> vector<64x32xf32>
    %c6_137 = arith.constant 6 : index
    %c0_138 = arith.constant 0 : index
    %c0_139 = arith.constant 0 : index
    %167 = vector.load %arg3[%c6_137, %c0_138, %c0_139] : memref<9x64x1xf32, #tpu.memory_space<vmem>>, vector<1x64x1xf32>
    %168 = vector.shape_cast %167 : vector<1x64x1xf32> to vector<64x1xf32>
    %169 = vector.broadcast %168 : vector<64x1xf32> to vector<64x32xf32>
    %170 = arith.mulf %166, %169 : vector<64x32xf32>
    %c2_140 = arith.constant 2 : index
    %c6_141 = arith.constant 6 : index
    %c0_142 = arith.constant 0 : index
    %c0_143 = arith.constant 0 : index
    %171 = vector.load %arg4[%c2_140, %c6_141, %c0_142, %c0_143] : memref<4x9x32x32xf32, #tpu.memory_space<vmem>>, vector<1x1x32x32xf32>
    %172 = vector.shape_cast %171 : vector<1x1x32x32xf32> to vector<32x32xf32>
    %cst_144 = arith.constant dense<0.000000e+00> : vector<64x32xf32>
    %173 = tpu.matmul %170, %172, %cst_144 {dimension_numbers = #tpu.dot_dimension_numbers<[1], [0], [0], [1], [0, 0, 1, 1], [], []>} : vector<64x32xf32>, vector<32x32xf32>, vector<64x32xf32> -> vector<64x32xf32>
    %174 = arith.addf %165, %173 : vector<64x32xf32>
    %c56_i32_145 = arith.constant 56 : i32
    %175 = tpu.dynamic_rotate %117 by %c56_i32_145 dim 0 : vector<64x32xf32>, i32 -> vector<64x32xf32>
    %c7_146 = arith.constant 7 : index
    %c0_147 = arith.constant 0 : index
    %c0_148 = arith.constant 0 : index
    %176 = vector.load %arg3[%c7_146, %c0_147, %c0_148] : memref<9x64x1xf32, #tpu.memory_space<vmem>>, vector<1x64x1xf32>
    %177 = vector.shape_cast %176 : vector<1x64x1xf32> to vector<64x1xf32>
    %178 = vector.broadcast %177 : vector<64x1xf32> to vector<64x32xf32>
    %179 = arith.mulf %175, %178 : vector<64x32xf32>
    %c2_149 = arith.constant 2 : index
    %c7_150 = arith.constant 7 : index
    %c0_151 = arith.constant 0 : index
    %c0_152 = arith.constant 0 : index
    %180 = vector.load %arg4[%c2_149, %c7_150, %c0_151, %c0_152] : memref<4x9x32x32xf32, #tpu.memory_space<vmem>>, vector<1x1x32x32xf32>
    %181 = vector.shape_cast %180 : vector<1x1x32x32xf32> to vector<32x32xf32>
    %cst_153 = arith.constant dense<0.000000e+00> : vector<64x32xf32>
    %182 = tpu.matmul %179, %181, %cst_153 {dimension_numbers = #tpu.dot_dimension_numbers<[1], [0], [0], [1], [0, 0, 1, 1], [], []>} : vector<64x32xf32>, vector<32x32xf32>, vector<64x32xf32> -> vector<64x32xf32>
    %183 = arith.addf %174, %182 : vector<64x32xf32>
    %c55_i32_154 = arith.constant 55 : i32
    %184 = tpu.dynamic_rotate %117 by %c55_i32_154 dim 0 : vector<64x32xf32>, i32 -> vector<64x32xf32>
    %c8_155 = arith.constant 8 : index
    %c0_156 = arith.constant 0 : index
    %c0_157 = arith.constant 0 : index
    %185 = vector.load %arg3[%c8_155, %c0_156, %c0_157] : memref<9x64x1xf32, #tpu.memory_space<vmem>>, vector<1x64x1xf32>
    %186 = vector.shape_cast %185 : vector<1x64x1xf32> to vector<64x1xf32>
    %187 = vector.broadcast %186 : vector<64x1xf32> to vector<64x32xf32>
    %188 = arith.mulf %184, %187 : vector<64x32xf32>
    %c2_158 = arith.constant 2 : index
    %c8_159 = arith.constant 8 : index
    %c0_160 = arith.constant 0 : index
    %c0_161 = arith.constant 0 : index
    %189 = vector.load %arg4[%c2_158, %c8_159, %c0_160, %c0_161] : memref<4x9x32x32xf32, #tpu.memory_space<vmem>>, vector<1x1x32x32xf32>
    %190 = vector.shape_cast %189 : vector<1x1x32x32xf32> to vector<32x32xf32>
    %cst_162 = arith.constant dense<0.000000e+00> : vector<64x32xf32>
    %191 = tpu.matmul %188, %190, %cst_162 {dimension_numbers = #tpu.dot_dimension_numbers<[1], [0], [0], [1], [0, 0, 1, 1], [], []>} : vector<64x32xf32>, vector<32x32xf32>, vector<64x32xf32> -> vector<64x32xf32>
    %192 = arith.addf %183, %191 : vector<64x32xf32>
    %c2_163 = arith.constant 2 : index
    %c0_164 = arith.constant 0 : index
    %c0_165 = arith.constant 0 : index
    %193 = vector.load %arg5[%c2_163, %c0_164, %c0_165] : memref<4x1x32xf32, #tpu.memory_space<vmem>>, vector<1x1x32xf32>
    %194 = vector.shape_cast %193 : vector<1x1x32xf32> to vector<1x32xf32>
    %195 = vector.broadcast %194 : vector<1x32xf32> to vector<64x32xf32>
    %196 = arith.mulf %192, %195 : vector<64x32xf32>
    %c2_166 = arith.constant 2 : index
    %c0_167 = arith.constant 0 : index
    %c0_168 = arith.constant 0 : index
    %197 = vector.load %arg6[%c2_166, %c0_167, %c0_168] : memref<4x1x32xf32, #tpu.memory_space<vmem>>, vector<1x1x32xf32>
    %198 = vector.shape_cast %197 : vector<1x1x32xf32> to vector<1x32xf32>
    %199 = vector.broadcast %198 : vector<1x32xf32> to vector<64x32xf32>
    %200 = arith.addf %196, %199 : vector<64x32xf32>
    %cst_169 = arith.constant 0.000000e+00 : f32
    %201 = vector.broadcast %cst_169 : f32 to vector<64x32xf32>
    %202 = arith.maximumf %200, %201 : vector<64x32xf32>
    %c9_i32_170 = arith.constant 9 : i32
    %203 = tpu.dynamic_rotate %1 by %c9_i32_170 dim 0 : vector<64x32xf32>, i32 -> vector<64x32xf32>
    %c0_171 = arith.constant 0 : index
    %c0_172 = arith.constant 0 : index
    %c0_173 = arith.constant 0 : index
    %204 = vector.load %arg3[%c0_171, %c0_172, %c0_173] : memref<9x64x1xf32, #tpu.memory_space<vmem>>, vector<1x64x1xf32>
    %205 = vector.shape_cast %204 : vector<1x64x1xf32> to vector<64x1xf32>
    %206 = vector.broadcast %205 : vector<64x1xf32> to vector<64x32xf32>
    %207 = arith.mulf %203, %206 : vector<64x32xf32>
    %c1_174 = arith.constant 1 : index
    %c0_175 = arith.constant 0 : index
    %c0_176 = arith.constant 0 : index
    %c0_177 = arith.constant 0 : index
    %208 = vector.load %arg4[%c1_174, %c0_175, %c0_176, %c0_177] : memref<4x9x32x32xf32, #tpu.memory_space<vmem>>, vector<1x1x32x32xf32>
    %209 = vector.shape_cast %208 : vector<1x1x32x32xf32> to vector<32x32xf32>
    %cst_178 = arith.constant dense<0.000000e+00> : vector<64x32xf32>
    %210 = tpu.matmul %207, %209, %cst_178 {dimension_numbers = #tpu.dot_dimension_numbers<[1], [0], [0], [1], [0, 0, 1, 1], [], []>} : vector<64x32xf32>, vector<32x32xf32>, vector<64x32xf32> -> vector<64x32xf32>
    %c8_i32_179 = arith.constant 8 : i32
    %211 = tpu.dynamic_rotate %1 by %c8_i32_179 dim 0 : vector<64x32xf32>, i32 -> vector<64x32xf32>
    %c1_180 = arith.constant 1 : index
    %c0_181 = arith.constant 0 : index
    %c0_182 = arith.constant 0 : index
    %212 = vector.load %arg3[%c1_180, %c0_181, %c0_182] : memref<9x64x1xf32, #tpu.memory_space<vmem>>, vector<1x64x1xf32>
    %213 = vector.shape_cast %212 : vector<1x64x1xf32> to vector<64x1xf32>
    %214 = vector.broadcast %213 : vector<64x1xf32> to vector<64x32xf32>
    %215 = arith.mulf %211, %214 : vector<64x32xf32>
    %c1_183 = arith.constant 1 : index
    %c1_184 = arith.constant 1 : index
    %c0_185 = arith.constant 0 : index
    %c0_186 = arith.constant 0 : index
    %216 = vector.load %arg4[%c1_183, %c1_184, %c0_185, %c0_186] : memref<4x9x32x32xf32, #tpu.memory_space<vmem>>, vector<1x1x32x32xf32>
    %217 = vector.shape_cast %216 : vector<1x1x32x32xf32> to vector<32x32xf32>
    %cst_187 = arith.constant dense<0.000000e+00> : vector<64x32xf32>
    %218 = tpu.matmul %215, %217, %cst_187 {dimension_numbers = #tpu.dot_dimension_numbers<[1], [0], [0], [1], [0, 0, 1, 1], [], []>} : vector<64x32xf32>, vector<32x32xf32>, vector<64x32xf32> -> vector<64x32xf32>
    %219 = arith.addf %210, %218 : vector<64x32xf32>
    %c7_i32_188 = arith.constant 7 : i32
    %220 = tpu.dynamic_rotate %1 by %c7_i32_188 dim 0 : vector<64x32xf32>, i32 -> vector<64x32xf32>
    %c2_189 = arith.constant 2 : index
    %c0_190 = arith.constant 0 : index
    %c0_191 = arith.constant 0 : index
    %221 = vector.load %arg3[%c2_189, %c0_190, %c0_191] : memref<9x64x1xf32, #tpu.memory_space<vmem>>, vector<1x64x1xf32>
    %222 = vector.shape_cast %221 : vector<1x64x1xf32> to vector<64x1xf32>
    %223 = vector.broadcast %222 : vector<64x1xf32> to vector<64x32xf32>
    %224 = arith.mulf %220, %223 : vector<64x32xf32>
    %c1_192 = arith.constant 1 : index
    %c2_193 = arith.constant 2 : index
    %c0_194 = arith.constant 0 : index
    %c0_195 = arith.constant 0 : index
    %225 = vector.load %arg4[%c1_192, %c2_193, %c0_194, %c0_195] : memref<4x9x32x32xf32, #tpu.memory_space<vmem>>, vector<1x1x32x32xf32>
    %226 = vector.shape_cast %225 : vector<1x1x32x32xf32> to vector<32x32xf32>
    %cst_196 = arith.constant dense<0.000000e+00> : vector<64x32xf32>
    %227 = tpu.matmul %224, %226, %cst_196 {dimension_numbers = #tpu.dot_dimension_numbers<[1], [0], [0], [1], [0, 0, 1, 1], [], []>} : vector<64x32xf32>, vector<32x32xf32>, vector<64x32xf32> -> vector<64x32xf32>
    %228 = arith.addf %219, %227 : vector<64x32xf32>
    %c1_i32_197 = arith.constant 1 : i32
    %229 = tpu.dynamic_rotate %1 by %c1_i32_197 dim 0 : vector<64x32xf32>, i32 -> vector<64x32xf32>
    %c3_198 = arith.constant 3 : index
    %c0_199 = arith.constant 0 : index
    %c0_200 = arith.constant 0 : index
    %230 = vector.load %arg3[%c3_198, %c0_199, %c0_200] : memref<9x64x1xf32, #tpu.memory_space<vmem>>, vector<1x64x1xf32>
    %231 = vector.shape_cast %230 : vector<1x64x1xf32> to vector<64x1xf32>
    %232 = vector.broadcast %231 : vector<64x1xf32> to vector<64x32xf32>
    %233 = arith.mulf %229, %232 : vector<64x32xf32>
    %c1_201 = arith.constant 1 : index
    %c3_202 = arith.constant 3 : index
    %c0_203 = arith.constant 0 : index
    %c0_204 = arith.constant 0 : index
    %234 = vector.load %arg4[%c1_201, %c3_202, %c0_203, %c0_204] : memref<4x9x32x32xf32, #tpu.memory_space<vmem>>, vector<1x1x32x32xf32>
    %235 = vector.shape_cast %234 : vector<1x1x32x32xf32> to vector<32x32xf32>
    %cst_205 = arith.constant dense<0.000000e+00> : vector<64x32xf32>
    %236 = tpu.matmul %233, %235, %cst_205 {dimension_numbers = #tpu.dot_dimension_numbers<[1], [0], [0], [1], [0, 0, 1, 1], [], []>} : vector<64x32xf32>, vector<32x32xf32>, vector<64x32xf32> -> vector<64x32xf32>
    %237 = arith.addf %228, %236 : vector<64x32xf32>
    %c1_206 = arith.constant 1 : index
    %c4_207 = arith.constant 4 : index
    %c0_208 = arith.constant 0 : index
    %c0_209 = arith.constant 0 : index
    %238 = vector.load %arg4[%c1_206, %c4_207, %c0_208, %c0_209] : memref<4x9x32x32xf32, #tpu.memory_space<vmem>>, vector<1x1x32x32xf32>
    %239 = vector.shape_cast %238 : vector<1x1x32x32xf32> to vector<32x32xf32>
    %cst_210 = arith.constant dense<0.000000e+00> : vector<64x32xf32>
    %240 = tpu.matmul %1, %239, %cst_210 {dimension_numbers = #tpu.dot_dimension_numbers<[1], [0], [0], [1], [0, 0, 1, 1], [], []>} : vector<64x32xf32>, vector<32x32xf32>, vector<64x32xf32> -> vector<64x32xf32>
    %241 = arith.addf %237, %240 : vector<64x32xf32>
    %c63_i32_211 = arith.constant 63 : i32
    %242 = tpu.dynamic_rotate %1 by %c63_i32_211 dim 0 : vector<64x32xf32>, i32 -> vector<64x32xf32>
    %c5_212 = arith.constant 5 : index
    %c0_213 = arith.constant 0 : index
    %c0_214 = arith.constant 0 : index
    %243 = vector.load %arg3[%c5_212, %c0_213, %c0_214] : memref<9x64x1xf32, #tpu.memory_space<vmem>>, vector<1x64x1xf32>
    %244 = vector.shape_cast %243 : vector<1x64x1xf32> to vector<64x1xf32>
    %245 = vector.broadcast %244 : vector<64x1xf32> to vector<64x32xf32>
    %246 = arith.mulf %242, %245 : vector<64x32xf32>
    %c1_215 = arith.constant 1 : index
    %c5_216 = arith.constant 5 : index
    %c0_217 = arith.constant 0 : index
    %c0_218 = arith.constant 0 : index
    %247 = vector.load %arg4[%c1_215, %c5_216, %c0_217, %c0_218] : memref<4x9x32x32xf32, #tpu.memory_space<vmem>>, vector<1x1x32x32xf32>
    %248 = vector.shape_cast %247 : vector<1x1x32x32xf32> to vector<32x32xf32>
    %cst_219 = arith.constant dense<0.000000e+00> : vector<64x32xf32>
    %249 = tpu.matmul %246, %248, %cst_219 {dimension_numbers = #tpu.dot_dimension_numbers<[1], [0], [0], [1], [0, 0, 1, 1], [], []>} : vector<64x32xf32>, vector<32x32xf32>, vector<64x32xf32> -> vector<64x32xf32>
    %250 = arith.addf %241, %249 : vector<64x32xf32>
    %c57_i32_220 = arith.constant 57 : i32
    %251 = tpu.dynamic_rotate %1 by %c57_i32_220 dim 0 : vector<64x32xf32>, i32 -> vector<64x32xf32>
    %c6_221 = arith.constant 6 : index
    %c0_222 = arith.constant 0 : index
    %c0_223 = arith.constant 0 : index
    %252 = vector.load %arg3[%c6_221, %c0_222, %c0_223] : memref<9x64x1xf32, #tpu.memory_space<vmem>>, vector<1x64x1xf32>
    %253 = vector.shape_cast %252 : vector<1x64x1xf32> to vector<64x1xf32>
    %254 = vector.broadcast %253 : vector<64x1xf32> to vector<64x32xf32>
    %255 = arith.mulf %251, %254 : vector<64x32xf32>
    %c1_224 = arith.constant 1 : index
    %c6_225 = arith.constant 6 : index
    %c0_226 = arith.constant 0 : index
    %c0_227 = arith.constant 0 : index
    %256 = vector.load %arg4[%c1_224, %c6_225, %c0_226, %c0_227] : memref<4x9x32x32xf32, #tpu.memory_space<vmem>>, vector<1x1x32x32xf32>
    %257 = vector.shape_cast %256 : vector<1x1x32x32xf32> to vector<32x32xf32>
    %cst_228 = arith.constant dense<0.000000e+00> : vector<64x32xf32>
    %258 = tpu.matmul %255, %257, %cst_228 {dimension_numbers = #tpu.dot_dimension_numbers<[1], [0], [0], [1], [0, 0, 1, 1], [], []>} : vector<64x32xf32>, vector<32x32xf32>, vector<64x32xf32> -> vector<64x32xf32>
    %259 = arith.addf %250, %258 : vector<64x32xf32>
    %c56_i32_229 = arith.constant 56 : i32
    %260 = tpu.dynamic_rotate %1 by %c56_i32_229 dim 0 : vector<64x32xf32>, i32 -> vector<64x32xf32>
    %c7_230 = arith.constant 7 : index
    %c0_231 = arith.constant 0 : index
    %c0_232 = arith.constant 0 : index
    %261 = vector.load %arg3[%c7_230, %c0_231, %c0_232] : memref<9x64x1xf32, #tpu.memory_space<vmem>>, vector<1x64x1xf32>
    %262 = vector.shape_cast %261 : vector<1x64x1xf32> to vector<64x1xf32>
    %263 = vector.broadcast %262 : vector<64x1xf32> to vector<64x32xf32>
    %264 = arith.mulf %260, %263 : vector<64x32xf32>
    %c1_233 = arith.constant 1 : index
    %c7_234 = arith.constant 7 : index
    %c0_235 = arith.constant 0 : index
    %c0_236 = arith.constant 0 : index
    %265 = vector.load %arg4[%c1_233, %c7_234, %c0_235, %c0_236] : memref<4x9x32x32xf32, #tpu.memory_space<vmem>>, vector<1x1x32x32xf32>
    %266 = vector.shape_cast %265 : vector<1x1x32x32xf32> to vector<32x32xf32>
    %cst_237 = arith.constant dense<0.000000e+00> : vector<64x32xf32>
    %267 = tpu.matmul %264, %266, %cst_237 {dimension_numbers = #tpu.dot_dimension_numbers<[1], [0], [0], [1], [0, 0, 1, 1], [], []>} : vector<64x32xf32>, vector<32x32xf32>, vector<64x32xf32> -> vector<64x32xf32>
    %268 = arith.addf %259, %267 : vector<64x32xf32>
    %c55_i32_238 = arith.constant 55 : i32
    %269 = tpu.dynamic_rotate %1 by %c55_i32_238 dim 0 : vector<64x32xf32>, i32 -> vector<64x32xf32>
    %c8_239 = arith.constant 8 : index
    %c0_240 = arith.constant 0 : index
    %c0_241 = arith.constant 0 : index
    %270 = vector.load %arg3[%c8_239, %c0_240, %c0_241] : memref<9x64x1xf32, #tpu.memory_space<vmem>>, vector<1x64x1xf32>
    %271 = vector.shape_cast %270 : vector<1x64x1xf32> to vector<64x1xf32>
    %272 = vector.broadcast %271 : vector<64x1xf32> to vector<64x32xf32>
    %273 = arith.mulf %269, %272 : vector<64x32xf32>
    %c1_242 = arith.constant 1 : index
    %c8_243 = arith.constant 8 : index
    %c0_244 = arith.constant 0 : index
    %c0_245 = arith.constant 0 : index
    %274 = vector.load %arg4[%c1_242, %c8_243, %c0_244, %c0_245] : memref<4x9x32x32xf32, #tpu.memory_space<vmem>>, vector<1x1x32x32xf32>
    %275 = vector.shape_cast %274 : vector<1x1x32x32xf32> to vector<32x32xf32>
    %cst_246 = arith.constant dense<0.000000e+00> : vector<64x32xf32>
    %276 = tpu.matmul %273, %275, %cst_246 {dimension_numbers = #tpu.dot_dimension_numbers<[1], [0], [0], [1], [0, 0, 1, 1], [], []>} : vector<64x32xf32>, vector<32x32xf32>, vector<64x32xf32> -> vector<64x32xf32>
    %277 = arith.addf %268, %276 : vector<64x32xf32>
    %c1_247 = arith.constant 1 : index
    %c0_248 = arith.constant 0 : index
    %c0_249 = arith.constant 0 : index
    %278 = vector.load %arg5[%c1_247, %c0_248, %c0_249] : memref<4x1x32xf32, #tpu.memory_space<vmem>>, vector<1x1x32xf32>
    %279 = vector.shape_cast %278 : vector<1x1x32xf32> to vector<1x32xf32>
    %280 = vector.broadcast %279 : vector<1x32xf32> to vector<64x32xf32>
    %281 = arith.mulf %277, %280 : vector<64x32xf32>
    %c1_250 = arith.constant 1 : index
    %c0_251 = arith.constant 0 : index
    %c0_252 = arith.constant 0 : index
    %282 = vector.load %arg6[%c1_250, %c0_251, %c0_252] : memref<4x1x32xf32, #tpu.memory_space<vmem>>, vector<1x1x32xf32>
    %283 = vector.shape_cast %282 : vector<1x1x32xf32> to vector<1x32xf32>
    %284 = vector.broadcast %283 : vector<1x32xf32> to vector<64x32xf32>
    %285 = arith.addf %281, %284 : vector<64x32xf32>
    %cst_253 = arith.constant 0.000000e+00 : f32
    %286 = vector.broadcast %cst_253 : f32 to vector<64x32xf32>
    %287 = arith.maximumf %285, %286 : vector<64x32xf32>
    %cst_254 = arith.constant dense<0.000000e+00> : vector<32x32xf32>
    %288 = tpu.matmul %287, %287, %cst_254 {dimension_numbers = #tpu.dot_dimension_numbers<[0], [0], [1], [1], [0, 1, 1, 1], [], []>} : vector<64x32xf32>, vector<64x32xf32>, vector<32x32xf32> -> vector<32x32xf32>
    %cst_255 = arith.constant dense<0xFF800000> : vector<32xf32>
    %289 = vector.multi_reduction <maximumf>, %288, %cst_255 [1] : vector<32x32xf32> to vector<32xf32>
    %290 = vector.shape_cast %289 : vector<32xf32> to vector<32x1xf32>
    %291 = vector.broadcast %290 : vector<32x1xf32> to vector<32x32xf32>
    %292 = arith.subf %291, %288 : vector<32x32xf32>
    %cst_256 = arith.constant dense<0xFF800000> : vector<32xf32>
    %293 = vector.multi_reduction <maximumf>, %292, %cst_256 [1] : vector<32x32xf32> to vector<32xf32>
    %294 = vector.shape_cast %293 : vector<32xf32> to vector<32x1xf32>
    %295 = vector.broadcast %294 : vector<32x1xf32> to vector<32x32xf32>
    %296 = arith.subf %292, %295 : vector<32x32xf32>
    %297 = math.exp %296 : vector<32x32xf32>
    %cst_257 = arith.constant dense<0.000000e+00> : vector<32xf32>
    %298 = vector.multi_reduction <add>, %297, %cst_257 [1] : vector<32x32xf32> to vector<32xf32>
    %299 = vector.shape_cast %298 : vector<32xf32> to vector<32x1xf32>
    %300 = tpu.reciprocal %299 {approx = true} : vector<32x1xf32> -> vector<32x1xf32>
    %301 = arith.mulf %299, %300 : vector<32x1xf32>
    %cst_258 = arith.constant 2.000000e+00 : f32
    %302 = vector.broadcast %cst_258 : f32 to vector<32x1xf32>
    %303 = arith.subf %302, %301 : vector<32x1xf32>
    %304 = arith.mulf %300, %303 : vector<32x1xf32>
    %305 = vector.broadcast %304 : vector<32x1xf32> to vector<32x32xf32>
    %306 = arith.mulf %297, %305 : vector<32x32xf32>
    %cst_259 = arith.constant dense<0.000000e+00> : vector<64x32xf32>
    %307 = tpu.matmul %287, %306, %cst_259 {dimension_numbers = #tpu.dot_dimension_numbers<[1], [1], [0], [0], [0, 0, 1, 0], [], []>} : vector<64x32xf32>, vector<32x32xf32>, vector<64x32xf32> -> vector<64x32xf32>
    %308 = vector.broadcast %3 : f32 to vector<64x32xf32>
    %309 = arith.mulf %308, %307 : vector<64x32xf32>
    %310 = arith.addf %309, %287 : vector<64x32xf32>
    %c9_i32_260 = arith.constant 9 : i32
    %311 = tpu.dynamic_rotate %310 by %c9_i32_260 dim 0 : vector<64x32xf32>, i32 -> vector<64x32xf32>
    %c0_261 = arith.constant 0 : index
    %c0_262 = arith.constant 0 : index
    %c0_263 = arith.constant 0 : index
    %312 = vector.load %arg3[%c0_261, %c0_262, %c0_263] : memref<9x64x1xf32, #tpu.memory_space<vmem>>, vector<1x64x1xf32>
    %313 = vector.shape_cast %312 : vector<1x64x1xf32> to vector<64x1xf32>
    %314 = vector.broadcast %313 : vector<64x1xf32> to vector<64x32xf32>
    %315 = arith.mulf %311, %314 : vector<64x32xf32>
    %c3_264 = arith.constant 3 : index
    %c0_265 = arith.constant 0 : index
    %c0_266 = arith.constant 0 : index
    %c0_267 = arith.constant 0 : index
    %316 = vector.load %arg4[%c3_264, %c0_265, %c0_266, %c0_267] : memref<4x9x32x32xf32, #tpu.memory_space<vmem>>, vector<1x1x32x32xf32>
    %317 = vector.shape_cast %316 : vector<1x1x32x32xf32> to vector<32x32xf32>
    %cst_268 = arith.constant dense<0.000000e+00> : vector<64x32xf32>
    %318 = tpu.matmul %315, %317, %cst_268 {dimension_numbers = #tpu.dot_dimension_numbers<[1], [0], [0], [1], [0, 0, 1, 1], [], []>} : vector<64x32xf32>, vector<32x32xf32>, vector<64x32xf32> -> vector<64x32xf32>
    %c8_i32_269 = arith.constant 8 : i32
    %319 = tpu.dynamic_rotate %310 by %c8_i32_269 dim 0 : vector<64x32xf32>, i32 -> vector<64x32xf32>
    %c1_270 = arith.constant 1 : index
    %c0_271 = arith.constant 0 : index
    %c0_272 = arith.constant 0 : index
    %320 = vector.load %arg3[%c1_270, %c0_271, %c0_272] : memref<9x64x1xf32, #tpu.memory_space<vmem>>, vector<1x64x1xf32>
    %321 = vector.shape_cast %320 : vector<1x64x1xf32> to vector<64x1xf32>
    %322 = vector.broadcast %321 : vector<64x1xf32> to vector<64x32xf32>
    %323 = arith.mulf %319, %322 : vector<64x32xf32>
    %c3_273 = arith.constant 3 : index
    %c1_274 = arith.constant 1 : index
    %c0_275 = arith.constant 0 : index
    %c0_276 = arith.constant 0 : index
    %324 = vector.load %arg4[%c3_273, %c1_274, %c0_275, %c0_276] : memref<4x9x32x32xf32, #tpu.memory_space<vmem>>, vector<1x1x32x32xf32>
    %325 = vector.shape_cast %324 : vector<1x1x32x32xf32> to vector<32x32xf32>
    %cst_277 = arith.constant dense<0.000000e+00> : vector<64x32xf32>
    %326 = tpu.matmul %323, %325, %cst_277 {dimension_numbers = #tpu.dot_dimension_numbers<[1], [0], [0], [1], [0, 0, 1, 1], [], []>} : vector<64x32xf32>, vector<32x32xf32>, vector<64x32xf32> -> vector<64x32xf32>
    %327 = arith.addf %318, %326 : vector<64x32xf32>
    %c7_i32_278 = arith.constant 7 : i32
    %328 = tpu.dynamic_rotate %310 by %c7_i32_278 dim 0 : vector<64x32xf32>, i32 -> vector<64x32xf32>
    %c2_279 = arith.constant 2 : index
    %c0_280 = arith.constant 0 : index
    %c0_281 = arith.constant 0 : index
    %329 = vector.load %arg3[%c2_279, %c0_280, %c0_281] : memref<9x64x1xf32, #tpu.memory_space<vmem>>, vector<1x64x1xf32>
    %330 = vector.shape_cast %329 : vector<1x64x1xf32> to vector<64x1xf32>
    %331 = vector.broadcast %330 : vector<64x1xf32> to vector<64x32xf32>
    %332 = arith.mulf %328, %331 : vector<64x32xf32>
    %c3_282 = arith.constant 3 : index
    %c2_283 = arith.constant 2 : index
    %c0_284 = arith.constant 0 : index
    %c0_285 = arith.constant 0 : index
    %333 = vector.load %arg4[%c3_282, %c2_283, %c0_284, %c0_285] : memref<4x9x32x32xf32, #tpu.memory_space<vmem>>, vector<1x1x32x32xf32>
    %334 = vector.shape_cast %333 : vector<1x1x32x32xf32> to vector<32x32xf32>
    %cst_286 = arith.constant dense<0.000000e+00> : vector<64x32xf32>
    %335 = tpu.matmul %332, %334, %cst_286 {dimension_numbers = #tpu.dot_dimension_numbers<[1], [0], [0], [1], [0, 0, 1, 1], [], []>} : vector<64x32xf32>, vector<32x32xf32>, vector<64x32xf32> -> vector<64x32xf32>
    %336 = arith.addf %327, %335 : vector<64x32xf32>
    %c1_i32_287 = arith.constant 1 : i32
    %337 = tpu.dynamic_rotate %310 by %c1_i32_287 dim 0 : vector<64x32xf32>, i32 -> vector<64x32xf32>
    %c3_288 = arith.constant 3 : index
    %c0_289 = arith.constant 0 : index
    %c0_290 = arith.constant 0 : index
    %338 = vector.load %arg3[%c3_288, %c0_289, %c0_290] : memref<9x64x1xf32, #tpu.memory_space<vmem>>, vector<1x64x1xf32>
    %339 = vector.shape_cast %338 : vector<1x64x1xf32> to vector<64x1xf32>
    %340 = vector.broadcast %339 : vector<64x1xf32> to vector<64x32xf32>
    %341 = arith.mulf %337, %340 : vector<64x32xf32>
    %c3_291 = arith.constant 3 : index
    %c3_292 = arith.constant 3 : index
    %c0_293 = arith.constant 0 : index
    %c0_294 = arith.constant 0 : index
    %342 = vector.load %arg4[%c3_291, %c3_292, %c0_293, %c0_294] : memref<4x9x32x32xf32, #tpu.memory_space<vmem>>, vector<1x1x32x32xf32>
    %343 = vector.shape_cast %342 : vector<1x1x32x32xf32> to vector<32x32xf32>
    %cst_295 = arith.constant dense<0.000000e+00> : vector<64x32xf32>
    %344 = tpu.matmul %341, %343, %cst_295 {dimension_numbers = #tpu.dot_dimension_numbers<[1], [0], [0], [1], [0, 0, 1, 1], [], []>} : vector<64x32xf32>, vector<32x32xf32>, vector<64x32xf32> -> vector<64x32xf32>
    %345 = arith.addf %336, %344 : vector<64x32xf32>
    %c3_296 = arith.constant 3 : index
    %c4_297 = arith.constant 4 : index
    %c0_298 = arith.constant 0 : index
    %c0_299 = arith.constant 0 : index
    %346 = vector.load %arg4[%c3_296, %c4_297, %c0_298, %c0_299] : memref<4x9x32x32xf32, #tpu.memory_space<vmem>>, vector<1x1x32x32xf32>
    %347 = vector.shape_cast %346 : vector<1x1x32x32xf32> to vector<32x32xf32>
    %cst_300 = arith.constant dense<0.000000e+00> : vector<64x32xf32>
    %348 = tpu.matmul %310, %347, %cst_300 {dimension_numbers = #tpu.dot_dimension_numbers<[1], [0], [0], [1], [0, 0, 1, 1], [], []>} : vector<64x32xf32>, vector<32x32xf32>, vector<64x32xf32> -> vector<64x32xf32>
    %349 = arith.addf %345, %348 : vector<64x32xf32>
    %c63_i32_301 = arith.constant 63 : i32
    %350 = tpu.dynamic_rotate %310 by %c63_i32_301 dim 0 : vector<64x32xf32>, i32 -> vector<64x32xf32>
    %c5_302 = arith.constant 5 : index
    %c0_303 = arith.constant 0 : index
    %c0_304 = arith.constant 0 : index
    %351 = vector.load %arg3[%c5_302, %c0_303, %c0_304] : memref<9x64x1xf32, #tpu.memory_space<vmem>>, vector<1x64x1xf32>
    %352 = vector.shape_cast %351 : vector<1x64x1xf32> to vector<64x1xf32>
    %353 = vector.broadcast %352 : vector<64x1xf32> to vector<64x32xf32>
    %354 = arith.mulf %350, %353 : vector<64x32xf32>
    %c3_305 = arith.constant 3 : index
    %c5_306 = arith.constant 5 : index
    %c0_307 = arith.constant 0 : index
    %c0_308 = arith.constant 0 : index
    %355 = vector.load %arg4[%c3_305, %c5_306, %c0_307, %c0_308] : memref<4x9x32x32xf32, #tpu.memory_space<vmem>>, vector<1x1x32x32xf32>
    %356 = vector.shape_cast %355 : vector<1x1x32x32xf32> to vector<32x32xf32>
    %cst_309 = arith.constant dense<0.000000e+00> : vector<64x32xf32>
    %357 = tpu.matmul %354, %356, %cst_309 {dimension_numbers = #tpu.dot_dimension_numbers<[1], [0], [0], [1], [0, 0, 1, 1], [], []>} : vector<64x32xf32>, vector<32x32xf32>, vector<64x32xf32> -> vector<64x32xf32>
    %358 = arith.addf %349, %357 : vector<64x32xf32>
    %c57_i32_310 = arith.constant 57 : i32
    %359 = tpu.dynamic_rotate %310 by %c57_i32_310 dim 0 : vector<64x32xf32>, i32 -> vector<64x32xf32>
    %c6_311 = arith.constant 6 : index
    %c0_312 = arith.constant 0 : index
    %c0_313 = arith.constant 0 : index
    %360 = vector.load %arg3[%c6_311, %c0_312, %c0_313] : memref<9x64x1xf32, #tpu.memory_space<vmem>>, vector<1x64x1xf32>
    %361 = vector.shape_cast %360 : vector<1x64x1xf32> to vector<64x1xf32>
    %362 = vector.broadcast %361 : vector<64x1xf32> to vector<64x32xf32>
    %363 = arith.mulf %359, %362 : vector<64x32xf32>
    %c3_314 = arith.constant 3 : index
    %c6_315 = arith.constant 6 : index
    %c0_316 = arith.constant 0 : index
    %c0_317 = arith.constant 0 : index
    %364 = vector.load %arg4[%c3_314, %c6_315, %c0_316, %c0_317] : memref<4x9x32x32xf32, #tpu.memory_space<vmem>>, vector<1x1x32x32xf32>
    %365 = vector.shape_cast %364 : vector<1x1x32x32xf32> to vector<32x32xf32>
    %cst_318 = arith.constant dense<0.000000e+00> : vector<64x32xf32>
    %366 = tpu.matmul %363, %365, %cst_318 {dimension_numbers = #tpu.dot_dimension_numbers<[1], [0], [0], [1], [0, 0, 1, 1], [], []>} : vector<64x32xf32>, vector<32x32xf32>, vector<64x32xf32> -> vector<64x32xf32>
    %367 = arith.addf %358, %366 : vector<64x32xf32>
    %c56_i32_319 = arith.constant 56 : i32
    %368 = tpu.dynamic_rotate %310 by %c56_i32_319 dim 0 : vector<64x32xf32>, i32 -> vector<64x32xf32>
    %c7_320 = arith.constant 7 : index
    %c0_321 = arith.constant 0 : index
    %c0_322 = arith.constant 0 : index
    %369 = vector.load %arg3[%c7_320, %c0_321, %c0_322] : memref<9x64x1xf32, #tpu.memory_space<vmem>>, vector<1x64x1xf32>
    %370 = vector.shape_cast %369 : vector<1x64x1xf32> to vector<64x1xf32>
    %371 = vector.broadcast %370 : vector<64x1xf32> to vector<64x32xf32>
    %372 = arith.mulf %368, %371 : vector<64x32xf32>
    %c3_323 = arith.constant 3 : index
    %c7_324 = arith.constant 7 : index
    %c0_325 = arith.constant 0 : index
    %c0_326 = arith.constant 0 : index
    %373 = vector.load %arg4[%c3_323, %c7_324, %c0_325, %c0_326] : memref<4x9x32x32xf32, #tpu.memory_space<vmem>>, vector<1x1x32x32xf32>
    %374 = vector.shape_cast %373 : vector<1x1x32x32xf32> to vector<32x32xf32>
    %cst_327 = arith.constant dense<0.000000e+00> : vector<64x32xf32>
    %375 = tpu.matmul %372, %374, %cst_327 {dimension_numbers = #tpu.dot_dimension_numbers<[1], [0], [0], [1], [0, 0, 1, 1], [], []>} : vector<64x32xf32>, vector<32x32xf32>, vector<64x32xf32> -> vector<64x32xf32>
    %376 = arith.addf %367, %375 : vector<64x32xf32>
    %c55_i32_328 = arith.constant 55 : i32
    %377 = tpu.dynamic_rotate %310 by %c55_i32_328 dim 0 : vector<64x32xf32>, i32 -> vector<64x32xf32>
    %c8_329 = arith.constant 8 : index
    %c0_330 = arith.constant 0 : index
    %c0_331 = arith.constant 0 : index
    %378 = vector.load %arg3[%c8_329, %c0_330, %c0_331] : memref<9x64x1xf32, #tpu.memory_space<vmem>>, vector<1x64x1xf32>
    %379 = vector.shape_cast %378 : vector<1x64x1xf32> to vector<64x1xf32>
    %380 = vector.broadcast %379 : vector<64x1xf32> to vector<64x32xf32>
    %381 = arith.mulf %377, %380 : vector<64x32xf32>
    %c3_332 = arith.constant 3 : index
    %c8_333 = arith.constant 8 : index
    %c0_334 = arith.constant 0 : index
    %c0_335 = arith.constant 0 : index
    %382 = vector.load %arg4[%c3_332, %c8_333, %c0_334, %c0_335] : memref<4x9x32x32xf32, #tpu.memory_space<vmem>>, vector<1x1x32x32xf32>
    %383 = vector.shape_cast %382 : vector<1x1x32x32xf32> to vector<32x32xf32>
    %cst_336 = arith.constant dense<0.000000e+00> : vector<64x32xf32>
    %384 = tpu.matmul %381, %383, %cst_336 {dimension_numbers = #tpu.dot_dimension_numbers<[1], [0], [0], [1], [0, 0, 1, 1], [], []>} : vector<64x32xf32>, vector<32x32xf32>, vector<64x32xf32> -> vector<64x32xf32>
    %385 = arith.addf %376, %384 : vector<64x32xf32>
    %c3_337 = arith.constant 3 : index
    %c0_338 = arith.constant 0 : index
    %c0_339 = arith.constant 0 : index
    %386 = vector.load %arg5[%c3_337, %c0_338, %c0_339] : memref<4x1x32xf32, #tpu.memory_space<vmem>>, vector<1x1x32xf32>
    %387 = vector.shape_cast %386 : vector<1x1x32xf32> to vector<1x32xf32>
    %388 = vector.broadcast %387 : vector<1x32xf32> to vector<64x32xf32>
    %389 = arith.mulf %385, %388 : vector<64x32xf32>
    %c3_340 = arith.constant 3 : index
    %c0_341 = arith.constant 0 : index
    %c0_342 = arith.constant 0 : index
    %390 = vector.load %arg6[%c3_340, %c0_341, %c0_342] : memref<4x1x32xf32, #tpu.memory_space<vmem>>, vector<1x1x32xf32>
    %391 = vector.shape_cast %390 : vector<1x1x32xf32> to vector<1x32xf32>
    %392 = vector.broadcast %391 : vector<1x32xf32> to vector<64x32xf32>
    %393 = arith.addf %389, %392 : vector<64x32xf32>
    %cst_343 = arith.constant 0.000000e+00 : f32
    %394 = vector.broadcast %cst_343 : f32 to vector<64x32xf32>
    %395 = arith.maximumf %393, %394 : vector<64x32xf32>
    %396 = arith.addf %202, %395 : vector<64x32xf32>
    %c0_344 = arith.constant 0 : index
    %c0_345 = arith.constant 0 : index
    %397 = vector.load %arg11[%c0_344, %c0_345] : memref<32x8xf32, #tpu.memory_space<vmem>>, vector<32x8xf32>
    %cst_346 = arith.constant dense<0.000000e+00> : vector<64x8xf32>
    %398 = tpu.matmul %396, %397, %cst_346 {dimension_numbers = #tpu.dot_dimension_numbers<[1], [0], [0], [1], [0, 0, 1, 1], [], []>} : vector<64x32xf32>, vector<32x8xf32>, vector<64x8xf32> -> vector<64x8xf32>
    %c0_347 = arith.constant 0 : index
    %c0_348 = arith.constant 0 : index
    %399 = vector.load %arg12[%c0_347, %c0_348] : memref<1x8xf32, #tpu.memory_space<vmem>>, vector<1x8xf32>
    %400 = vector.broadcast %399 : vector<1x8xf32> to vector<64x8xf32>
    %401 = arith.addf %398, %400 : vector<64x8xf32>
    %c0_349 = arith.constant 0 : index
    %c0_350 = arith.constant 0 : index
    %c0_351 = arith.constant 0 : index
    %402 = vector.load %arg13[%c0_349, %c0_350, %c0_351] : memref<1x64x8xf32, #tpu.memory_space<vmem>>, vector<1x64x8xf32>
    %403 = vector.shape_cast %402 : vector<1x64x8xf32> to vector<64x8xf32>
    %404 = vector.shape_cast %401 : vector<64x8xf32> to vector<1x64x8xf32>
    tpu.vector_store %arg13[%c0_349, %c0_350, %c0_351], %404 {strides = array<i32>} : memref<1x64x8xf32, #tpu.memory_space<vmem>>, vector<1x64x8xf32>,
    return
  }
  func.func @transform_0(%arg0: i32) -> i32 {
    %c0_i32 = arith.constant 0 : i32
    %c0_i32_0 = arith.constant 0 : i32
    return %c0_i32 : i32
  }
  func.func @transform_1(%arg0: i32) -> (i32, i32, i32) {
    %c0_i32 = arith.constant 0 : i32
    %c0_i32_0 = arith.constant 0 : i32
    %c0_i32_1 = arith.constant 0 : i32
    return %arg0, %c0_i32, %c0_i32_0 : i32, i32, i32
  }
  func.func @transform_2(%arg0: i32) -> (i32, i32, i32) {
    %c0_i32 = arith.constant 0 : i32
    %c0_i32_0 = arith.constant 0 : i32
    %c0_i32_1 = arith.constant 0 : i32
    %c0_i32_2 = arith.constant 0 : i32
    return %c0_i32, %c0_i32_0, %c0_i32_1 : i32, i32, i32
  }
  func.func @transform_3(%arg0: i32) -> (i32, i32, i32, i32) {
    %c0_i32 = arith.constant 0 : i32
    %c0_i32_0 = arith.constant 0 : i32
    %c0_i32_1 = arith.constant 0 : i32
    %c0_i32_2 = arith.constant 0 : i32
    %c0_i32_3 = arith.constant 0 : i32
    return %c0_i32, %c0_i32_0, %c0_i32_1, %c0_i32_2 : i32, i32, i32, i32
  }
  func.func @transform_4(%arg0: i32) -> (i32, i32, i32) {
    %c0_i32 = arith.constant 0 : i32
    %c0_i32_0 = arith.constant 0 : i32
    %c0_i32_1 = arith.constant 0 : i32
    %c0_i32_2 = arith.constant 0 : i32
    return %c0_i32, %c0_i32_0, %c0_i32_1 : i32, i32, i32
  }
  func.func @transform_5(%arg0: i32) -> (i32, i32, i32) {
    %c0_i32 = arith.constant 0 : i32
    %c0_i32_0 = arith.constant 0 : i32
    %c0_i32_1 = arith.constant 0 : i32
    %c0_i32_2 = arith.constant 0 : i32
    return %c0_i32, %c0_i32_0, %c0_i32_1 : i32, i32, i32
  }
  func.func @transform_6(%arg0: i32) -> (i32, i32) {
    %c0_i32 = arith.constant 0 : i32
    %c0_i32_0 = arith.constant 0 : i32
    %c0_i32_1 = arith.constant 0 : i32
    return %c0_i32, %c0_i32_0 : i32, i32
  }
  func.func @transform_7(%arg0: i32) -> (i32, i32) {
    %c0_i32 = arith.constant 0 : i32
    %c0_i32_0 = arith.constant 0 : i32
    %c0_i32_1 = arith.constant 0 : i32
    return %c0_i32, %c0_i32_0 : i32, i32
  }
  func.func @transform_8(%arg0: i32) -> (i32, i32) {
    %c0_i32 = arith.constant 0 : i32
    %c0_i32_0 = arith.constant 0 : i32
    %c0_i32_1 = arith.constant 0 : i32
    return %c0_i32, %c0_i32_0 : i32, i32
  }
  func.func @transform_9(%arg0: i32) -> (i32, i32) {
    %c0_i32 = arith.constant 0 : i32
    %c0_i32_0 = arith.constant 0 : i32
    %c0_i32_1 = arith.constant 0 : i32
    return %c0_i32, %c0_i32_0 : i32, i32
  }
  func.func @transform_10(%arg0: i32) -> (i32, i32) {
    %c0_i32 = arith.constant 0 : i32
    %c0_i32_0 = arith.constant 0 : i32
    %c0_i32_1 = arith.constant 0 : i32
    return %c0_i32, %c0_i32_0 : i32, i32
  }
  func.func @transform_11(%arg0: i32) -> (i32, i32) {
    %c0_i32 = arith.constant 0 : i32
    %c0_i32_0 = arith.constant 0 : i32
    %c0_i32_1 = arith.constant 0 : i32
    return %c0_i32, %c0_i32_0 : i32, i32
  }
  func.func @transform_12(%arg0: i32) -> (i32, i32, i32) {
    %c0_i32 = arith.constant 0 : i32
    %c0_i32_0 = arith.constant 0 : i32
    %c0_i32_1 = arith.constant 0 : i32
    return %arg0, %c0_i32, %c0_i32_0 : i32, i32, i32
  }
}

</mosaic_0001>

<llo_original>
// kernel: tpu_custom_call.1
$region0: #{tpu_custom_call.1}
  #allocation0 [shape = 'u32[]', space=smem, size = 0x4, offset = 0x4, fixed_abs, tag = 'smem constant byte address 0x4 - core index']
  #allocation1 [shape = 'u32[72,128]{1,0:T(1,128)}', space=vmem, size = 0x9000, scoped, tag = 'internal scratch']
  %s0 = inlined_call_operand.vmem [shape: f32[2], index: 0, kind: input, shape index: {}]
  %s1 = inlined_call_operand.vmem [shape: f32[2,64,32], index: 1, kind: input, shape index: {}]
  %s2 = inlined_call_operand.vmem [shape: f32[9,64,1], index: 2, kind: input, shape index: {}]
  %s3 = inlined_call_operand.hbm [shape: f32[4,9,32,32], index: 3, kind: input, shape index: {}]
  %s4 = inlined_call_operand.vmem [shape: f32[4,1,32], index: 4, kind: input, shape index: {}]
  %s5 = inlined_call_operand.vmem [shape: f32[4,1,32], index: 5, kind: input, shape index: {}]
  %s6 = inlined_call_operand.vmem [shape: f32[32,32], index: 6, kind: input, shape index: {}]
  %s7 = inlined_call_operand.vmem [shape: f32[1,32], index: 7, kind: input, shape index: {}]
  %s8 = inlined_call_operand.vmem [shape: f32[32,32], index: 8, kind: input, shape index: {}]
  %s9 = inlined_call_operand.vmem [shape: f32[1,32], index: 9, kind: input, shape index: {}]
  %s10 = inlined_call_operand.vmem [shape: f32[32,8], index: 10, kind: input, shape index: {}]
  %s11 = inlined_call_operand.vmem [shape: f32[1,8], index: 11, kind: input, shape index: {}]
  %s12 = inlined_call_operand.vmem [shape: f32[2,64,8], index: 12, kind: output, shape index: {}]
  %s13 = sld [smem:[#allocation0]]
  $region89: #{tpu_custom_call.1} parent=0
    _
  %s15 = ssub.s32 1, %s13
  %s16 = scalar_select 0, %s15, %s13
  $region1: #{tpu_custom_call.1} parent=0
    #allocation2 [shape = 'u8[512]{0}', space=smem, size = 0x200, scoped, tag = 'input window, operand 0, single buffered']
    #allocation3 [shape = 's32[2]{0}', space=sflag, size = 0x8, scoped, tag = 'scoped memory for tpu_custom_call.1']
    #allocation4 [shape = 's32[2]{0}', space=sflag, size = 0x8, scoped, tag = 'scoped memory for tpu_custom_call.1']
    #allocation5 [shape = 'u8[589824]{0}', space=vmem, size = 0x90000, scoped, tag = 'input window, operand 3, single buffered']
    %17 = vsyncpa [#allocation4], 0
    %18 = vsyncpa [#allocation3], 0
    loop: start=0, step=1, limit=4
    $region2: #{tpu_custom_call.1} parent=1 // loop_pre_header
      _
    $region3: #{tpu_custom_call.1} parent=1 // loop_header
      %s20 = sphi 0, %s24
      %p21 = scmp.ge.s32.totalorder %s20, 4
      %s28 = sphi 0, %s28
      %s30 = sphi 0, %s28
      %s31 = sphi 0, %s30
      %s45 = sphi 0, %s31
      %s51 = sphi 0, %s53
      %s54 = sphi 0, %s51
      %s55 = sphi 0, %s54
      %s71 = sphi 0, %s55
      %s75 = sphi 0, %s75
      %s77 = sphi 0, %s75
      %s78 = sphi 0, %s77
      %s92 = sphi 0, %s78
      %s96 = sphi 0, %s96
      %s98 = sphi 0, %s96
      %s99 = sphi 0, %s98
      %s113 = sphi 0, %s99
      %s117 = sphi 0, %s117
      %s119 = sphi 0, %s117
      %s120 = sphi 0, %s119
      %s134 = sphi 0, %s120
      %s138 = sphi 0, %s138
      %s140 = sphi 0, %s138
      %s141 = sphi 0, %s140
      %s155 = sphi 0, %s141
      %s159 = sphi 0, %s159
      %s161 = sphi 0, %s159
      %s162 = sphi 0, %s161
      %s176 = sphi 0, %s162
      %s180 = sphi 0, %s180
      %s182 = sphi 0, %s180
      %s183 = sphi 0, %s182
      %s197 = sphi 0, %s183
      %s201 = sphi 0, %s201
      %s203 = sphi 0, %s201
      %s204 = sphi 0, %s203
      %s218 = sphi 0, %s204
      %s222 = sphi 0, %s222
      %s224 = sphi 0, %s222
      %s225 = sphi 0, %s224
      %s239 = sphi 0, %s225
      %s243 = sphi 0, %s243
      %s245 = sphi 0, %s243
      %s246 = sphi 0, %s245
      %s260 = sphi 0, %s246
      %s264 = sphi 0, %s264
      %s266 = sphi 0, %s264
      %s267 = sphi 0, %s266
      %s281 = sphi 0, %s267
      %s287 = sphi 0, %s289
      %s290 = sphi 0, %s287
      %s291 = sphi 0, %s290
      %s307 = sphi 0, %s291
    $region4: #{tpu_custom_call.1} parent=1 // loop_header_branch
      %23 = sbr.rel (%p21) target = $region8
    $region5: #{tpu_custom_call.1} parent=1 // loop_body
      %s25 = ssub.s32 %s20, 1
      %s26 = ssub.s32 %s20, 2
      %s27 = sadd.s32 %s20, 1
      %s29 = sadd.s32 %s28, 1
      %p32 = scmp.eq.s32.totalorder %s20, 1
      %p33 = scmp.ne.s32.totalorder %s28, %s30
      %p34 = scmp.eq.s32.totalorder %s20, 0
      %p35 = por %p33, %p34
      %p36 = scmp.ne.s32.totalorder %s28, %s30
      %p37 = scmp.eq.s32.totalorder %s25, 1
      %p38 = por %p36, %p37
      %p39 = scmp.ne.s32.totalorder %s30, %s31
      %p40 = scmp.eq.s32.totalorder %s25, 0
      %p41 = por %p39, %p40
      %p42 = scmp.ne.s32.totalorder %s30, %s31
      %p43 = scmp.eq.s32.totalorder %s26, 1
      %p44 = por %p42, %p43
      %p46 = scmp.ne.s32.totalorder %s31, %s45
      %p47 = scmp.eq.s32.totalorder %s26, 0
      %p48 = por %p46, %p47
      %s49 = ssub.s32 %s20, %s27
      %p50 = scmp.eq.s32.totalorder %s49, 0
      %s52 = sadd.s32 %s51, 1
      %s53 = scalar_select %p50, %s51, %s52
      %p56 = pneg %p50
      %p57 = scmp.eq.s32.totalorder %s20, 1
      %p58 = por %p56, %p57
      %p59 = scmp.ne.s32.totalorder %s51, %s54
      %p60 = scmp.eq.s32.totalorder %s20, 0
      %p61 = por %p59, %p60
      %p62 = scmp.ne.s32.totalorder %s51, %s54
      %p63 = scmp.eq.s32.totalorder %s25, 1
      %p64 = por %p62, %p63
      %p65 = scmp.ne.s32.totalorder %s54, %s55
      %p66 = scmp.eq.s32.totalorder %s25, 0
      %p67 = por %p65, %p66
      %p68 = scmp.ne.s32.totalorder %s54, %s55
      %p69 = scmp.eq.s32.totalorder %s26, 1
      %p70 = por %p68, %p69
      %p72 = scmp.ne.s32.totalorder %s55, %s71
      %p73 = scmp.eq.s32.totalorder %s26, 0
      %p74 = por %p72, %p73
      %s76 = sadd.s32 %s75, 1
      %p79 = scmp.eq.s32.totalorder %s20, 1
      %p80 = scmp.ne.s32.totalorder %s75, %s77
      %p81 = scmp.eq.s32.totalorder %s20, 0
      %p82 = por %p80, %p81
      %p83 = scmp.ne.s32.totalorder %s75, %s77
      %p84 = scmp.eq.s32.totalorder %s25, 1
      %p85 = por %p83, %p84
      %p86 = scmp.ne.s32.totalorder %s77, %s78
      %p87 = scmp.eq.s32.totalorder %s25, 0
      %p88 = por %p86, %p87
      %p89 = scmp.ne.s32.totalorder %s77, %s78
      %p90 = scmp.eq.s32.totalorder %s26, 1
      %p91 = por %p89, %p90
      %p93 = scmp.ne.s32.totalorder %s78, %s92
      %p94 = scmp.eq.s32.totalorder %s26, 0
      %p95 = por %p93, %p94
      %s97 = sadd.s32 %s96, 1
      %p100 = scmp.eq.s32.totalorder %s20, 1
      %p101 = scmp.ne.s32.totalorder %s96, %s98
      %p102 = scmp.eq.s32.totalorder %s20, 0
      %p103 = por %p101, %p102
      %p104 = scmp.ne.s32.totalorder %s96, %s98
      %p105 = scmp.eq.s32.totalorder %s25, 1
      %p106 = por %p104, %p105
      %p107 = scmp.ne.s32.totalorder %s98, %s99
      %p108 = scmp.eq.s32.totalorder %s25, 0
      %p109 = por %p107, %p108
      %p110 = scmp.ne.s32.totalorder %s98, %s99
      %p111 = scmp.eq.s32.totalorder %s26, 1
      %p112 = por %p110, %p111
      %p114 = scmp.ne.s32.totalorder %s99, %s113
      %p115 = scmp.eq.s32.totalorder %s26, 0
      %p116 = por %p114, %p115
      %s118 = sadd.s32 %s117, 1
      %p121 = scmp.eq.s32.totalorder %s20, 1
      %p122 = scmp.ne.s32.totalorder %s117, %s119
      %p123 = scmp.eq.s32.totalorder %s20, 0
      %p124 = por %p122, %p123
      %p125 = scmp.ne.s32.totalorder %s117, %s119
      %p126 = scmp.eq.s32.totalorder %s25, 1
      %p127 = por %p125, %p126
      %p128 = scmp.ne.s32.totalorder %s119, %s120
      %p129 = scmp.eq.s32.totalorder %s25, 0
      %p130 = por %p128, %p129
      %p131 = scmp.ne.s32.totalorder %s119, %s120
      %p132 = scmp.eq.s32.totalorder %s26, 1
      %p133 = por %p131, %p132
      %p135 = scmp.ne.s32.totalorder %s120, %s134
      %p136 = scmp.eq.s32.totalorder %s26, 0
      %p137 = por %p135, %p136
      %s139 = sadd.s32 %s138, 1
      %p142 = scmp.eq.s32.totalorder %s20, 1
      %p143 = scmp.ne.s32.totalorder %s138, %s140
      %p144 = scmp.eq.s32.totalorder %s20, 0
      %p145 = por %p143, %p144
      %p146 = scmp.ne.s32.totalorder %s138, %s140
      %p147 = scmp.eq.s32.totalorder %s25, 1
      %p148 = por %p146, %p147
      %p149 = scmp.ne.s32.totalorder %s140, %s141
      %p150 = scmp.eq.s32.totalorder %s25, 0
      %p151 = por %p149, %p150
      %p152 = scmp.ne.s32.totalorder %s140, %s141
      %p153 = scmp.eq.s32.totalorder %s26, 1
      %p154 = por %p152, %p153
      %p156 = scmp.ne.s32.totalorder %s141, %s155
      %p157 = scmp.eq.s32.totalorder %s26, 0
      %p158 = por %p156, %p157
      %s160 = sadd.s32 %s159, 1
      %p163 = scmp.eq.s32.totalorder %s20, 1
      %p164 = scmp.ne.s32.totalorder %s159, %s161
      %p165 = scmp.eq.s32.totalorder %s20, 0
      %p166 = por %p164, %p165
      %p167 = scmp.ne.s32.totalorder %s159, %s161
      %p168 = scmp.eq.s32.totalorder %s25, 1
      %p169 = por %p167, %p168
      %p170 = scmp.ne.s32.totalorder %s161, %s162
      %p171 = scmp.eq.s32.totalorder %s25, 0
      %p172 = por %p170, %p171
      %p173 = scmp.ne.s32.totalorder %s161, %s162
      %p174 = scmp.eq.s32.totalorder %s26, 1
      %p175 = por %p173, %p174
      %p177 = scmp.ne.s32.totalorder %s162, %s176
      %p178 = scmp.eq.s32.totalorder %s26, 0
      %p179 = por %p177, %p178
      %s181 = sadd.s32 %s180, 1
      %p184 = scmp.eq.s32.totalorder %s20, 1
      %p185 = scmp.ne.s32.totalorder %s180, %s182
      %p186 = scmp.eq.s32.totalorder %s20, 0
      %p187 = por %p185, %p186
      %p188 = scmp.ne.s32.totalorder %s180, %s182
      %p189 = scmp.eq.s32.totalorder %s25, 1
      %p190 = por %p188, %p189
      %p191 = scmp.ne.s32.totalorder %s182, %s183
      %p192 = scmp.eq.s32.totalorder %s25, 0
      %p193 = por %p191, %p192
      %p194 = scmp.ne.s32.totalorder %s182, %s183
      %p195 = scmp.eq.s32.totalorder %s26, 1
      %p196 = por %p194, %p195
      %p198 = scmp.ne.s32.totalorder %s183, %s197
      %p199 = scmp.eq.s32.totalorder %s26, 0
      %p200 = por %p198, %p199
      %s202 = sadd.s32 %s201, 1
      %p205 = scmp.eq.s32.totalorder %s20, 1
      %p206 = scmp.ne.s32.totalorder %s201, %s203
      %p207 = scmp.eq.s32.totalorder %s20, 0
      %p208 = por %p206, %p207
      %p209 = scmp.ne.s32.totalorder %s201, %s203
      %p210 = scmp.eq.s32.totalorder %s25, 1
      %p211 = por %p209, %p210
      %p212 = scmp.ne.s32.totalorder %s203, %s204
      %p213 = scmp.eq.s32.totalorder %s25, 0
      %p214 = por %p212, %p213
      %p215 = scmp.ne.s32.totalorder %s203, %s204
      %p216 = scmp.eq.s32.totalorder %s26, 1
      %p217 = por %p215, %p216
      %p219 = scmp.ne.s32.totalorder %s204, %s218
      %p220 = scmp.eq.s32.totalorder %s26, 0
      %p221 = por %p219, %p220
      %s223 = sadd.s32 %s222, 1
      %p226 = scmp.eq.s32.totalorder %s20, 1
      %p227 = scmp.ne.s32.totalorder %s222, %s224
      %p228 = scmp.eq.s32.totalorder %s20, 0
      %p229 = por %p227, %p228
      %p230 = scmp.ne.s32.totalorder %s222, %s224
      %p231 = scmp.eq.s32.totalorder %s25, 1
      %p232 = por %p230, %p231
      %p233 = scmp.ne.s32.totalorder %s224, %s225
      %p234 = scmp.eq.s32.totalorder %s25, 0
      %p235 = por %p233, %p234
      %p236 = scmp.ne.s32.totalorder %s224, %s225
      %p237 = scmp.eq.s32.totalorder %s26, 1
      %p238 = por %p236, %p237
      %p240 = scmp.ne.s32.totalorder %s225, %s239
      %p241 = scmp.eq.s32.totalorder %s26, 0
      %p242 = por %p240, %p241
      %s244 = sadd.s32 %s243, 1
      %p247 = scmp.eq.s32.totalorder %s20, 1
      %p248 = scmp.ne.s32.totalorder %s243, %s245
      %p249 = scmp.eq.s32.totalorder %s20, 0
      %p250 = por %p248, %p249
      %p251 = scmp.ne.s32.totalorder %s243, %s245
      %p252 = scmp.eq.s32.totalorder %s25, 1
      %p253 = por %p251, %p252
      %p254 = scmp.ne.s32.totalorder %s245, %s246
      %p255 = scmp.eq.s32.totalorder %s25, 0
      %p256 = por %p254, %p255
      %p257 = scmp.ne.s32.totalorder %s245, %s246
      %p258 = scmp.eq.s32.totalorder %s26, 1
      %p259 = por %p257, %p258
      %p261 = scmp.ne.s32.totalorder %s246, %s260
      %p262 = scmp.eq.s32.totalorder %s26, 0
      %p263 = por %p261, %p262
      %s265 = sadd.s32 %s264, 1
      %p268 = scmp.eq.s32.totalorder %s20, 1
      %p269 = scmp.ne.s32.totalorder %s264, %s266
      %p270 = scmp.eq.s32.totalorder %s20, 0
      %p271 = por %p269, %p270
      %p272 = scmp.ne.s32.totalorder %s264, %s266
      %p273 = scmp.eq.s32.totalorder %s25, 1
      %p274 = por %p272, %p273
      %p275 = scmp.ne.s32.totalorder %s266, %s267
      %p276 = scmp.eq.s32.totalorder %s25, 0
      %p277 = por %p275, %p276
      %p278 = scmp.ne.s32.totalorder %s266, %s267
      %p279 = scmp.eq.s32.totalorder %s26, 1
      %p280 = por %p278, %p279
      %p282 = scmp.ne.s32.totalorder %s267, %s281
      %p283 = scmp.eq.s32.totalorder %s26, 0
      %p284 = por %p282, %p283
      %s285 = ssub.s32 %s20, %s27
      %p286 = scmp.eq.s32.totalorder %s285, 0
      %s288 = sadd.s32 %s287, 1
      %s289 = scalar_select %p286, %s287, %s288
      %p292 = pneg %p286
      %p293 = scmp.eq.s32.totalorder %s20, 1
      %p294 = por %p292, %p293
      %p295 = scmp.ne.s32.totalorder %s287, %s290
      %p296 = scmp.eq.s32.totalorder %s20, 0
      %p297 = por %p295, %p296
      %p298 = scmp.ne.s32.totalorder %s287, %s290
      %p299 = scmp.eq.s32.totalorder %s25, 1
      %p300 = por %p298, %p299
      %p301 = scmp.ne.s32.totalorder %s290, %s291
      %p302 = scmp.eq.s32.totalorder %s25, 0
      %p303 = por %p301, %p302
      %p304 = scmp.ne.s32.totalorder %s290, %s291
      %p305 = scmp.eq.s32.totalorder %s26, 1
      %p306 = por %p304, %p305
      %p308 = scmp.ne.s32.totalorder %s291, %s307
      %p309 = scmp.eq.s32.totalorder %s26, 0
      %p310 = por %p308, %p309
      %p311 = scmp.le.s32.totalorder 1, %s20
      %p312 = scmp.lt.s32.totalorder %s20, 3
      %p313 = pnand %p311, %p312
      %p314 = pneg %p313
      // Predicated region
      $region9: #{tpu_custom_call.1} parent=5 // pred_check
        _
      $region10: #{tpu_custom_call.1} parent=5 // pred_check_branch
        %316 = sbr.rel (%p313) target = $region12
      $region11: #{tpu_custom_call.1} parent=5 // pred_region
        %s317 = ssub.s32 %s20, 1
        // Predicated region
        $region13: #{tpu_custom_call.1} parent=11 // pred_check
          %p318 = pneg %p41
        $region14: #{tpu_custom_call.1} parent=11 // pred_check_branch
          %320 = sbr.rel (%p318) target = $region16
        $region15: #{tpu_custom_call.1} parent=11 // pred_region
          %322 = vsyncadd [#allocation4], 0
          %s324 = sshll.u32 %s0, 4
          %s325 = int_to_ptr.vmem [resolvable:$true] %s324
          %327 = dma.vmem_to_smem %s325, 16, [#allocation2], [#allocation4]
        $region16: #{tpu_custom_call.1} parent=11 // pred_fallthru
          _
        // Predicated region
        $region17: #{tpu_custom_call.1} parent=11 // pred_check
          %p328 = pneg %p88
        $region18: #{tpu_custom_call.1} parent=11 // pred_check_branch
          %330 = sbr.rel (%p328) target = $region20
        $region19: #{tpu_custom_call.1} parent=11 // pred_region
          _
        $region20: #{tpu_custom_call.1} parent=11 // pred_fallthru
          _
        // Predicated region
        $region21: #{tpu_custom_call.1} parent=11 // pred_check
          %p331 = pneg %p109
        $region22: #{tpu_custom_call.1} parent=11 // pred_check_branch
          %333 = sbr.rel (%p331) target = $region24
        $region23: #{tpu_custom_call.1} parent=11 // pred_region
          %335 = vsyncadd [#allocation3], 0
          %s336 = sshll.u32 %s3, 4
          %s337 = int_to_ptr.hbm [resolvable:$true] %s336
          %s338 = sshll.u32 [#allocation5], 4
          %s339 = int_to_ptr.vmem [resolvable:$true] %s338
          %344 = dma.hbm_to_vmem [thread:$0]  %s337, 18432, %s339, [#allocation3], 128, 128, 8
        $region24: #{tpu_custom_call.1} parent=11 // pred_fallthru
          _
        // Predicated region
        $region25: #{tpu_custom_call.1} parent=11 // pred_check
          %p345 = pneg %p130
        $region26: #{tpu_custom_call.1} parent=11 // pred_check_branch
          %347 = sbr.rel (%p345) target = $region28
        $region27: #{tpu_custom_call.1} parent=11 // pred_region
          _
        $region28: #{tpu_custom_call.1} parent=11 // pred_fallthru
          _
        // Predicated region
        $region29: #{tpu_custom_call.1} parent=11 // pred_check
          %p348 = pneg %p151
        $region30: #{tpu_custom_call.1} parent=11 // pred_check_branch
          %350 = sbr.rel (%p348) target = $region32
        $region31: #{tpu_custom_call.1} parent=11 // pred_region
          _
        $region32: #{tpu_custom_call.1} parent=11 // pred_fallthru
          _
        // Predicated region
        $region33: #{tpu_custom_call.1} parent=11 // pred_check
          %p351 = pneg %p172
        $region34: #{tpu_custom_call.1} parent=11 // pred_check_branch
          %353 = sbr.rel (%p351) target = $region36
        $region35: #{tpu_custom_call.1} parent=11 // pred_region
          _
        $region36: #{tpu_custom_call.1} parent=11 // pred_fallthru
          _
        // Predicated region
        $region37: #{tpu_custom_call.1} parent=11 // pred_check
          %p354 = pneg %p193
        $region38: #{tpu_custom_call.1} parent=11 // pred_check_branch
          %356 = sbr.rel (%p354) target = $region40
        $region39: #{tpu_custom_call.1} parent=11 // pred_region
          _
        $region40: #{tpu_custom_call.1} parent=11 // pred_fallthru
          _
        // Predicated region
        $region41: #{tpu_custom_call.1} parent=11 // pred_check
          %p357 = pneg %p214
        $region42: #{tpu_custom_call.1} parent=11 // pred_check_branch
          %359 = sbr.rel (%p357) target = $region44
        $region43: #{tpu_custom_call.1} parent=11 // pred_region
          _
        $region44: #{tpu_custom_call.1} parent=11 // pred_fallthru
          _
        // Predicated region
        $region45: #{tpu_custom_call.1} parent=11 // pred_check
          %p360 = pneg %p235
        $region46: #{tpu_custom_call.1} parent=11 // pred_check_branch
          %362 = sbr.rel (%p360) target = $region48
        $region47: #{tpu_custom_call.1} parent=11 // pred_region
          _
        $region48: #{tpu_custom_call.1} parent=11 // pred_fallthru
          _
        // Predicated region
        $region49: #{tpu_custom_call.1} parent=11 // pred_check
          %p363 = pneg %p256
        $region50: #{tpu_custom_call.1} parent=11 // pred_check_branch
          %365 = sbr.rel (%p363) target = $region52
        $region51: #{tpu_custom_call.1} parent=11 // pred_region
          _
        $region52: #{tpu_custom_call.1} parent=11 // pred_fallthru
          _
        // Predicated region
        $region53: #{tpu_custom_call.1} parent=11 // pred_check
          %p366 = pneg %p277
        $region54: #{tpu_custom_call.1} parent=11 // pred_check_branch
          %368 = sbr.rel (%p366) target = $region56
        $region55: #{tpu_custom_call.1} parent=11 // pred_region
          _
        $region56: #{tpu_custom_call.1} parent=11 // pred_fallthru
          _
      $region12: #{tpu_custom_call.1} parent=5 // pred_fallthru
        _
      %p369 = scmp.lt.s32.totalorder %s20, 2
      // Predicated region
      $region57: #{tpu_custom_call.1} parent=5 // pred_check
        %p370 = pneg %p369
      $region58: #{tpu_custom_call.1} parent=5 // pred_check_branch
        %372 = sbr.rel (%p370) target = $region60
      $region59: #{tpu_custom_call.1} parent=5 // pred_region
        // Predicated region
        $region61: #{tpu_custom_call.1} parent=59 // pred_check
          %p373 = pneg %p61
        $region62: #{tpu_custom_call.1} parent=59 // pred_check_branch
          %375 = sbr.rel (%p373) target = $region64
        $region63: #{tpu_custom_call.1} parent=59 // pred_region
          %p376 = scmp.lt.s32.totalorder %s20, 1
          %s377 = scalar_select %p376, %s20, 1
          %s378 = smul.addr %s377, 8
          %s379 = smul.addr %s378, 8
          %s380 = scalar_lea.vmem %s1, %s379
        $region64: #{tpu_custom_call.1} parent=59 // pred_fallthru
          _
      $region60: #{tpu_custom_call.1} parent=5 // pred_fallthru
        _
      %p381 = scmp.le.s32.totalorder 1, %s20
      %p382 = scmp.lt.s32.totalorder %s20, 3
      %p383 = pnand %p381, %p382
      %p384 = pneg %p383
      // Predicated region
      $region65: #{tpu_custom_call.1} parent=5 // pred_check
        _
      $region66: #{tpu_custom_call.1} parent=5 // pred_check_branch
        %386 = sbr.rel (%p383) target = $region68
      $region67: #{tpu_custom_call.1} parent=5 // pred_region
        %s387 = ssub.s32 %s20, 1
        // Predicated region
        $region69: #{tpu_custom_call.1} parent=67 // pred_check
          %p388 = pneg %p41
        $region70: #{tpu_custom_call.1} parent=67 // pred_check_branch
          %390 = sbr.rel (%p388) target = $region72
        $region71: #{tpu_custom_call.1} parent=67 // pred_region
          %392 = dma.done [#allocation4], 16
        $region72: #{tpu_custom_call.1} parent=67 // pred_fallthru
          _
        // Predicated region
        $region73: #{tpu_custom_call.1} parent=67 // pred_check
          %p393 = pneg %p109
        $region74: #{tpu_custom_call.1} parent=67 // pred_check_branch
          %395 = sbr.rel (%p393) target = $region76
        $region75: #{tpu_custom_call.1} parent=67 // pred_region
          %397 = dma.done [#allocation3], 18432
        $region76: #{tpu_custom_call.1} parent=67 // pred_fallthru
          _
        %398 = sfence
        %p399 = pneg %p41
        %p400 = pneg %p38
        %p401 = scmp.lt.s32.totalorder %s25, 1
        %s402 = scalar_select %p401, %s25, 1
        %s403 = smul.addr %s402, 8
        %s404 = smul.addr %s403, 8
        %s405 = scalar_lea.vmem %s1, %s404
        %p406 = pneg %p67
        %p407 = pneg %p64
        %p408 = pneg %p88
        %p409 = pneg %p85
        %p410 = pneg %p109
        %p411 = pneg %p106
        %p412 = pneg %p130
        %p413 = pneg %p127
        %p414 = pneg %p151
        %p415 = pneg %p148
        %p416 = pneg %p172
        %p417 = pneg %p169
        %p418 = pneg %p193
        %p419 = pneg %p190
        %p420 = pneg %p214
        %p421 = pneg %p211
        %p422 = pneg %p235
        %p423 = pneg %p232
        %p424 = pneg %p256
        %p425 = pneg %p253
        %p426 = pneg %p277
        %p427 = pneg %p274
        %p428 = pneg %p303
        %p429 = pneg %p300
        %p430 = scmp.lt.s32.totalorder %s25, 1
        %s431 = scalar_select %p430, %s25, 1
        %s432 = smul.addr %s431, 8
        %s433 = smul.addr %s432, 8
        %s434 = scalar_lea.vmem %s12, %s433
        %p435 = scmp.lt.s32.totalorder %s25, 1
        %s436 = scalar_select %p435, %s25, 1
        %s437 = smul.addr %s436, 8
        %s438 = smul.addr %s437, 8
        %s439 = scalar_lea.vmem %s1, %s438
        %p440 = scmp.lt.s32.totalorder %s25, 1
        %s441 = scalar_select %p440, %s25, 1
        %s442 = smul.addr %s441, 8
        %s443 = smul.addr %s442, 8
        %s444 = scalar_lea.vmem %s12, %s443
        %v445 = vld [vmem:[%s439] sm:$0xff]
        %v446 = vld [vmem:[%s439 + $0x8] sm:$0xff]
        %v447 = vld [vmem:[%s439 + $0x10] sm:$0xff]
        %v448 = vld [vmem:[%s439 + $0x18] sm:$0xff]
        %v449 = vld [vmem:[%s439 + $0x20] sm:$0xff]
        %v450 = vld [vmem:[%s439 + $0x28] sm:$0xff]
        %v451 = vld [vmem:[%s439 + $0x30] sm:$0xff]
        %v452 = vld [vmem:[%s439 + $0x38] sm:$0xff]
        %s453 = sld [smem:[#allocation2]]
        %s454 = sld [smem:[#allocation2 + $0x1]]
        %v455 = vrot.slane %v445, 7
        %v456 = vrot.slane %v446, 7
        %v457 = vrot.slane %v447, 7
        %v458 = vrot.slane %v448, 7
        %v459 = vrot.slane %v449, 7
        %v460 = vrot.slane %v450, 7
        %v461 = vrot.slane %v451, 7
        %v462 = vrot.slane %v452, 7
        %v463 = vlaneseq
        %v464 = vshrl.u32 %v463, 7
        %vm465 = vcmp.lt.s32.totalorder %v464, 1
        %v466 = vsel %vm465, %v461, %v462
        %v467 = vsel %vm465, %v460, %v461
        %v468 = vsel %vm465, %v459, %v460
        %v469 = vsel %vm465, %v458, %v459
        %v470 = vsel %vm465, %v457, %v458
        %v471 = vsel %vm465, %v456, %v457
        %v472 = vsel %vm465, %v455, %v456
        %v473 = vsel %vm465, %v462, %v455
        %v474 = vld [vmem:[%s2] sm:$0xff]
        %v475 = vld [vmem:[%s2 + $0x8] sm:$0xff]
        %v476 = vld [vmem:[%s2 + $0x10] sm:$0xff]
        %v477 = vld [vmem:[%s2 + $0x18] sm:$0xff]
        %v478 = vld [vmem:[%s2 + $0x20] sm:$0xff]
        %v479 = vld [vmem:[%s2 + $0x28] sm:$0xff]
        %v480 = vld [vmem:[%s2 + $0x30] sm:$0xff]
        %v481 = vld [vmem:[%s2 + $0x38] sm:$0xff]
        %483 = vset.pattern.permute.xlu0 0
        %484 = vperm.xlu0 %483, %v474
        %v485 = vpop.permute.xlu0 %484
        %488 = vset.pattern.permute.xlu0 0
        %489 = vperm.xlu0 %488, %v475
        %v490 = vpop.permute.xlu0 %489
        %493 = vset.pattern.permute.xlu0 0
        %494 = vperm.xlu0 %493, %v476
        %v495 = vpop.permute.xlu0 %494
        %498 = vset.pattern.permute.xlu0 0
        %499 = vperm.xlu0 %498, %v477
        %v500 = vpop.permute.xlu0 %499
        %503 = vset.pattern.permute.xlu0 0
        %504 = vperm.xlu0 %503, %v478
        %v505 = vpop.permute.xlu0 %504
        %508 = vset.pattern.permute.xlu0 0
        %509 = vperm.xlu0 %508, %v479
        %v510 = vpop.permute.xlu0 %509
        %513 = vset.pattern.permute.xlu0 0
        %514 = vperm.xlu0 %513, %v480
        %v515 = vpop.permute.xlu0 %514
        %518 = vset.pattern.permute.xlu0 0
        %519 = vperm.xlu0 %518, %v481
        %v520 = vpop.permute.xlu0 %519
        %v522 = vmul.f32 %v466, %v485
        %v523 = vmul.f32 %v473, %v490
        %v524 = vmul.f32 %v472, %v495
        %v525 = vmul.f32 %v471, %v500
        %v526 = vmul.f32 %v470, %v505
        %v527 = vmul.f32 %v469, %v510
        %v528 = vmul.f32 %v468, %v515
        %v529 = vmul.f32 %v467, %v520
        %v530 = vld [vmem:[#allocation5] sm:$0xff]
        %v531 = vld [vmem:[#allocation5 + $0x8] sm:$0xff]
        %v532 = vld [vmem:[#allocation5 + $0x10] sm:$0xff]
        %v533 = vld [vmem:[#allocation5 + $0x18] sm:$0xff]
        %s534 = scalar_lea.vmem %s2, 64
        %v535 = vld [vmem:[%s534] sm:$0xff]
        %v536 = vld [vmem:[%s534 + $0x8] sm:$0xff]
        %v537 = vld [vmem:[%s534 + $0x10] sm:$0xff]
        %v538 = vld [vmem:[%s534 + $0x18] sm:$0xff]
        %v539 = vld [vmem:[%s534 + $0x20] sm:$0xff]
        %v540 = vld [vmem:[%s534 + $0x28] sm:$0xff]
        %v541 = vld [vmem:[%s534 + $0x30] sm:$0xff]
        %v542 = vld [vmem:[%s534 + $0x38] sm:$0xff]
        %544 = vset.pattern.permute.xlu0 0
        %545 = vperm.xlu0 %544, %v535
        %v546 = vpop.permute.xlu0 %545
        %549 = vset.pattern.permute.xlu0 0
        %550 = vperm.xlu0 %549, %v536
        %v551 = vpop.permute.xlu0 %550
        %554 = vset.pattern.permute.xlu0 0
        %555 = vperm.xlu0 %554, %v537
        %v556 = vpop.permute.xlu0 %555
        %559 = vset.pattern.permute.xlu0 0
        %560 = vperm.xlu0 %559, %v538
        %v561 = vpop.permute.xlu0 %560
        %564 = vset.pattern.permute.xlu0 0
        %565 = vperm.xlu0 %564, %v539
        %v566 = vpop.permute.xlu0 %565
        %569 = vset.pattern.permute.xlu0 0
        %570 = vperm.xlu0 %569, %v540
        %v571 = vpop.permute.xlu0 %570
        %574 = vset.pattern.permute.xlu0 0
        %575 = vperm.xlu0 %574, %v541
        %v576 = vpop.permute.xlu0 %575
        %579 = vset.pattern.permute.xlu0 0
        %580 = vperm.xlu0 %579, %v542
        %v581 = vpop.permute.xlu0 %580
        %v583 = vmul.f32 %v452, %v546
        %v584 = vmul.f32 %v445, %v551
        %v585 = vmul.f32 %v446, %v556
        %v586 = vmul.f32 %v447, %v561
        %v587 = vmul.f32 %v448, %v566
        %v588 = vmul.f32 %v449, %v571
        %v589 = vmul.f32 %v450, %v576
        %v590 = vmul.f32 %v451, %v581
        %s591 = scalar_lea.vmem [#allocation5], 32
        %v592 = vld [vmem:[%s591] sm:$0xff]
        %v593 = vld [vmem:[%s591 + $0x8] sm:$0xff]
        %v594 = vld [vmem:[%s591 + $0x10] sm:$0xff]
        %v595 = vld [vmem:[%s591 + $0x18] sm:$0xff]
        %vm596 = vcmask 261120
        %v598 = vsel %vm596, %v583, 0
        %v601 = vsel %vm596, %v584, 0
        %v604 = vsel %vm596, %v585, 0
        %v607 = vsel %vm596, %v586, 0
        %v610 = vsel %vm596, %v587, 0
        %v613 = vsel %vm596, %v588, 0
        %v616 = vsel %vm596, %v589, 0
        %v619 = vsel %vm596, %v590, 0
        %621 = vmatpush.msra.mxu0 0.0
        %622 = vmatpush.msra.mxu0 0.0
        %623 = vmatpush.msra.mxu0 0.0
        %624 = vmatpush.msra.mxu0 0.0
        %625 = vmatpush.msra.mxu0 0.0
        %626 = vmatpush.msra.mxu0 0.0
        %627 = vmatpush.msra.mxu0 0.0
        %628 = vmatpush.msra.mxu0 0.0
        %629 = vmatpush.msra.mxu0 0.0
        %630 = vmatpush.msra.mxu0 0.0
        %631 = vmatpush.msra.mxu0 0.0
        %632 = vmatpush.msra.mxu0 0.0
        %633 = vmatpush.msra.mxu0 %v595
        %634 = vmatpush.msra.mxu0 %v594
        %635 = vmatpush.msra.mxu0 %v593
        %636 = vmatpush.msra.mxu0 %v592
        %637 = vmatmul.f32.gmra.mxu0 %v598
        %v638 = vpop.f32.mrf.mxu0
        %v639 = vadd.f32 0.0, %v638
        %640 = vmatmul.f32.gmra.mxu0 %v601
        %v641 = vpop.f32.mrf.mxu0
        %v642 = vadd.f32 0.0, %v641
        %643 = vmatmul.f32.gmra.mxu0 %v604
        %v644 = vpop.f32.mrf.mxu0
        %v645 = vadd.f32 0.0, %v644
        %646 = vmatmul.f32.gmra.mxu0 %v607
        %v647 = vpop.f32.mrf.mxu0
        %v648 = vadd.f32 0.0, %v647
        %649 = vmatmul.f32.gmra.mxu0 %v610
        %v650 = vpop.f32.mrf.mxu0
        %v651 = vadd.f32 0.0, %v650
        %652 = vmatmul.f32.gmra.mxu0 %v613
        %v653 = vpop.f32.mrf.mxu0
        %v654 = vadd.f32 0.0, %v653
        %655 = vmatmul.f32.gmra.mxu0 %v616
        %v656 = vpop.f32.mrf.mxu0
        %v657 = vadd.f32 0.0, %v656
        %658 = vmatmul.f32.gmra.mxu0 %v619
        %v659 = vpop.f32.mrf.mxu0
        %v660 = vadd.f32 0.0, %v659
        %661 = vdwg.mxu0
        %v663 = vsel %vm596, %v522, 0
        %v666 = vsel %vm596, %v523, 0
        %v669 = vsel %vm596, %v524, 0
        %v672 = vsel %vm596, %v525, 0
        %v675 = vsel %vm596, %v526, 0
        %v678 = vsel %vm596, %v527, 0
        %v681 = vsel %vm596, %v528, 0
        %v684 = vsel %vm596, %v529, 0
        %686 = vmatpush.msra.mxu0 0.0
        %687 = vmatpush.msra.mxu0 0.0
        %688 = vmatpush.msra.mxu0 0.0
        %689 = vmatpush.msra.mxu0 0.0
        %690 = vmatpush.msra.mxu0 0.0
        %691 = vmatpush.msra.mxu0 0.0
        %692 = vmatpush.msra.mxu0 0.0
        %693 = vmatpush.msra.mxu0 0.0
        %694 = vmatpush.msra.mxu0 0.0
        %695 = vmatpush.msra.mxu0 0.0
        %696 = vmatpush.msra.mxu0 0.0
        %697 = vmatpush.msra.mxu0 0.0
        %698 = vmatpush.msra.mxu0 %v533
        %699 = vmatpush.msra.mxu0 %v532
        %700 = vmatpush.msra.mxu0 %v531
        %701 = vmatpush.msra.mxu0 %v530
        %702 = vmatmul.f32.gmra.mxu0 %v663
        %v703 = vpop.f32.mrf.mxu0
        %v704 = vadd.f32 %v639, %v703
        %705 = vmatmul.f32.gmra.mxu0 %v666
        %v706 = vpop.f32.mrf.mxu0
        %v707 = vadd.f32 %v642, %v706
        %708 = vmatmul.f32.gmra.mxu0 %v669
        %v709 = vpop.f32.mrf.mxu0
        %v710 = vadd.f32 %v645, %v709
        %711 = vmatmul.f32.gmra.mxu0 %v672
        %v712 = vpop.f32.mrf.mxu0
        %v713 = vadd.f32 %v648, %v712
        %714 = vmatmul.f32.gmra.mxu0 %v675
        %v715 = vpop.f32.mrf.mxu0
        %v716 = vadd.f32 %v651, %v715
        %717 = vmatmul.f32.gmra.mxu0 %v678
        %v718 = vpop.f32.mrf.mxu0
        %v719 = vadd.f32 %v654, %v718
        %720 = vmatmul.f32.gmra.mxu0 %v681
        %v721 = vpop.f32.mrf.mxu0
        %v722 = vadd.f32 %v657, %v721
        %723 = vmatmul.f32.gmra.mxu0 %v684
        %v724 = vpop.f32.mrf.mxu0
        %v725 = vadd.f32 %v660, %v724
        %726 = vdwg.mxu0
        %v727 = vrot.slane %v445, 1
        %v728 = vrot.slane %v446, 1
        %v729 = vrot.slane %v447, 1
        %v730 = vrot.slane %v448, 1
        %v731 = vrot.slane %v449, 1
        %v732 = vrot.slane %v450, 1
        %v733 = vrot.slane %v451, 1
        %v734 = vrot.slane %v452, 1
        %vm735 = vcmp.lt.s32.totalorder %v464, 7
        %v736 = vsel %vm735, %v733, %v734
        %v737 = vsel %vm735, %v732, %v733
        %v738 = vsel %vm735, %v731, %v732
        %v739 = vsel %vm735, %v730, %v731
        %v740 = vsel %vm735, %v729, %v730
        %v741 = vsel %vm735, %v728, %v729
        %v742 = vsel %vm735, %v727, %v728
        %v743 = vsel %vm735, %v734, %v727
        %s744 = scalar_lea.vmem %s2, 128
        %v745 = vld [vmem:[%s744] sm:$0xff]
        %v746 = vld [vmem:[%s744 + $0x8] sm:$0xff]
        %v747 = vld [vmem:[%s744 + $0x10] sm:$0xff]
        %v748 = vld [vmem:[%s744 + $0x18] sm:$0xff]
        %v749 = vld [vmem:[%s744 + $0x20] sm:$0xff]
        %v750 = vld [vmem:[%s744 + $0x28] sm:$0xff]
        %v751 = vld [vmem:[%s744 + $0x30] sm:$0xff]
        %v752 = vld [vmem:[%s744 + $0x38] sm:$0xff]
        %754 = vset.pattern.permute.xlu0 0
        %755 = vperm.xlu0 %754, %v745
        %v756 = vpop.permute.xlu0 %755
        %759 = vset.pattern.permute.xlu0 0
        %760 = vperm.xlu0 %759, %v746
        %v761 = vpop.permute.xlu0 %760
        %764 = vset.pattern.permute.xlu0 0
        %765 = vperm.xlu0 %764, %v747
        %v766 = vpop.permute.xlu0 %765
        %769 = vset.pattern.permute.xlu0 0
        %770 = vperm.xlu0 %769, %v748
        %v771 = vpop.permute.xlu0 %770
        %774 = vset.pattern.permute.xlu0 0
        %775 = vperm.xlu0 %774, %v749
        %v776 = vpop.permute.xlu0 %775
        %779 = vset.pattern.permute.xlu0 0
        %780 = vperm.xlu0 %779, %v750
        %v781 = vpop.permute.xlu0 %780
        %784 = vset.pattern.permute.xlu0 0
        %785 = vperm.xlu0 %784, %v751
        %v786 = vpop.permute.xlu0 %785
        %789 = vset.pattern.permute.xlu0 0
        %790 = vperm.xlu0 %789, %v752
        %v791 = vpop.permute.xlu0 %790
        %v793 = vmul.f32 %v743, %v756
        %v794 = vmul.f32 %v742, %v761
        %v795 = vmul.f32 %v741, %v766
        %v796 = vmul.f32 %v740, %v771
        %v797 = vmul.f32 %v739, %v776
        %v798 = vmul.f32 %v738, %v781
        %v799 = vmul.f32 %v737, %v786
        %v800 = vmul.f32 %v736, %v791
        %s801 = scalar_lea.vmem [#allocation5], 64
        %v802 = vld [vmem:[%s801] sm:$0xff]
        %v803 = vld [vmem:[%s801 + $0x8] sm:$0xff]
        %v804 = vld [vmem:[%s801 + $0x10] sm:$0xff]
        %v805 = vld [vmem:[%s801 + $0x18] sm:$0xff]
        %v807 = vsel %vm596, %v793, 0
        %v810 = vsel %vm596, %v794, 0
        %v813 = vsel %vm596, %v795, 0
        %v816 = vsel %vm596, %v796, 0
        %v819 = vsel %vm596, %v797, 0
        %v822 = vsel %vm596, %v798, 0
        %v825 = vsel %vm596, %v799, 0
        %v828 = vsel %vm596, %v800, 0
        %830 = vmatpush.msra.mxu0 0.0
        %831 = vmatpush.msra.mxu0 0.0
        %832 = vmatpush.msra.mxu0 0.0
        %833 = vmatpush.msra.mxu0 0.0
        %834 = vmatpush.msra.mxu0 0.0
        %835 = vmatpush.msra.mxu0 0.0
        %836 = vmatpush.msra.mxu0 0.0
        %837 = vmatpush.msra.mxu0 0.0
        %838 = vmatpush.msra.mxu0 0.0
        %839 = vmatpush.msra.mxu0 0.0
        %840 = vmatpush.msra.mxu0 0.0
        %841 = vmatpush.msra.mxu0 0.0
        %842 = vmatpush.msra.mxu0 %v805
        %843 = vmatpush.msra.mxu0 %v804
        %844 = vmatpush.msra.mxu0 %v803
        %845 = vmatpush.msra.mxu0 %v802
        %846 = vmatmul.f32.gmra.mxu0 %v807
        %v847 = vpop.f32.mrf.mxu0
        %v848 = vadd.f32 0.0, %v847
        %849 = vmatmul.f32.gmra.mxu0 %v810
        %v850 = vpop.f32.mrf.mxu0
        %v851 = vadd.f32 0.0, %v850
        %852 = vmatmul.f32.gmra.mxu0 %v813
        %v853 = vpop.f32.mrf.mxu0
        %v854 = vadd.f32 0.0, %v853
        %855 = vmatmul.f32.gmra.mxu0 %v816
        %v856 = vpop.f32.mrf.mxu0
        %v857 = vadd.f32 0.0, %v856
        %858 = vmatmul.f32.gmra.mxu0 %v819
        %v859 = vpop.f32.mrf.mxu0
        %v860 = vadd.f32 0.0, %v859
        %861 = vmatmul.f32.gmra.mxu0 %v822
        %v862 = vpop.f32.mrf.mxu0
        %v863 = vadd.f32 0.0, %v862
        %864 = vmatmul.f32.gmra.mxu0 %v825
        %v865 = vpop.f32.mrf.mxu0
        %v866 = vadd.f32 0.0, %v865
        %867 = vmatmul.f32.gmra.mxu0 %v828
        %v868 = vpop.f32.mrf.mxu0
        %v869 = vadd.f32 0.0, %v868
        %870 = vdwg.mxu0
        %v871 = vadd.f32 %v704, %v848
        %v872 = vadd.f32 %v707, %v851
        %v873 = vadd.f32 %v710, %v854
        %v874 = vadd.f32 %v713, %v857
        %v875 = vadd.f32 %v716, %v860
        %v876 = vadd.f32 %v719, %v863
        %v877 = vadd.f32 %v722, %v866
        %v878 = vadd.f32 %v725, %v869
        %s879 = scalar_lea.vmem %s2, 192
        %v880 = vld [vmem:[%s879] sm:$0xff]
        %v881 = vld [vmem:[%s879 + $0x8] sm:$0xff]
        %v882 = vld [vmem:[%s879 + $0x10] sm:$0xff]
        %v883 = vld [vmem:[%s879 + $0x18] sm:$0xff]
        %v884 = vld [vmem:[%s879 + $0x20] sm:$0xff]
        %v885 = vld [vmem:[%s879 + $0x28] sm:$0xff]
        %v886 = vld [vmem:[%s879 + $0x30] sm:$0xff]
        %v887 = vld [vmem:[%s879 + $0x38] sm:$0xff]
        %889 = vset.pattern.permute.xlu0 0
        %890 = vperm.xlu0 %889, %v880
        %v891 = vpop.permute.xlu0 %890
        %894 = vset.pattern.permute.xlu0 0
        %895 = vperm.xlu0 %894, %v881
        %v896 = vpop.permute.xlu0 %895
        %899 = vset.pattern.permute.xlu0 0
        %900 = vperm.xlu0 %899, %v882
        %v901 = vpop.permute.xlu0 %900
        %904 = vset.pattern.permute.xlu0 0
        %905 = vperm.xlu0 %904, %v883
        %v906 = vpop.permute.xlu0 %905
        %909 = vset.pattern.permute.xlu0 0
        %910 = vperm.xlu0 %909, %v884
        %v911 = vpop.permute.xlu0 %910
        %914 = vset.pattern.permute.xlu0 0
        %915 = vperm.xlu0 %914, %v885
        %v916 = vpop.permute.xlu0 %915
        %919 = vset.pattern.permute.xlu0 0
        %920 = vperm.xlu0 %919, %v886
        %v921 = vpop.permute.xlu0 %920
        %924 = vset.pattern.permute.xlu0 0
        %925 = vperm.xlu0 %924, %v887
        %v926 = vpop.permute.xlu0 %925
        %v928 = vmul.f32 %v473, %v891
        %v929 = vmul.f32 %v472, %v896
        %v930 = vmul.f32 %v471, %v901
        %v931 = vmul.f32 %v470, %v906
        %v932 = vmul.f32 %v469, %v911
        %v933 = vmul.f32 %v468, %v916
        %v934 = vmul.f32 %v467, %v921
        %v935 = vmul.f32 %v466, %v926
        %s936 = scalar_lea.vmem [#allocation5], 96
        %v937 = vld [vmem:[%s936] sm:$0xff]
        %v938 = vld [vmem:[%s936 + $0x8] sm:$0xff]
        %v939 = vld [vmem:[%s936 + $0x10] sm:$0xff]
        %v940 = vld [vmem:[%s936 + $0x18] sm:$0xff]
        %v942 = vsel %vm596, %v928, 0
        %v945 = vsel %vm596, %v929, 0
        %v948 = vsel %vm596, %v930, 0
        %v951 = vsel %vm596, %v931, 0
        %v954 = vsel %vm596, %v932, 0
        %v957 = vsel %vm596, %v933, 0
        %v960 = vsel %vm596, %v934, 0
        %v963 = vsel %vm596, %v935, 0
        %965 = vmatpush.msra.mxu0 0.0
        %966 = vmatpush.msra.mxu0 0.0
        %967 = vmatpush.msra.mxu0 0.0
        %968 = vmatpush.msra.mxu0 0.0
        %969 = vmatpush.msra.mxu0 0.0
        %970 = vmatpush.msra.mxu0 0.0
        %971 = vmatpush.msra.mxu0 0.0
        %972 = vmatpush.msra.mxu0 0.0
        %973 = vmatpush.msra.mxu0 0.0
        %974 = vmatpush.msra.mxu0 0.0
        %975 = vmatpush.msra.mxu0 0.0
        %976 = vmatpush.msra.mxu0 0.0
        %977 = vmatpush.msra.mxu0 %v940
        %978 = vmatpush.msra.mxu0 %v939
        %979 = vmatpush.msra.mxu0 %v938
        %980 = vmatpush.msra.mxu0 %v937
        %981 = vmatmul.f32.gmra.mxu0 %v942
        %v982 = vpop.f32.mrf.mxu0
        %v983 = vadd.f32 0.0, %v982
        %984 = vmatmul.f32.gmra.mxu0 %v945
        %v985 = vpop.f32.mrf.mxu0
        %v986 = vadd.f32 0.0, %v985
        %987 = vmatmul.f32.gmra.mxu0 %v948
        %v988 = vpop.f32.mrf.mxu0
        %v989 = vadd.f32 0.0, %v988
        %990 = vmatmul.f32.gmra.mxu0 %v951
        %v991 = vpop.f32.mrf.mxu0
        %v992 = vadd.f32 0.0, %v991
        %993 = vmatmul.f32.gmra.mxu0 %v954
        %v994 = vpop.f32.mrf.mxu0
        %v995 = vadd.f32 0.0, %v994
        %996 = vmatmul.f32.gmra.mxu0 %v957
        %v997 = vpop.f32.mrf.mxu0
        %v998 = vadd.f32 0.0, %v997
        %999 = vmatmul.f32.gmra.mxu0 %v960
        %v1000 = vpop.f32.mrf.mxu0
        %v1001 = vadd.f32 0.0, %v1000
        %1002 = vmatmul.f32.gmra.mxu0 %v963
        %v1003 = vpop.f32.mrf.mxu0
        %v1004 = vadd.f32 0.0, %v1003
        %1005 = vdwg.mxu0
        %v1006 = vadd.f32 %v871, %v983
        %v1007 = vadd.f32 %v872, %v986
        %v1008 = vadd.f32 %v873, %v989
        %v1009 = vadd.f32 %v874, %v992
        %v1010 = vadd.f32 %v875, %v995
        %v1011 = vadd.f32 %v876, %v998
        %v1012 = vadd.f32 %v877, %v1001
        %v1013 = vadd.f32 %v878, %v1004
        %s1014 = scalar_lea.vmem [#allocation5], 128
        %v1015 = vld [vmem:[%s1014] sm:$0xff]
        %v1016 = vld [vmem:[%s1014 + $0x8] sm:$0xff]
        %v1017 = vld [vmem:[%s1014 + $0x10] sm:$0xff]
        %v1018 = vld [vmem:[%s1014 + $0x18] sm:$0xff]
        %v1020 = vsel %vm596, %v445, 0
        %v1023 = vsel %vm596, %v446, 0
        %v1026 = vsel %vm596, %v447, 0
        %v1029 = vsel %vm596, %v448, 0
        %v1032 = vsel %vm596, %v449, 0
        %v1035 = vsel %vm596, %v450, 0
        %v1038 = vsel %vm596, %v451, 0
        %v1041 = vsel %vm596, %v452, 0
        %1043 = vmatpush.msra.mxu0 0.0
        %1044 = vmatpush.msra.mxu0 0.0
        %1045 = vmatpush.msra.mxu0 0.0
        %1046 = vmatpush.msra.mxu0 0.0
        %1047 = vmatpush.msra.mxu0 0.0
        %1048 = vmatpush.msra.mxu0 0.0
        %1049 = vmatpush.msra.mxu0 0.0
        %1050 = vmatpush.msra.mxu0 0.0
        %1051 = vmatpush.msra.mxu0 0.0
        %1052 = vmatpush.msra.mxu0 0.0
        %1053 = vmatpush.msra.mxu0 0.0
        %1054 = vmatpush.msra.mxu0 0.0
        %1055 = vmatpush.msra.mxu0 %v1018
        %1056 = vmatpush.msra.mxu0 %v1017
        %1057 = vmatpush.msra.mxu0 %v1016
        %1058 = vmatpush.msra.mxu0 %v1015
        %1059 = vmatmul.f32.gmra.mxu0 %v1020
        %v1060 = vpop.f32.mrf.mxu0
        %v1061 = vadd.f32 0.0, %v1060
        %1062 = vmatmul.f32.gmra.mxu0 %v1023
        %v1063 = vpop.f32.mrf.mxu0
        %v1064 = vadd.f32 0.0, %v1063
        %1065 = vmatmul.f32.gmra.mxu0 %v1026
        %v1066 = vpop.f32.mrf.mxu0
        %v1067 = vadd.f32 0.0, %v1066
        %1068 = vmatmul.f32.gmra.mxu0 %v1029
        %v1069 = vpop.f32.mrf.mxu0
        %v1070 = vadd.f32 0.0, %v1069
        %1071 = vmatmul.f32.gmra.mxu0 %v1032
        %v1072 = vpop.f32.mrf.mxu0
        %v1073 = vadd.f32 0.0, %v1072
        %1074 = vmatmul.f32.gmra.mxu0 %v1035
        %v1075 = vpop.f32.mrf.mxu0
        %v1076 = vadd.f32 0.0, %v1075
        %1077 = vmatmul.f32.gmra.mxu0 %v1038
        %v1078 = vpop.f32.mrf.mxu0
        %v1079 = vadd.f32 0.0, %v1078
        %1080 = vmatmul.f32.gmra.mxu0 %v1041
        %v1081 = vpop.f32.mrf.mxu0
        %v1082 = vadd.f32 0.0, %v1081
        %1083 = vdwg.mxu0
        %v1084 = vadd.f32 %v1006, %v1061
        %v1085 = vadd.f32 %v1007, %v1064
        %v1086 = vadd.f32 %v1008, %v1067
        %v1087 = vadd.f32 %v1009, %v1070
        %v1088 = vadd.f32 %v1010, %v1073
        %v1089 = vadd.f32 %v1011, %v1076
        %v1090 = vadd.f32 %v1012, %v1079
        %v1091 = vadd.f32 %v1013, %v1082
        %s1092 = scalar_lea.vmem %s2, 320
        %v1093 = vld [vmem:[%s1092] sm:$0xff]
        %v1094 = vld [vmem:[%s1092 + $0x8] sm:$0xff]
        %v1095 = vld [vmem:[%s1092 + $0x10] sm:$0xff]
        %v1096 = vld [vmem:[%s1092 + $0x18] sm:$0xff]
        %v1097 = vld [vmem:[%s1092 + $0x20] sm:$0xff]
        %v1098 = vld [vmem:[%s1092 + $0x28] sm:$0xff]
        %v1099 = vld [vmem:[%s1092 + $0x30] sm:$0xff]
        %v1100 = vld [vmem:[%s1092 + $0x38] sm:$0xff]
        %1102 = vset.pattern.permute.xlu0 0
        %1103 = vperm.xlu0 %1102, %v1093
        %v1104 = vpop.permute.xlu0 %1103
        %1107 = vset.pattern.permute.xlu0 0
        %1108 = vperm.xlu0 %1107, %v1094
        %v1109 = vpop.permute.xlu0 %1108
        %1112 = vset.pattern.permute.xlu0 0
        %1113 = vperm.xlu0 %1112, %v1095
        %v1114 = vpop.permute.xlu0 %1113
        %1117 = vset.pattern.permute.xlu0 0
        %1118 = vperm.xlu0 %1117, %v1096
        %v1119 = vpop.permute.xlu0 %1118
        %1122 = vset.pattern.permute.xlu0 0
        %1123 = vperm.xlu0 %1122, %v1097
        %v1124 = vpop.permute.xlu0 %1123
        %1127 = vset.pattern.permute.xlu0 0
        %1128 = vperm.xlu0 %1127, %v1098
        %v1129 = vpop.permute.xlu0 %1128
        %1132 = vset.pattern.permute.xlu0 0
        %1133 = vperm.xlu0 %1132, %v1099
        %v1134 = vpop.permute.xlu0 %1133
        %1137 = vset.pattern.permute.xlu0 0
        %1138 = vperm.xlu0 %1137, %v1100
        %v1139 = vpop.permute.xlu0 %1138
        %v1141 = vmul.f32 %v742, %v1104
        %v1142 = vmul.f32 %v741, %v1109
        %v1143 = vmul.f32 %v740, %v1114
        %v1144 = vmul.f32 %v739, %v1119
        %v1145 = vmul.f32 %v738, %v1124
        %v1146 = vmul.f32 %v737, %v1129
        %v1147 = vmul.f32 %v736, %v1134
        %v1148 = vmul.f32 %v743, %v1139
        %s1149 = scalar_lea.vmem [#allocation5], 160
        %v1150 = vld [vmem:[%s1149] sm:$0xff]
        %v1151 = vld [vmem:[%s1149 + $0x8] sm:$0xff]
        %v1152 = vld [vmem:[%s1149 + $0x10] sm:$0xff]
        %v1153 = vld [vmem:[%s1149 + $0x18] sm:$0xff]
        %v1155 = vsel %vm596, %v1141, 0
        %v1158 = vsel %vm596, %v1142, 0
        %v1161 = vsel %vm596, %v1143, 0
        %v1164 = vsel %vm596, %v1144, 0
        %v1167 = vsel %vm596, %v1145, 0
        %v1170 = vsel %vm596, %v1146, 0
        %v1173 = vsel %vm596, %v1147, 0
        %v1176 = vsel %vm596, %v1148, 0
        %1178 = vmatpush.msra.mxu0 0.0
        %1179 = vmatpush.msra.mxu0 0.0
        %1180 = vmatpush.msra.mxu0 0.0
        %1181 = vmatpush.msra.mxu0 0.0
        %1182 = vmatpush.msra.mxu0 0.0
        %1183 = vmatpush.msra.mxu0 0.0
        %1184 = vmatpush.msra.mxu0 0.0
        %1185 = vmatpush.msra.mxu0 0.0
        %1186 = vmatpush.msra.mxu0 0.0
        %1187 = vmatpush.msra.mxu0 0.0
        %1188 = vmatpush.msra.mxu0 0.0
        %1189 = vmatpush.msra.mxu0 0.0
        %1190 = vmatpush.msra.mxu0 %v1153
        %1191 = vmatpush.msra.mxu0 %v1152
        %1192 = vmatpush.msra.mxu0 %v1151
        %1193 = vmatpush.msra.mxu0 %v1150
        %1194 = vmatmul.f32.gmra.mxu0 %v1155
        %v1195 = vpop.f32.mrf.mxu0
        %v1196 = vadd.f32 0.0, %v1195
        %1197 = vmatmul.f32.gmra.mxu0 %v1158
        %v1198 = vpop.f32.mrf.mxu0
        %v1199 = vadd.f32 0.0, %v1198
        %1200 = vmatmul.f32.gmra.mxu0 %v1161
        %v1201 = vpop.f32.mrf.mxu0
        %v1202 = vadd.f32 0.0, %v1201
        %1203 = vmatmul.f32.gmra.mxu0 %v1164
        %v1204 = vpop.f32.mrf.mxu0
        %v1205 = vadd.f32 0.0, %v1204
        %1206 = vmatmul.f32.gmra.mxu0 %v1167
        %v1207 = vpop.f32.mrf.mxu0
        %v1208 = vadd.f32 0.0, %v1207
        %1209 = vmatmul.f32.gmra.mxu0 %v1170
        %v1210 = vpop.f32.mrf.mxu0
        %v1211 = vadd.f32 0.0, %v1210
        %1212 = vmatmul.f32.gmra.mxu0 %v1173
        %v1213 = vpop.f32.mrf.mxu0
        %v1214 = vadd.f32 0.0, %v1213
        %1215 = vmatmul.f32.gmra.mxu0 %v1176
        %v1216 = vpop.f32.mrf.mxu0
        %v1217 = vadd.f32 0.0, %v1216
        %1218 = vdwg.mxu0
        %v1219 = vadd.f32 %v1084, %v1196
        %v1220 = vadd.f32 %v1085, %v1199
        %v1221 = vadd.f32 %v1086, %v1202
        %v1222 = vadd.f32 %v1087, %v1205
        %v1223 = vadd.f32 %v1088, %v1208
        %v1224 = vadd.f32 %v1089, %v1211
        %v1225 = vadd.f32 %v1090, %v1214
        %v1226 = vadd.f32 %v1091, %v1217
        %s1227 = scalar_lea.vmem %s2, 384
        %v1228 = vld [vmem:[%s1227] sm:$0xff]
        %v1229 = vld [vmem:[%s1227 + $0x8] sm:$0xff]
        %v1230 = vld [vmem:[%s1227 + $0x10] sm:$0xff]
        %v1231 = vld [vmem:[%s1227 + $0x18] sm:$0xff]
        %v1232 = vld [vmem:[%s1227 + $0x20] sm:$0xff]
        %v1233 = vld [vmem:[%s1227 + $0x28] sm:$0xff]
        %v1234 = vld [vmem:[%s1227 + $0x30] sm:$0xff]
        %v1235 = vld [vmem:[%s1227 + $0x38] sm:$0xff]
        %1237 = vset.pattern.permute.xlu0 0
        %1238 = vperm.xlu0 %1237, %v1228
        %v1239 = vpop.permute.xlu0 %1238
        %1242 = vset.pattern.permute.xlu0 0
        %1243 = vperm.xlu0 %1242, %v1229
        %v1244 = vpop.permute.xlu0 %1243
        %1247 = vset.pattern.permute.xlu0 0
        %1248 = vperm.xlu0 %1247, %v1230
        %v1249 = vpop.permute.xlu0 %1248
        %1252 = vset.pattern.permute.xlu0 0
        %1253 = vperm.xlu0 %1252, %v1231
        %v1254 = vpop.permute.xlu0 %1253
        %1257 = vset.pattern.permute.xlu0 0
        %1258 = vperm.xlu0 %1257, %v1232
        %v1259 = vpop.permute.xlu0 %1258
        %1262 = vset.pattern.permute.xlu0 0
        %1263 = vperm.xlu0 %1262, %v1233
        %v1264 = vpop.permute.xlu0 %1263
        %1267 = vset.pattern.permute.xlu0 0
        %1268 = vperm.xlu0 %1267, %v1234
        %v1269 = vpop.permute.xlu0 %1268
        %1272 = vset.pattern.permute.xlu0 0
        %1273 = vperm.xlu0 %1272, %v1235
        %v1274 = vpop.permute.xlu0 %1273
        %v1276 = vmul.f32 %v472, %v1239
        %v1277 = vmul.f32 %v471, %v1244
        %v1278 = vmul.f32 %v470, %v1249
        %v1279 = vmul.f32 %v469, %v1254
        %v1280 = vmul.f32 %v468, %v1259
        %v1281 = vmul.f32 %v467, %v1264
        %v1282 = vmul.f32 %v466, %v1269
        %v1283 = vmul.f32 %v473, %v1274
        %s1284 = scalar_lea.vmem [#allocation5], 192
        %v1285 = vld [vmem:[%s1284] sm:$0xff]
        %v1286 = vld [vmem:[%s1284 + $0x8] sm:$0xff]
        %v1287 = vld [vmem:[%s1284 + $0x10] sm:$0xff]
        %v1288 = vld [vmem:[%s1284 + $0x18] sm:$0xff]
        %v1290 = vsel %vm596, %v1276, 0
        %v1293 = vsel %vm596, %v1277, 0
        %v1296 = vsel %vm596, %v1278, 0
        %v1299 = vsel %vm596, %v1279, 0
        %v1302 = vsel %vm596, %v1280, 0
        %v1305 = vsel %vm596, %v1281, 0
        %v1308 = vsel %vm596, %v1282, 0
        %v1311 = vsel %vm596, %v1283, 0
        %1313 = vmatpush.msra.mxu0 0.0
        %1314 = vmatpush.msra.mxu0 0.0
        %1315 = vmatpush.msra.mxu0 0.0
        %1316 = vmatpush.msra.mxu0 0.0
        %1317 = vmatpush.msra.mxu0 0.0
        %1318 = vmatpush.msra.mxu0 0.0
        %1319 = vmatpush.msra.mxu0 0.0
        %1320 = vmatpush.msra.mxu0 0.0
        %1321 = vmatpush.msra.mxu0 0.0
        %1322 = vmatpush.msra.mxu0 0.0
        %1323 = vmatpush.msra.mxu0 0.0
        %1324 = vmatpush.msra.mxu0 0.0
        %1325 = vmatpush.msra.mxu0 %v1288
        %1326 = vmatpush.msra.mxu0 %v1287
        %1327 = vmatpush.msra.mxu0 %v1286
        %1328 = vmatpush.msra.mxu0 %v1285
        %1329 = vmatmul.f32.gmra.mxu0 %v1290
        %v1330 = vpop.f32.mrf.mxu0
        %v1331 = vadd.f32 0.0, %v1330
        %1332 = vmatmul.f32.gmra.mxu0 %v1293
        %v1333 = vpop.f32.mrf.mxu0
        %v1334 = vadd.f32 0.0, %v1333
        %1335 = vmatmul.f32.gmra.mxu0 %v1296
        %v1336 = vpop.f32.mrf.mxu0
        %v1337 = vadd.f32 0.0, %v1336
        %1338 = vmatmul.f32.gmra.mxu0 %v1299
        %v1339 = vpop.f32.mrf.mxu0
        %v1340 = vadd.f32 0.0, %v1339
        %1341 = vmatmul.f32.gmra.mxu0 %v1302
        %v1342 = vpop.f32.mrf.mxu0
        %v1343 = vadd.f32 0.0, %v1342
        %1344 = vmatmul.f32.gmra.mxu0 %v1305
        %v1345 = vpop.f32.mrf.mxu0
        %v1346 = vadd.f32 0.0, %v1345
        %1347 = vmatmul.f32.gmra.mxu0 %v1308
        %v1348 = vpop.f32.mrf.mxu0
        %v1349 = vadd.f32 0.0, %v1348
        %1350 = vmatmul.f32.gmra.mxu0 %v1311
        %v1351 = vpop.f32.mrf.mxu0
        %v1352 = vadd.f32 0.0, %v1351
        %1353 = vdwg.mxu0
        %v1354 = vadd.f32 %v1219, %v1331
        %v1355 = vadd.f32 %v1220, %v1334
        %v1356 = vadd.f32 %v1221, %v1337
        %v1357 = vadd.f32 %v1222, %v1340
        %v1358 = vadd.f32 %v1223, %v1343
        %v1359 = vadd.f32 %v1224, %v1346
        %v1360 = vadd.f32 %v1225, %v1349
        %v1361 = vadd.f32 %v1226, %v1352
        %s1362 = scalar_lea.vmem %s2, 448
        %v1363 = vld [vmem:[%s1362] sm:$0xff]
        %v1364 = vld [vmem:[%s1362 + $0x8] sm:$0xff]
        %v1365 = vld [vmem:[%s1362 + $0x10] sm:$0xff]
        %v1366 = vld [vmem:[%s1362 + $0x18] sm:$0xff]
        %v1367 = vld [vmem:[%s1362 + $0x20] sm:$0xff]
        %v1368 = vld [vmem:[%s1362 + $0x28] sm:$0xff]
        %v1369 = vld [vmem:[%s1362 + $0x30] sm:$0xff]
        %v1370 = vld [vmem:[%s1362 + $0x38] sm:$0xff]
        %1372 = vset.pattern.permute.xlu0 0
        %1373 = vperm.xlu0 %1372, %v1363
        %v1374 = vpop.permute.xlu0 %1373
        %1377 = vset.pattern.permute.xlu0 0
        %1378 = vperm.xlu0 %1377, %v1364
        %v1379 = vpop.permute.xlu0 %1378
        %1382 = vset.pattern.permute.xlu0 0
        %1383 = vperm.xlu0 %1382, %v1365
        %v1384 = vpop.permute.xlu0 %1383
        %1387 = vset.pattern.permute.xlu0 0
        %1388 = vperm.xlu0 %1387, %v1366
        %v1389 = vpop.permute.xlu0 %1388
        %1392 = vset.pattern.permute.xlu0 0
        %1393 = vperm.xlu0 %1392, %v1367
        %v1394 = vpop.permute.xlu0 %1393
        %1397 = vset.pattern.permute.xlu0 0
        %1398 = vperm.xlu0 %1397, %v1368
        %v1399 = vpop.permute.xlu0 %1398
        %1402 = vset.pattern.permute.xlu0 0
        %1403 = vperm.xlu0 %1402, %v1369
        %v1404 = vpop.permute.xlu0 %1403
        %1407 = vset.pattern.permute.xlu0 0
        %1408 = vperm.xlu0 %1407, %v1370
        %v1409 = vpop.permute.xlu0 %1408
        %v1411 = vmul.f32 %v446, %v1374
        %v1412 = vmul.f32 %v447, %v1379
        %v1413 = vmul.f32 %v448, %v1384
        %v1414 = vmul.f32 %v449, %v1389
        %v1415 = vmul.f32 %v450, %v1394
        %v1416 = vmul.f32 %v451, %v1399
        %v1417 = vmul.f32 %v452, %v1404
        %v1418 = vmul.f32 %v445, %v1409
        %s1419 = scalar_lea.vmem [#allocation5], 224
        %v1420 = vld [vmem:[%s1419] sm:$0xff]
        %v1421 = vld [vmem:[%s1419 + $0x8] sm:$0xff]
        %v1422 = vld [vmem:[%s1419 + $0x10] sm:$0xff]
        %v1423 = vld [vmem:[%s1419 + $0x18] sm:$0xff]
        %v1425 = vsel %vm596, %v1411, 0
        %v1428 = vsel %vm596, %v1412, 0
        %v1431 = vsel %vm596, %v1413, 0
        %v1434 = vsel %vm596, %v1414, 0
        %v1437 = vsel %vm596, %v1415, 0
        %v1440 = vsel %vm596, %v1416, 0
        %v1443 = vsel %vm596, %v1417, 0
        %v1446 = vsel %vm596, %v1418, 0
        %1448 = vmatpush.msra.mxu0 0.0
        %1449 = vmatpush.msra.mxu0 0.0
        %1450 = vmatpush.msra.mxu0 0.0
        %1451 = vmatpush.msra.mxu0 0.0
        %1452 = vmatpush.msra.mxu0 0.0
        %1453 = vmatpush.msra.mxu0 0.0
        %1454 = vmatpush.msra.mxu0 0.0
        %1455 = vmatpush.msra.mxu0 0.0
        %1456 = vmatpush.msra.mxu0 0.0
        %1457 = vmatpush.msra.mxu0 0.0
        %1458 = vmatpush.msra.mxu0 0.0
        %1459 = vmatpush.msra.mxu0 0.0
        %1460 = vmatpush.msra.mxu0 %v1423
        %1461 = vmatpush.msra.mxu0 %v1422
        %1462 = vmatpush.msra.mxu0 %v1421
        %1463 = vmatpush.msra.mxu0 %v1420
        %1464 = vmatmul.f32.gmra.mxu0 %v1425
        %v1465 = vpop.f32.mrf.mxu0
        %v1466 = vadd.f32 0.0, %v1465
        %1467 = vmatmul.f32.gmra.mxu0 %v1428
        %v1468 = vpop.f32.mrf.mxu0
        %v1469 = vadd.f32 0.0, %v1468
        %1470 = vmatmul.f32.gmra.mxu0 %v1431
        %v1471 = vpop.f32.mrf.mxu0
        %v1472 = vadd.f32 0.0, %v1471
        %1473 = vmatmul.f32.gmra.mxu0 %v1434
        %v1474 = vpop.f32.mrf.mxu0
        %v1475 = vadd.f32 0.0, %v1474
        %1476 = vmatmul.f32.gmra.mxu0 %v1437
        %v1477 = vpop.f32.mrf.mxu0
        %v1478 = vadd.f32 0.0, %v1477
        %1479 = vmatmul.f32.gmra.mxu0 %v1440
        %v1480 = vpop.f32.mrf.mxu0
        %v1481 = vadd.f32 0.0, %v1480
        %1482 = vmatmul.f32.gmra.mxu0 %v1443
        %v1483 = vpop.f32.mrf.mxu0
        %v1484 = vadd.f32 0.0, %v1483
        %1485 = vmatmul.f32.gmra.mxu0 %v1446
        %v1486 = vpop.f32.mrf.mxu0
        %v1487 = vadd.f32 0.0, %v1486
        %1488 = vdwg.mxu0
        %v1489 = vadd.f32 %v1354, %v1466
        %v1490 = vadd.f32 %v1355, %v1469
        %v1491 = vadd.f32 %v1356, %v1472
        %v1492 = vadd.f32 %v1357, %v1475
        %v1493 = vadd.f32 %v1358, %v1478
        %v1494 = vadd.f32 %v1359, %v1481
        %v1495 = vadd.f32 %v1360, %v1484
        %v1496 = vadd.f32 %v1361, %v1487
        %s1497 = scalar_lea.vmem %s2, 512
        %v1498 = vld [vmem:[%s1497] sm:$0xff]
        %v1499 = vld [vmem:[%s1497 + $0x8] sm:$0xff]
        %v1500 = vld [vmem:[%s1497 + $0x10] sm:$0xff]
        %v1501 = vld [vmem:[%s1497 + $0x18] sm:$0xff]
        %v1502 = vld [vmem:[%s1497 + $0x20] sm:$0xff]
        %v1503 = vld [vmem:[%s1497 + $0x28] sm:$0xff]
        %v1504 = vld [vmem:[%s1497 + $0x30] sm:$0xff]
        %v1505 = vld [vmem:[%s1497 + $0x38] sm:$0xff]
        %1507 = vset.pattern.permute.xlu0 0
        %1508 = vperm.xlu0 %1507, %v1498
        %v1509 = vpop.permute.xlu0 %1508
        %1512 = vset.pattern.permute.xlu0 0
        %1513 = vperm.xlu0 %1512, %v1499
        %v1514 = vpop.permute.xlu0 %1513
        %1517 = vset.pattern.permute.xlu0 0
        %1518 = vperm.xlu0 %1517, %v1500
        %v1519 = vpop.permute.xlu0 %1518
        %1522 = vset.pattern.permute.xlu0 0
        %1523 = vperm.xlu0 %1522, %v1501
        %v1524 = vpop.permute.xlu0 %1523
        %1527 = vset.pattern.permute.xlu0 0
        %1528 = vperm.xlu0 %1527, %v1502
        %v1529 = vpop.permute.xlu0 %1528
        %1532 = vset.pattern.permute.xlu0 0
        %1533 = vperm.xlu0 %1532, %v1503
        %v1534 = vpop.permute.xlu0 %1533
        %1537 = vset.pattern.permute.xlu0 0
        %1538 = vperm.xlu0 %1537, %v1504
        %v1539 = vpop.permute.xlu0 %1538
        %1542 = vset.pattern.permute.xlu0 0
        %1543 = vperm.xlu0 %1542, %v1505
        %v1544 = vpop.permute.xlu0 %1543
        %v1546 = vmul.f32 %v741, %v1509
        %v1547 = vmul.f32 %v740, %v1514
        %v1548 = vmul.f32 %v739, %v1519
        %v1549 = vmul.f32 %v738, %v1524
        %v1550 = vmul.f32 %v737, %v1529
        %v1551 = vmul.f32 %v736, %v1534
        %v1552 = vmul.f32 %v743, %v1539
        %v1553 = vmul.f32 %v742, %v1544
        %s1554 = scalar_lea.vmem [#allocation5], 256
        %v1555 = vld [vmem:[%s1554] sm:$0xff]
        %v1556 = vld [vmem:[%s1554 + $0x8] sm:$0xff]
        %v1557 = vld [vmem:[%s1554 + $0x10] sm:$0xff]
        %v1558 = vld [vmem:[%s1554 + $0x18] sm:$0xff]
        %v1560 = vsel %vm596, %v1546, 0
        %v1563 = vsel %vm596, %v1547, 0
        %v1566 = vsel %vm596, %v1548, 0
        %v1569 = vsel %vm596, %v1549, 0
        %v1572 = vsel %vm596, %v1550, 0
        %v1575 = vsel %vm596, %v1551, 0
        %v1578 = vsel %vm596, %v1552, 0
        %v1581 = vsel %vm596, %v1553, 0
        %1583 = vmatpush.msra.mxu0 0.0
        %1584 = vmatpush.msra.mxu0 0.0
        %1585 = vmatpush.msra.mxu0 0.0
        %1586 = vmatpush.msra.mxu0 0.0
        %1587 = vmatpush.msra.mxu0 0.0
        %1588 = vmatpush.msra.mxu0 0.0
        %1589 = vmatpush.msra.mxu0 0.0
        %1590 = vmatpush.msra.mxu0 0.0
        %1591 = vmatpush.msra.mxu0 0.0
        %1592 = vmatpush.msra.mxu0 0.0
        %1593 = vmatpush.msra.mxu0 0.0
        %1594 = vmatpush.msra.mxu0 0.0
        %1595 = vmatpush.msra.mxu0 %v1558
        %1596 = vmatpush.msra.mxu0 %v1557
        %1597 = vmatpush.msra.mxu0 %v1556
        %1598 = vmatpush.msra.mxu0 %v1555
        %1599 = vmatmul.f32.gmra.mxu0 %v1560
        %v1600 = vpop.f32.mrf.mxu0
        %v1601 = vadd.f32 0.0, %v1600
        %1602 = vmatmul.f32.gmra.mxu0 %v1563
        %v1603 = vpop.f32.mrf.mxu0
        %v1604 = vadd.f32 0.0, %v1603
        %1605 = vmatmul.f32.gmra.mxu0 %v1566
        %v1606 = vpop.f32.mrf.mxu0
        %v1607 = vadd.f32 0.0, %v1606
        %1608 = vmatmul.f32.gmra.mxu0 %v1569
        %v1609 = vpop.f32.mrf.mxu0
        %v1610 = vadd.f32 0.0, %v1609
        %1611 = vmatmul.f32.gmra.mxu0 %v1572
        %v1612 = vpop.f32.mrf.mxu0
        %v1613 = vadd.f32 0.0, %v1612
        %1614 = vmatmul.f32.gmra.mxu0 %v1575
        %v1615 = vpop.f32.mrf.mxu0
        %v1616 = vadd.f32 0.0, %v1615
        %1617 = vmatmul.f32.gmra.mxu0 %v1578
        %v1618 = vpop.f32.mrf.mxu0
        %v1619 = vadd.f32 0.0, %v1618
        %1620 = vmatmul.f32.gmra.mxu0 %v1581
        %v1621 = vpop.f32.mrf.mxu0
        %v1622 = vadd.f32 0.0, %v1621
        %1623 = vdwg.mxu0
        %v1624 = vadd.f32 %v1489, %v1601
        %v1625 = vadd.f32 %v1490, %v1604
        %v1626 = vadd.f32 %v1491, %v1607
        %v1627 = vadd.f32 %v1492, %v1610
        %v1628 = vadd.f32 %v1493, %v1613
        %v1629 = vadd.f32 %v1494, %v1616
        %v1630 = vadd.f32 %v1495, %v1619
        %v1631 = vadd.f32 %v1496, %v1622
        %v1632 = vld [vmem:[%s4] sm:$0x1]
        %v1634 = vperm.slane %v1632, 0
        %v1636 = vmul.f32 %v1624, %v1634
        %v1637 = vmul.f32 %v1625, %v1634
        %v1638 = vmul.f32 %v1626, %v1634
        %v1639 = vmul.f32 %v1627, %v1634
        %v1640 = vmul.f32 %v1628, %v1634
        %v1641 = vmul.f32 %v1629, %v1634
        %v1642 = vmul.f32 %v1630, %v1634
        %v1643 = vmul.f32 %v1631, %v1634
        %v1644 = vld [vmem:[%s5] sm:$0x1]
        %v1646 = vperm.slane %v1644, 0
        %v1648 = vadd.f32 %v1636, %v1646
        %v1649 = vadd.f32 %v1637, %v1646
        %v1650 = vadd.f32 %v1638, %v1646
        %v1651 = vadd.f32 %v1639, %v1646
        %v1652 = vadd.f32 %v1640, %v1646
        %v1653 = vadd.f32 %v1641, %v1646
        %v1654 = vadd.f32 %v1642, %v1646
        %v1655 = vadd.f32 %v1643, %v1646
        %v1656 = vmax.f32 %v1648, 0.0
        %v1657 = vmax.f32 %v1649, 0.0
        %v1658 = vmax.f32 %v1650, 0.0
        %v1659 = vmax.f32 %v1651, 0.0
        %v1660 = vmax.f32 %v1652, 0.0
        %v1661 = vmax.f32 %v1653, 0.0
        %v1662 = vmax.f32 %v1654, 0.0
        %v1663 = vmax.f32 %v1655, 0.0
        %v1664 = vld [vmem:[%s6] sm:$0xff]
        %v1665 = vld [vmem:[%s6 + $0x8] sm:$0xff]
        %v1666 = vld [vmem:[%s6 + $0x10] sm:$0xff]
        %v1667 = vld [vmem:[%s6 + $0x18] sm:$0xff]
        %v1668 = vld [vmem:[%s7] sm:$0x1]
        %v1670 = vperm.slane %v1668, 0
        %v1673 = vsel %vm596, %v1656, 0
        %v1676 = vsel %vm596, %v1657, 0
        %v1679 = vsel %vm596, %v1658, 0
        %v1682 = vsel %vm596, %v1659, 0
        %v1685 = vsel %vm596, %v1660, 0
        %v1688 = vsel %vm596, %v1661, 0
        %v1691 = vsel %vm596, %v1662, 0
        %v1694 = vsel %vm596, %v1663, 0
        %1696 = vmatpush.msra.mxu0 0.0
        %1697 = vmatpush.msra.mxu0 0.0
        %1698 = vmatpush.msra.mxu0 0.0
        %1699 = vmatpush.msra.mxu0 0.0
        %1700 = vmatpush.msra.mxu0 0.0
        %1701 = vmatpush.msra.mxu0 0.0
        %1702 = vmatpush.msra.mxu0 0.0
        %1703 = vmatpush.msra.mxu0 0.0
        %1704 = vmatpush.msra.mxu0 0.0
        %1705 = vmatpush.msra.mxu0 0.0
        %1706 = vmatpush.msra.mxu0 0.0
        %1707 = vmatpush.msra.mxu0 0.0
        %1708 = vmatpush.msra.mxu0 %v1667
        %1709 = vmatpush.msra.mxu0 %v1666
        %1710 = vmatpush.msra.mxu0 %v1665
        %1711 = vmatpush.msra.mxu0 %v1664
        %1712 = vmatmul.f32.gmra.mxu0 %v1673
        %v1713 = vpop.f32.mrf.mxu0
        %v1714 = vadd.f32 %v1670, %v1713
        %1715 = vmatmul.f32.gmra.mxu0 %v1676
        %v1716 = vpop.f32.mrf.mxu0
        %v1717 = vadd.f32 %v1670, %v1716
        %1718 = vmatmul.f32.gmra.mxu0 %v1679
        %v1719 = vpop.f32.mrf.mxu0
        %v1720 = vadd.f32 %v1670, %v1719
        %1721 = vmatmul.f32.gmra.mxu0 %v1682
        %v1722 = vpop.f32.mrf.mxu0
        %v1723 = vadd.f32 %v1670, %v1722
        %1724 = vmatmul.f32.gmra.mxu0 %v1685
        %v1725 = vpop.f32.mrf.mxu0
        %v1726 = vadd.f32 %v1670, %v1725
        %1727 = vmatmul.f32.gmra.mxu0 %v1688
        %v1728 = vpop.f32.mrf.mxu0
        %v1729 = vadd.f32 %v1670, %v1728
        %1730 = vmatmul.f32.gmra.mxu0 %v1691
        %v1731 = vpop.f32.mrf.mxu0
        %v1732 = vadd.f32 %v1670, %v1731
        %1733 = vmatmul.f32.gmra.mxu0 %v1694
        %v1734 = vpop.f32.mrf.mxu0
        %v1735 = vadd.f32 %v1670, %v1734
        %1736 = vdwg.mxu0
        %v1737 = vld [vmem:[%s8] sm:$0xff]
        %v1738 = vld [vmem:[%s8 + $0x8] sm:$0xff]
        %v1739 = vld [vmem:[%s8 + $0x10] sm:$0xff]
        %v1740 = vld [vmem:[%s8 + $0x18] sm:$0xff]
        %v1741 = vld [vmem:[%s9] sm:$0x1]
        %v1743 = vperm.slane %v1741, 0
        %1745 = vmatpush.msra.mxu0 0.0
        %1746 = vmatpush.msra.mxu0 0.0
        %1747 = vmatpush.msra.mxu0 0.0
        %1748 = vmatpush.msra.mxu0 0.0
        %1749 = vmatpush.msra.mxu0 0.0
        %1750 = vmatpush.msra.mxu0 0.0
        %1751 = vmatpush.msra.mxu0 0.0
        %1752 = vmatpush.msra.mxu0 0.0
        %1753 = vmatpush.msra.mxu0 0.0
        %1754 = vmatpush.msra.mxu0 0.0
        %1755 = vmatpush.msra.mxu0 0.0
        %1756 = vmatpush.msra.mxu0 0.0
        %1757 = vmatpush.msra.mxu0 %v1740
        %1758 = vmatpush.msra.mxu0 %v1739
        %1759 = vmatpush.msra.mxu0 %v1738
        %1760 = vmatpush.msra.mxu0 %v1737
        %1761 = vmatmul.f32.gmra.mxu0 %v1673
        %v1762 = vpop.f32.mrf.mxu0
        %v1763 = vadd.f32 %v1743, %v1762
        %1764 = vmatmul.f32.gmra.mxu0 %v1676
        %v1765 = vpop.f32.mrf.mxu0
        %v1766 = vadd.f32 %v1743, %v1765
        %1767 = vmatmul.f32.gmra.mxu0 %v1679
        %v1768 = vpop.f32.mrf.mxu0
        %v1769 = vadd.f32 %v1743, %v1768
        %1770 = vmatmul.f32.gmra.mxu0 %v1682
        %v1771 = vpop.f32.mrf.mxu0
        %v1772 = vadd.f32 %v1743, %v1771
        %1773 = vmatmul.f32.gmra.mxu0 %v1685
        %v1774 = vpop.f32.mrf.mxu0
        %v1775 = vadd.f32 %v1743, %v1774
        %1776 = vmatmul.f32.gmra.mxu0 %v1688
        %v1777 = vpop.f32.mrf.mxu0
        %v1778 = vadd.f32 %v1743, %v1777
        %1779 = vmatmul.f32.gmra.mxu0 %v1691
        %v1780 = vpop.f32.mrf.mxu0
        %v1781 = vadd.f32 %v1743, %v1780
        %1782 = vmatmul.f32.gmra.mxu0 %v1694
        %v1783 = vpop.f32.mrf.mxu0
        %v1784 = vadd.f32 %v1743, %v1783
        %1785 = vdwg.mxu0
        %v1787 = vsel %vm596, %v1714, 0
        %v1790 = vsel %vm596, %v1717, 0
        %v1793 = vsel %vm596, %v1720, 0
        %v1796 = vsel %vm596, %v1723, 0
        %v1799 = vsel %vm596, %v1726, 0
        %v1802 = vsel %vm596, %v1729, 0
        %v1805 = vsel %vm596, %v1732, 0
        %v1808 = vsel %vm596, %v1735, 0
        %1810 = vmatpush.xpose.msra.mxu0 0.0
        %1811 = vmatpush.xpose.msra.mxu0 0.0
        %1812 = vmatpush.xpose.msra.mxu0 0.0
        %1813 = vmatpush.xpose.msra.mxu0 0.0
        %1814 = vmatpush.xpose.msra.mxu0 0.0
        %1815 = vmatpush.xpose.msra.mxu0 0.0
        %1816 = vmatpush.xpose.msra.mxu0 0.0
        %1817 = vmatpush.xpose.msra.mxu0 0.0
        %1818 = vmatpush.xpose.msra.mxu0 %v1694
        %1819 = vmatpush.xpose.msra.mxu0 %v1691
        %1820 = vmatpush.xpose.msra.mxu0 %v1688
        %1821 = vmatpush.xpose.msra.mxu0 %v1685
        %1822 = vmatpush.xpose.msra.mxu0 %v1682
        %1823 = vmatpush.xpose.msra.mxu0 %v1679
        %1824 = vmatpush.xpose.msra.mxu0 %v1676
        %1825 = vmatpush.xpose.msra.mxu0 %v1673
        %1826 = vmatmul.f32.gmra.mxu0 %v1787
        %v1827 = vpop.f32.mrf.mxu0
        %v1828 = vadd.f32 0.0, %v1827
        %1829 = vmatmul.f32.gmra.mxu0 %v1790
        %v1830 = vpop.f32.mrf.mxu0
        %v1831 = vadd.f32 0.0, %v1830
        %1832 = vmatmul.f32.gmra.mxu0 %v1793
        %v1833 = vpop.f32.mrf.mxu0
        %v1834 = vadd.f32 0.0, %v1833
        %1835 = vmatmul.f32.gmra.mxu0 %v1796
        %v1836 = vpop.f32.mrf.mxu0
        %v1837 = vadd.f32 0.0, %v1836
        %1838 = vmatmul.f32.gmra.mxu0 %v1799
        %v1839 = vpop.f32.mrf.mxu0
        %v1840 = vadd.f32 0.0, %v1839
        %1841 = vmatmul.f32.gmra.mxu0 %v1802
        %v1842 = vpop.f32.mrf.mxu0
        %v1843 = vadd.f32 0.0, %v1842
        %1844 = vmatmul.f32.gmra.mxu0 %v1805
        %v1845 = vpop.f32.mrf.mxu0
        %v1846 = vadd.f32 0.0, %v1845
        %1847 = vmatmul.f32.gmra.mxu0 %v1808
        %v1848 = vpop.f32.mrf.mxu0
        %v1849 = vadd.f32 0.0, %v1848
        %1850 = vdwg.mxu0
        %vm1851 = vcmask 523264
        %v1852 = vsel %vm1851, %v1828, -inf
        %1853 = vmax.xlane.f32.xlu0 %v1852
        %v1854 = vpop.xlane.xlu0 %1853
        %v1855 = vsel %vm1851, %v1831, -inf
        %1856 = vmax.xlane.f32.xlu0 %v1855
        %v1857 = vpop.xlane.xlu0 %1856
        %v1858 = vsel %vm1851, %v1834, -inf
        %1859 = vmax.xlane.f32.xlu0 %v1858
        %v1860 = vpop.xlane.xlu0 %1859
        %v1861 = vsel %vm1851, %v1837, -inf
        %1862 = vmax.xlane.f32.xlu0 %v1861
        %v1863 = vpop.xlane.xlu0 %1862
        %v1864 = vsel %vm1851, %v1840, -inf
        %1865 = vmax.xlane.f32.xlu0 %v1864
        %v1866 = vpop.xlane.xlu0 %1865
        %v1867 = vsel %vm1851, %v1843, -inf
        %1868 = vmax.xlane.f32.xlu0 %v1867
        %v1869 = vpop.xlane.xlu0 %1868
        %v1870 = vsel %vm1851, %v1846, -inf
        %1871 = vmax.xlane.f32.xlu0 %v1870
        %v1872 = vpop.xlane.xlu0 %1871
        %v1873 = vsel %vm1851, %v1849, -inf
        %1874 = vmax.xlane.f32.xlu0 %v1873
        %v1875 = vpop.xlane.xlu0 %1874
        %v1876 = vsub.f32 %v1828, %v1854
        %v1877 = vsub.f32 %v1831, %v1857
        %v1878 = vsub.f32 %v1834, %v1860
        %v1879 = vsub.f32 %v1837, %v1863
        %v1880 = vsub.f32 %v1840, %v1866
        %v1881 = vsub.f32 %v1843, %v1869
        %v1882 = vsub.f32 %v1846, %v1872
        %v1883 = vsub.f32 %v1849, %v1875
        %v1884 = vmul.f32 %v1876, 1.442695
        %v1885 = vpow.pop %v1884
        %v1886 = vmul.f32 %v1877, 1.442695
        %v1887 = vpow.pop %v1886
        %v1888 = vmul.f32 %v1878, 1.442695
        %v1889 = vpow.pop %v1888
        %v1890 = vmul.f32 %v1879, 1.442695
        %v1891 = vpow.pop %v1890
        %v1892 = vmul.f32 %v1880, 1.442695
        %v1893 = vpow.pop %v1892
        %v1894 = vmul.f32 %v1881, 1.442695
        %v1895 = vpow.pop %v1894
        %v1896 = vmul.f32 %v1882, 1.442695
        %v1897 = vpow.pop %v1896
        %v1898 = vmul.f32 %v1883, 1.442695
        %v1899 = vpow.pop %v1898
        %v1900 = vsel %vm1851, %v1885, 0.0
        %1901 = vadd.xlane.f32.xlu0 %v1900
        %v1902 = vpop.xlane.xlu0 %1901
        %v1903 = vsel %vm1851, %v1887, 0.0
        %1904 = vadd.xlane.f32.xlu0 %v1903
        %v1905 = vpop.xlane.xlu0 %1904
        %v1906 = vsel %vm1851, %v1889, 0.0
        %1907 = vadd.xlane.f32.xlu0 %v1906
        %v1908 = vpop.xlane.xlu0 %1907
        %v1909 = vsel %vm1851, %v1891, 0.0
        %1910 = vadd.xlane.f32.xlu0 %v1909
        %v1911 = vpop.xlane.xlu0 %1910
        %v1912 = vsel %vm1851, %v1893, 0.0
        %1913 = vadd.xlane.f32.xlu0 %v1912
        %v1914 = vpop.xlane.xlu0 %1913
        %v1915 = vsel %vm1851, %v1895, 0.0
        %1916 = vadd.xlane.f32.xlu0 %v1915
        %v1917 = vpop.xlane.xlu0 %1916
        %v1918 = vsel %vm1851, %v1897, 0.0
        %1919 = vadd.xlane.f32.xlu0 %v1918
        %v1920 = vpop.xlane.xlu0 %1919
        %v1921 = vsel %vm1851, %v1899, 0.0
        %1922 = vadd.xlane.f32.xlu0 %v1921
        %v1923 = vpop.xlane.xlu0 %1922
        %v1924 = vrcp.pop %v1902
        %v1925 = vrcp.pop %v1905
        %v1926 = vrcp.pop %v1908
        %v1927 = vrcp.pop %v1911
        %v1928 = vrcp.pop %v1914
        %v1929 = vrcp.pop %v1917
        %v1930 = vrcp.pop %v1920
        %v1931 = vrcp.pop %v1923
        %v1932 = vmul.f32 %v1902, %v1924
        %v1933 = vmul.f32 %v1905, %v1925
        %v1934 = vmul.f32 %v1908, %v1926
        %v1935 = vmul.f32 %v1911, %v1927
        %v1936 = vmul.f32 %v1914, %v1928
        %v1937 = vmul.f32 %v1917, %v1929
        %v1938 = vmul.f32 %v1920, %v1930
        %v1939 = vmul.f32 %v1923, %v1931
        %v1940 = vsub.f32 2.0, %v1932
        %v1941 = vsub.f32 2.0, %v1933
        %v1942 = vsub.f32 2.0, %v1934
        %v1943 = vsub.f32 2.0, %v1935
        %v1944 = vsub.f32 2.0, %v1936
        %v1945 = vsub.f32 2.0, %v1937
        %v1946 = vsub.f32 2.0, %v1938
        %v1947 = vsub.f32 2.0, %v1939
        %v1948 = vmul.f32 %v1924, %v1940
        %v1949 = vmul.f32 %v1925, %v1941
        %v1950 = vmul.f32 %v1926, %v1942
        %v1951 = vmul.f32 %v1927, %v1943
        %v1952 = vmul.f32 %v1928, %v1944
        %v1953 = vmul.f32 %v1929, %v1945
        %v1954 = vmul.f32 %v1930, %v1946
        %v1955 = vmul.f32 %v1931, %v1947
        %v1956 = vmul.f32 %v1885, %v1948
        %v1957 = vmul.f32 %v1887, %v1949
        %v1958 = vmul.f32 %v1889, %v1950
        %v1959 = vmul.f32 %v1891, %v1951
        %v1960 = vmul.f32 %v1893, %v1952
        %v1961 = vmul.f32 %v1895, %v1953
        %v1962 = vmul.f32 %v1897, %v1954
        %v1963 = vmul.f32 %v1899, %v1955
        %v1965 = vsel %vm1851, %v1956, 0
        %v1968 = vsel %vm1851, %v1957, 0
        %v1971 = vsel %vm1851, %v1958, 0
        %v1974 = vsel %vm1851, %v1959, 0
        %v1977 = vsel %vm1851, %v1960, 0
        %v1980 = vsel %vm1851, %v1961, 0
        %v1983 = vsel %vm1851, %v1962, 0
        %v1986 = vsel %vm1851, %v1963, 0
        %1988 = vmatpush.msra.mxu0 0.0
        %1989 = vmatpush.msra.mxu0 0.0
        %1990 = vmatpush.msra.mxu0 0.0
        %1991 = vmatpush.msra.mxu0 0.0
        %1992 = vmatpush.msra.mxu0 0.0
        %1993 = vmatpush.msra.mxu0 0.0
        %1994 = vmatpush.msra.mxu0 0.0
        %1995 = vmatpush.msra.mxu0 0.0
        %1996 = vmatpush.msra.mxu0 %v1784
        %1997 = vmatpush.msra.mxu0 %v1781
        %1998 = vmatpush.msra.mxu0 %v1778
        %1999 = vmatpush.msra.mxu0 %v1775
        %2000 = vmatpush.msra.mxu0 %v1772
        %2001 = vmatpush.msra.mxu0 %v1769
        %2002 = vmatpush.msra.mxu0 %v1766
        %2003 = vmatpush.msra.mxu0 %v1763
        %2004 = vmatmul.f32.gmra.mxu0 %v1965
        %v2005 = vpop.f32.mrf.mxu0
        %v2006 = vadd.f32 0.0, %v2005
        %2007 = vmatmul.f32.gmra.mxu0 %v1968
        %v2008 = vpop.f32.mrf.mxu0
        %v2009 = vadd.f32 0.0, %v2008
        %2010 = vmatmul.f32.gmra.mxu0 %v1971
        %v2011 = vpop.f32.mrf.mxu0
        %v2012 = vadd.f32 0.0, %v2011
        %2013 = vmatmul.f32.gmra.mxu0 %v1974
        %v2014 = vpop.f32.mrf.mxu0
        %v2015 = vadd.f32 0.0, %v2014
        %2016 = vmatmul.f32.gmra.mxu0 %v1977
        %v2017 = vpop.f32.mrf.mxu0
        %v2018 = vadd.f32 0.0, %v2017
        %2019 = vmatmul.f32.gmra.mxu0 %v1980
        %v2020 = vpop.f32.mrf.mxu0
        %v2021 = vadd.f32 0.0, %v2020
        %2022 = vmatmul.f32.gmra.mxu0 %v1983
        %v2023 = vpop.f32.mrf.mxu0
        %v2024 = vadd.f32 0.0, %v2023
        %2025 = vmatmul.f32.gmra.mxu0 %v1986
        %v2026 = vpop.f32.mrf.mxu0
        %v2027 = vadd.f32 0.0, %v2026
        %2028 = vdwg.mxu0
        %v2029 = vstv %s453
        %v2030 = vmul.f32 %v2029, %v2006
        %v2031 = vmul.f32 %v2029, %v2009
        %v2032 = vmul.f32 %v2029, %v2012
        %v2033 = vmul.f32 %v2029, %v2015
        %v2034 = vmul.f32 %v2029, %v2018
        %v2035 = vmul.f32 %v2029, %v2021
        %v2036 = vmul.f32 %v2029, %v2024
        %v2037 = vmul.f32 %v2029, %v2027
        %v2038 = vadd.f32 %v2030, %v1656
        %v2039 = vadd.f32 %v2031, %v1657
        %v2040 = vadd.f32 %v2032, %v1658
        %v2041 = vadd.f32 %v2033, %v1659
        %v2042 = vadd.f32 %v2034, %v1660
        %v2043 = vadd.f32 %v2035, %v1661
        %v2044 = vadd.f32 %v2036, %v1662
        %v2045 = vadd.f32 %v2037, %v1663
        %v2046 = vrot.slane %v2038, 7
        %v2047 = vrot.slane %v2039, 7
        %v2048 = vrot.slane %v2040, 7
        %v2049 = vrot.slane %v2041, 7
        %v2050 = vrot.slane %v2042, 7
        %v2051 = vrot.slane %v2043, 7
        %v2052 = vrot.slane %v2044, 7
        %v2053 = vrot.slane %v2045, 7
        %v2054 = vsel %vm465, %v2052, %v2053
        %v2055 = vsel %vm465, %v2051, %v2052
        %v2056 = vsel %vm465, %v2050, %v2051
        %v2057 = vsel %vm465, %v2049, %v2050
        %v2058 = vsel %vm465, %v2048, %v2049
        %v2059 = vsel %vm465, %v2047, %v2048
        %v2060 = vsel %vm465, %v2046, %v2047
        %v2061 = vsel %vm465, %v2053, %v2046
        %v2062 = vmul.f32 %v2054, %v485
        %v2063 = vmul.f32 %v2061, %v490
        %v2064 = vmul.f32 %v2060, %v495
        %v2065 = vmul.f32 %v2059, %v500
        %v2066 = vmul.f32 %v2058, %v505
        %v2067 = vmul.f32 %v2057, %v510
        %v2068 = vmul.f32 %v2056, %v515
        %v2069 = vmul.f32 %v2055, %v520
        %s2070 = scalar_lea.vmem [#allocation5], 576
        %v2071 = vld [vmem:[%s2070] sm:$0xff]
        %v2072 = vld [vmem:[%s2070 + $0x8] sm:$0xff]
        %v2073 = vld [vmem:[%s2070 + $0x10] sm:$0xff]
        %v2074 = vld [vmem:[%s2070 + $0x18] sm:$0xff]
        %v2075 = vmul.f32 %v2045, %v546
        %v2076 = vmul.f32 %v2038, %v551
        %v2077 = vmul.f32 %v2039, %v556
        %v2078 = vmul.f32 %v2040, %v561
        %v2079 = vmul.f32 %v2041, %v566
        %v2080 = vmul.f32 %v2042, %v571
        %v2081 = vmul.f32 %v2043, %v576
        %v2082 = vmul.f32 %v2044, %v581
        %s2083 = scalar_lea.vmem [#allocation5], 608
        %v2084 = vld [vmem:[%s2083] sm:$0xff]
        %v2085 = vld [vmem:[%s2083 + $0x8] sm:$0xff]
        %v2086 = vld [vmem:[%s2083 + $0x10] sm:$0xff]
        %v2087 = vld [vmem:[%s2083 + $0x18] sm:$0xff]
        %v2089 = vsel %vm596, %v2075, 0
        %v2092 = vsel %vm596, %v2076, 0
        %v2095 = vsel %vm596, %v2077, 0
        %v2098 = vsel %vm596, %v2078, 0
        %v2101 = vsel %vm596, %v2079, 0
        %v2104 = vsel %vm596, %v2080, 0
        %v2107 = vsel %vm596, %v2081, 0
        %v2110 = vsel %vm596, %v2082, 0
        %2112 = vmatpush.msra.mxu0 0.0
        %2113 = vmatpush.msra.mxu0 0.0
        %2114 = vmatpush.msra.mxu0 0.0
        %2115 = vmatpush.msra.mxu0 0.0
        %2116 = vmatpush.msra.mxu0 0.0
        %2117 = vmatpush.msra.mxu0 0.0
        %2118 = vmatpush.msra.mxu0 0.0
        %2119 = vmatpush.msra.mxu0 0.0
        %2120 = vmatpush.msra.mxu0 0.0
        %2121 = vmatpush.msra.mxu0 0.0
        %2122 = vmatpush.msra.mxu0 0.0
        %2123 = vmatpush.msra.mxu0 0.0
        %2124 = vmatpush.msra.mxu0 %v2087
        %2125 = vmatpush.msra.mxu0 %v2086
        %2126 = vmatpush.msra.mxu0 %v2085
        %2127 = vmatpush.msra.mxu0 %v2084
        %2128 = vmatmul.f32.gmra.mxu0 %v2089
        %v2129 = vpop.f32.mrf.mxu0
        %v2130 = vadd.f32 0.0, %v2129
        %2131 = vmatmul.f32.gmra.mxu0 %v2092
        %v2132 = vpop.f32.mrf.mxu0
        %v2133 = vadd.f32 0.0, %v2132
        %2134 = vmatmul.f32.gmra.mxu0 %v2095
        %v2135 = vpop.f32.mrf.mxu0
        %v2136 = vadd.f32 0.0, %v2135
        %2137 = vmatmul.f32.gmra.mxu0 %v2098
        %v2138 = vpop.f32.mrf.mxu0
        %v2139 = vadd.f32 0.0, %v2138
        %2140 = vmatmul.f32.gmra.mxu0 %v2101
        %v2141 = vpop.f32.mrf.mxu0
        %v2142 = vadd.f32 0.0, %v2141
        %2143 = vmatmul.f32.gmra.mxu0 %v2104
        %v2144 = vpop.f32.mrf.mxu0
        %v2145 = vadd.f32 0.0, %v2144
        %2146 = vmatmul.f32.gmra.mxu0 %v2107
        %v2147 = vpop.f32.mrf.mxu0
        %v2148 = vadd.f32 0.0, %v2147
        %2149 = vmatmul.f32.gmra.mxu0 %v2110
        %v2150 = vpop.f32.mrf.mxu0
        %v2151 = vadd.f32 0.0, %v2150
        %2152 = vdwg.mxu0
        %v2154 = vsel %vm596, %v2062, 0
        %v2157 = vsel %vm596, %v2063, 0
        %v2160 = vsel %vm596, %v2064, 0
        %v2163 = vsel %vm596, %v2065, 0
        %v2166 = vsel %vm596, %v2066, 0
        %v2169 = vsel %vm596, %v2067, 0
        %v2172 = vsel %vm596, %v2068, 0
        %v2175 = vsel %vm596, %v2069, 0
        %2177 = vmatpush.msra.mxu0 0.0
        %2178 = vmatpush.msra.mxu0 0.0
        %2179 = vmatpush.msra.mxu0 0.0
        %2180 = vmatpush.msra.mxu0 0.0
        %2181 = vmatpush.msra.mxu0 0.0
        %2182 = vmatpush.msra.mxu0 0.0
        %2183 = vmatpush.msra.mxu0 0.0
        %2184 = vmatpush.msra.mxu0 0.0
        %2185 = vmatpush.msra.mxu0 0.0
        %2186 = vmatpush.msra.mxu0 0.0
        %2187 = vmatpush.msra.mxu0 0.0
        %2188 = vmatpush.msra.mxu0 0.0
        %2189 = vmatpush.msra.mxu0 %v2074
        %2190 = vmatpush.msra.mxu0 %v2073
        %2191 = vmatpush.msra.mxu0 %v2072
        %2192 = vmatpush.msra.mxu0 %v2071
        %2193 = vmatmul.f32.gmra.mxu0 %v2154
        %v2194 = vpop.f32.mrf.mxu0
        %v2195 = vadd.f32 %v2130, %v2194
        %2196 = vmatmul.f32.gmra.mxu0 %v2157
        %v2197 = vpop.f32.mrf.mxu0
        %v2198 = vadd.f32 %v2133, %v2197
        %2199 = vmatmul.f32.gmra.mxu0 %v2160
        %v2200 = vpop.f32.mrf.mxu0
        %v2201 = vadd.f32 %v2136, %v2200
        %2202 = vmatmul.f32.gmra.mxu0 %v2163
        %v2203 = vpop.f32.mrf.mxu0
        %v2204 = vadd.f32 %v2139, %v2203
        %2205 = vmatmul.f32.gmra.mxu0 %v2166
        %v2206 = vpop.f32.mrf.mxu0
        %v2207 = vadd.f32 %v2142, %v2206
        %2208 = vmatmul.f32.gmra.mxu0 %v2169
        %v2209 = vpop.f32.mrf.mxu0
        %v2210 = vadd.f32 %v2145, %v2209
        %2211 = vmatmul.f32.gmra.mxu0 %v2172
        %v2212 = vpop.f32.mrf.mxu0
        %v2213 = vadd.f32 %v2148, %v2212
        %2214 = vmatmul.f32.gmra.mxu0 %v2175
        %v2215 = vpop.f32.mrf.mxu0
        %v2216 = vadd.f32 %v2151, %v2215
        %2217 = vdwg.mxu0
        %v2218 = vrot.slane %v2038, 1
        %v2219 = vrot.slane %v2039, 1
        %v2220 = vrot.slane %v2040, 1
        %v2221 = vrot.slane %v2041, 1
        %v2222 = vrot.slane %v2042, 1
        %v2223 = vrot.slane %v2043, 1
        %v2224 = vrot.slane %v2044, 1
        %v2225 = vrot.slane %v2045, 1
        %v2226 = vsel %vm735, %v2224, %v2225
        %v2227 = vsel %vm735, %v2223, %v2224
        %v2228 = vsel %vm735, %v2222, %v2223
        %v2229 = vsel %vm735, %v2221, %v2222
        %v2230 = vsel %vm735, %v2220, %v2221
        %v2231 = vsel %vm735, %v2219, %v2220
        %v2232 = vsel %vm735, %v2218, %v2219
        %v2233 = vsel %vm735, %v2225, %v2218
        %v2234 = vmul.f32 %v2233, %v756
        %v2235 = vmul.f32 %v2232, %v761
        %v2236 = vmul.f32 %v2231, %v766
        %v2237 = vmul.f32 %v2230, %v771
        %v2238 = vmul.f32 %v2229, %v776
        %v2239 = vmul.f32 %v2228, %v781
        %v2240 = vmul.f32 %v2227, %v786
        %v2241 = vmul.f32 %v2226, %v791
        %s2242 = scalar_lea.vmem [#allocation5], 640
        %v2243 = vld [vmem:[%s2242] sm:$0xff]
        %v2244 = vld [vmem:[%s2242 + $0x8] sm:$0xff]
        %v2245 = vld [vmem:[%s2242 + $0x10] sm:$0xff]
        %v2246 = vld [vmem:[%s2242 + $0x18] sm:$0xff]
        %v2248 = vsel %vm596, %v2234, 0
        %v2251 = vsel %vm596, %v2235, 0
        %v2254 = vsel %vm596, %v2236, 0
        %v2257 = vsel %vm596, %v2237, 0
        %v2260 = vsel %vm596, %v2238, 0
        %v2263 = vsel %vm596, %v2239, 0
        %v2266 = vsel %vm596, %v2240, 0
        %v2269 = vsel %vm596, %v2241, 0
        %2271 = vmatpush.msra.mxu0 0.0
        %2272 = vmatpush.msra.mxu0 0.0
        %2273 = vmatpush.msra.mxu0 0.0
        %2274 = vmatpush.msra.mxu0 0.0
        %2275 = vmatpush.msra.mxu0 0.0
        %2276 = vmatpush.msra.mxu0 0.0
        %2277 = vmatpush.msra.mxu0 0.0
        %2278 = vmatpush.msra.mxu0 0.0
        %2279 = vmatpush.msra.mxu0 0.0
        %2280 = vmatpush.msra.mxu0 0.0
        %2281 = vmatpush.msra.mxu0 0.0
        %2282 = vmatpush.msra.mxu0 0.0
        %2283 = vmatpush.msra.mxu0 %v2246
        %2284 = vmatpush.msra.mxu0 %v2245
        %2285 = vmatpush.msra.mxu0 %v2244
        %2286 = vmatpush.msra.mxu0 %v2243
        %2287 = vmatmul.f32.gmra.mxu0 %v2248
        %v2288 = vpop.f32.mrf.mxu0
        %v2289 = vadd.f32 0.0, %v2288
        %2290 = vmatmul.f32.gmra.mxu0 %v2251
        %v2291 = vpop.f32.mrf.mxu0
        %v2292 = vadd.f32 0.0, %v2291
        %2293 = vmatmul.f32.gmra.mxu0 %v2254
        %v2294 = vpop.f32.mrf.mxu0
        %v2295 = vadd.f32 0.0, %v2294
        %2296 = vmatmul.f32.gmra.mxu0 %v2257
        %v2297 = vpop.f32.mrf.mxu0
        %v2298 = vadd.f32 0.0, %v2297
        %2299 = vmatmul.f32.gmra.mxu0 %v2260
        %v2300 = vpop.f32.mrf.mxu0
        %v2301 = vadd.f32 0.0, %v2300
        %2302 = vmatmul.f32.gmra.mxu0 %v2263
        %v2303 = vpop.f32.mrf.mxu0
        %v2304 = vadd.f32 0.0, %v2303
        %2305 = vmatmul.f32.gmra.mxu0 %v2266
        %v2306 = vpop.f32.mrf.mxu0
        %v2307 = vadd.f32 0.0, %v2306
        %2308 = vmatmul.f32.gmra.mxu0 %v2269
        %v2309 = vpop.f32.mrf.mxu0
        %v2310 = vadd.f32 0.0, %v2309
        %2311 = vdwg.mxu0
        %v2312 = vadd.f32 %v2195, %v2289
        %v2313 = vadd.f32 %v2198, %v2292
        %v2314 = vadd.f32 %v2201, %v2295
        %v2315 = vadd.f32 %v2204, %v2298
        %v2316 = vadd.f32 %v2207, %v2301
        %v2317 = vadd.f32 %v2210, %v2304
        %v2318 = vadd.f32 %v2213, %v2307
        %v2319 = vadd.f32 %v2216, %v2310
        %v2320 = vmul.f32 %v2061, %v891
        %v2321 = vmul.f32 %v2060, %v896
        %v2322 = vmul.f32 %v2059, %v901
        %v2323 = vmul.f32 %v2058, %v906
        %v2324 = vmul.f32 %v2057, %v911
        %v2325 = vmul.f32 %v2056, %v916
        %v2326 = vmul.f32 %v2055, %v921
        %v2327 = vmul.f32 %v2054, %v926
        %s2328 = scalar_lea.vmem [#allocation5], 672
        %v2329 = vld [vmem:[%s2328] sm:$0xff]
        %v2330 = vld [vmem:[%s2328 + $0x8] sm:$0xff]
        %v2331 = vld [vmem:[%s2328 + $0x10] sm:$0xff]
        %v2332 = vld [vmem:[%s2328 + $0x18] sm:$0xff]
        %v2334 = vsel %vm596, %v2320, 0
        %v2337 = vsel %vm596, %v2321, 0
        %v2340 = vsel %vm596, %v2322, 0
        %v2343 = vsel %vm596, %v2323, 0
        %v2346 = vsel %vm596, %v2324, 0
        %v2349 = vsel %vm596, %v2325, 0
        %v2352 = vsel %vm596, %v2326, 0
        %v2355 = vsel %vm596, %v2327, 0
        %2357 = vmatpush.msra.mxu0 0.0
        %2358 = vmatpush.msra.mxu0 0.0
        %2359 = vmatpush.msra.mxu0 0.0
        %2360 = vmatpush.msra.mxu0 0.0
        %2361 = vmatpush.msra.mxu0 0.0
        %2362 = vmatpush.msra.mxu0 0.0
        %2363 = vmatpush.msra.mxu0 0.0
        %2364 = vmatpush.msra.mxu0 0.0
        %2365 = vmatpush.msra.mxu0 0.0
        %2366 = vmatpush.msra.mxu0 0.0
        %2367 = vmatpush.msra.mxu0 0.0
        %2368 = vmatpush.msra.mxu0 0.0
        %2369 = vmatpush.msra.mxu0 %v2332
        %2370 = vmatpush.msra.mxu0 %v2331
        %2371 = vmatpush.msra.mxu0 %v2330
        %2372 = vmatpush.msra.mxu0 %v2329
        %2373 = vmatmul.f32.gmra.mxu0 %v2334
        %v2374 = vpop.f32.mrf.mxu0
        %v2375 = vadd.f32 0.0, %v2374
        %2376 = vmatmul.f32.gmra.mxu0 %v2337
        %v2377 = vpop.f32.mrf.mxu0
        %v2378 = vadd.f32 0.0, %v2377
        %2379 = vmatmul.f32.gmra.mxu0 %v2340
        %v2380 = vpop.f32.mrf.mxu0
        %v2381 = vadd.f32 0.0, %v2380
        %2382 = vmatmul.f32.gmra.mxu0 %v2343
        %v2383 = vpop.f32.mrf.mxu0
        %v2384 = vadd.f32 0.0, %v2383
        %2385 = vmatmul.f32.gmra.mxu0 %v2346
        %v2386 = vpop.f32.mrf.mxu0
        %v2387 = vadd.f32 0.0, %v2386
        %2388 = vmatmul.f32.gmra.mxu0 %v2349
        %v2389 = vpop.f32.mrf.mxu0
        %v2390 = vadd.f32 0.0, %v2389
        %2391 = vmatmul.f32.gmra.mxu0 %v2352
        %v2392 = vpop.f32.mrf.mxu0
        %v2393 = vadd.f32 0.0, %v2392
        %2394 = vmatmul.f32.gmra.mxu0 %v2355
        %v2395 = vpop.f32.mrf.mxu0
        %v2396 = vadd.f32 0.0, %v2395
        %2397 = vdwg.mxu0
        %v2398 = vadd.f32 %v2312, %v2375
        %v2399 = vadd.f32 %v2313, %v2378
        %v2400 = vadd.f32 %v2314, %v2381
        %v2401 = vadd.f32 %v2315, %v2384
        %v2402 = vadd.f32 %v2316, %v2387
        %v2403 = vadd.f32 %v2317, %v2390
        %v2404 = vadd.f32 %v2318, %v2393
        %v2405 = vadd.f32 %v2319, %v2396
        %s2406 = scalar_lea.vmem [#allocation5], 704
        %v2407 = vld [vmem:[%s2406] sm:$0xff]
        %v2408 = vld [vmem:[%s2406 + $0x8] sm:$0xff]
        %v2409 = vld [vmem:[%s2406 + $0x10] sm:$0xff]
        %v2410 = vld [vmem:[%s2406 + $0x18] sm:$0xff]
        %v2412 = vsel %vm596, %v2038, 0
        %v2415 = vsel %vm596, %v2039, 0
        %v2418 = vsel %vm596, %v2040, 0
        %v2421 = vsel %vm596, %v2041, 0
        %v2424 = vsel %vm596, %v2042, 0
        %v2427 = vsel %vm596, %v2043, 0
        %v2430 = vsel %vm596, %v2044, 0
        %v2433 = vsel %vm596, %v2045, 0
        %2435 = vmatpush.msra.mxu0 0.0
        %2436 = vmatpush.msra.mxu0 0.0
        %2437 = vmatpush.msra.mxu0 0.0
        %2438 = vmatpush.msra.mxu0 0.0
        %2439 = vmatpush.msra.mxu0 0.0
        %2440 = vmatpush.msra.mxu0 0.0
        %2441 = vmatpush.msra.mxu0 0.0
        %2442 = vmatpush.msra.mxu0 0.0
        %2443 = vmatpush.msra.mxu0 0.0
        %2444 = vmatpush.msra.mxu0 0.0
        %2445 = vmatpush.msra.mxu0 0.0
        %2446 = vmatpush.msra.mxu0 0.0
        %2447 = vmatpush.msra.mxu0 %v2410
        %2448 = vmatpush.msra.mxu0 %v2409
        %2449 = vmatpush.msra.mxu0 %v2408
        %2450 = vmatpush.msra.mxu0 %v2407
        %2451 = vmatmul.f32.gmra.mxu0 %v2412
        %v2452 = vpop.f32.mrf.mxu0
        %v2453 = vadd.f32 0.0, %v2452
        %2454 = vmatmul.f32.gmra.mxu0 %v2415
        %v2455 = vpop.f32.mrf.mxu0
        %v2456 = vadd.f32 0.0, %v2455
        %2457 = vmatmul.f32.gmra.mxu0 %v2418
        %v2458 = vpop.f32.mrf.mxu0
        %v2459 = vadd.f32 0.0, %v2458
        %2460 = vmatmul.f32.gmra.mxu0 %v2421
        %v2461 = vpop.f32.mrf.mxu0
        %v2462 = vadd.f32 0.0, %v2461
        %2463 = vmatmul.f32.gmra.mxu0 %v2424
        %v2464 = vpop.f32.mrf.mxu0
        %v2465 = vadd.f32 0.0, %v2464
        %2466 = vmatmul.f32.gmra.mxu0 %v2427
        %v2467 = vpop.f32.mrf.mxu0
        %v2468 = vadd.f32 0.0, %v2467
        %2469 = vmatmul.f32.gmra.mxu0 %v2430
        %v2470 = vpop.f32.mrf.mxu0
        %v2471 = vadd.f32 0.0, %v2470
        %2472 = vmatmul.f32.gmra.mxu0 %v2433
        %v2473 = vpop.f32.mrf.mxu0
        %v2474 = vadd.f32 0.0, %v2473
        %2475 = vdwg.mxu0
        %v2476 = vadd.f32 %v2398, %v2453
        %v2477 = vadd.f32 %v2399, %v2456
        %v2478 = vadd.f32 %v2400, %v2459
        %v2479 = vadd.f32 %v2401, %v2462
        %v2480 = vadd.f32 %v2402, %v2465
        %v2481 = vadd.f32 %v2403, %v2468
        %v2482 = vadd.f32 %v2404, %v2471
        %v2483 = vadd.f32 %v2405, %v2474
        %v2484 = vmul.f32 %v2232, %v1104
        %v2485 = vmul.f32 %v2231, %v1109
        %v2486 = vmul.f32 %v2230, %v1114
        %v2487 = vmul.f32 %v2229, %v1119
        %v2488 = vmul.f32 %v2228, %v1124
        %v2489 = vmul.f32 %v2227, %v1129
        %v2490 = vmul.f32 %v2226, %v1134
        %v2491 = vmul.f32 %v2233, %v1139
        %s2492 = scalar_lea.vmem [#allocation5], 736
        %v2493 = vld [vmem:[%s2492] sm:$0xff]
        %v2494 = vld [vmem:[%s2492 + $0x8] sm:$0xff]
        %v2495 = vld [vmem:[%s2492 + $0x10] sm:$0xff]
        %v2496 = vld [vmem:[%s2492 + $0x18] sm:$0xff]
        %v2498 = vsel %vm596, %v2484, 0
        %v2501 = vsel %vm596, %v2485, 0
        %v2504 = vsel %vm596, %v2486, 0
        %v2507 = vsel %vm596, %v2487, 0
        %v2510 = vsel %vm596, %v2488, 0
        %v2513 = vsel %vm596, %v2489, 0
        %v2516 = vsel %vm596, %v2490, 0
        %v2519 = vsel %vm596, %v2491, 0
        %2521 = vmatpush.msra.mxu0 0.0
        %2522 = vmatpush.msra.mxu0 0.0
        %2523 = vmatpush.msra.mxu0 0.0
        %2524 = vmatpush.msra.mxu0 0.0
        %2525 = vmatpush.msra.mxu0 0.0
        %2526 = vmatpush.msra.mxu0 0.0
        %2527 = vmatpush.msra.mxu0 0.0
        %2528 = vmatpush.msra.mxu0 0.0
        %2529 = vmatpush.msra.mxu0 0.0
        %2530 = vmatpush.msra.mxu0 0.0
        %2531 = vmatpush.msra.mxu0 0.0
        %2532 = vmatpush.msra.mxu0 0.0
        %2533 = vmatpush.msra.mxu0 %v2496
        %2534 = vmatpush.msra.mxu0 %v2495
        %2535 = vmatpush.msra.mxu0 %v2494
        %2536 = vmatpush.msra.mxu0 %v2493
        %2537 = vmatmul.f32.gmra.mxu0 %v2498
        %v2538 = vpop.f32.mrf.mxu0
        %v2539 = vadd.f32 0.0, %v2538
        %2540 = vmatmul.f32.gmra.mxu0 %v2501
        %v2541 = vpop.f32.mrf.mxu0
        %v2542 = vadd.f32 0.0, %v2541
        %2543 = vmatmul.f32.gmra.mxu0 %v2504
        %v2544 = vpop.f32.mrf.mxu0
        %v2545 = vadd.f32 0.0, %v2544
        %2546 = vmatmul.f32.gmra.mxu0 %v2507
        %v2547 = vpop.f32.mrf.mxu0
        %v2548 = vadd.f32 0.0, %v2547
        %2549 = vmatmul.f32.gmra.mxu0 %v2510
        %v2550 = vpop.f32.mrf.mxu0
        %v2551 = vadd.f32 0.0, %v2550
        %2552 = vmatmul.f32.gmra.mxu0 %v2513
        %v2553 = vpop.f32.mrf.mxu0
        %v2554 = vadd.f32 0.0, %v2553
        %2555 = vmatmul.f32.gmra.mxu0 %v2516
        %v2556 = vpop.f32.mrf.mxu0
        %v2557 = vadd.f32 0.0, %v2556
        %2558 = vmatmul.f32.gmra.mxu0 %v2519
        %v2559 = vpop.f32.mrf.mxu0
        %v2560 = vadd.f32 0.0, %v2559
        %2561 = vdwg.mxu0
        %v2562 = vadd.f32 %v2476, %v2539
        %v2563 = vadd.f32 %v2477, %v2542
        %v2564 = vadd.f32 %v2478, %v2545
        %v2565 = vadd.f32 %v2479, %v2548
        %v2566 = vadd.f32 %v2480, %v2551
        %v2567 = vadd.f32 %v2481, %v2554
        %v2568 = vadd.f32 %v2482, %v2557
        %v2569 = vadd.f32 %v2483, %v2560
        %v2570 = vmul.f32 %v2060, %v1239
        %v2571 = vmul.f32 %v2059, %v1244
        %v2572 = vmul.f32 %v2058, %v1249
        %v2573 = vmul.f32 %v2057, %v1254
        %v2574 = vmul.f32 %v2056, %v1259
        %v2575 = vmul.f32 %v2055, %v1264
        %v2576 = vmul.f32 %v2054, %v1269
        %v2577 = vmul.f32 %v2061, %v1274
        %s2578 = scalar_lea.vmem [#allocation5], 768
        %v2579 = vld [vmem:[%s2578] sm:$0xff]
        %v2580 = vld [vmem:[%s2578 + $0x8] sm:$0xff]
        %v2581 = vld [vmem:[%s2578 + $0x10] sm:$0xff]
        %v2582 = vld [vmem:[%s2578 + $0x18] sm:$0xff]
        %v2584 = vsel %vm596, %v2570, 0
        %v2587 = vsel %vm596, %v2571, 0
        %v2590 = vsel %vm596, %v2572, 0
        %v2593 = vsel %vm596, %v2573, 0
        %v2596 = vsel %vm596, %v2574, 0
        %v2599 = vsel %vm596, %v2575, 0
        %v2602 = vsel %vm596, %v2576, 0
        %v2605 = vsel %vm596, %v2577, 0
        %2607 = vmatpush.msra.mxu0 0.0
        %2608 = vmatpush.msra.mxu0 0.0
        %2609 = vmatpush.msra.mxu0 0.0
        %2610 = vmatpush.msra.mxu0 0.0
        %2611 = vmatpush.msra.mxu0 0.0
        %2612 = vmatpush.msra.mxu0 0.0
        %2613 = vmatpush.msra.mxu0 0.0
        %2614 = vmatpush.msra.mxu0 0.0
        %2615 = vmatpush.msra.mxu0 0.0
        %2616 = vmatpush.msra.mxu0 0.0
        %2617 = vmatpush.msra.mxu0 0.0
        %2618 = vmatpush.msra.mxu0 0.0
        %2619 = vmatpush.msra.mxu0 %v2582
        %2620 = vmatpush.msra.mxu0 %v2581
        %2621 = vmatpush.msra.mxu0 %v2580
        %2622 = vmatpush.msra.mxu0 %v2579
        %2623 = vmatmul.f32.gmra.mxu0 %v2584
        %v2624 = vpop.f32.mrf.mxu0
        %v2625 = vadd.f32 0.0, %v2624
        %2626 = vmatmul.f32.gmra.mxu0 %v2587
        %v2627 = vpop.f32.mrf.mxu0
        %v2628 = vadd.f32 0.0, %v2627
        %2629 = vmatmul.f32.gmra.mxu0 %v2590
        %v2630 = vpop.f32.mrf.mxu0
        %v2631 = vadd.f32 0.0, %v2630
        %2632 = vmatmul.f32.gmra.mxu0 %v2593
        %v2633 = vpop.f32.mrf.mxu0
        %v2634 = vadd.f32 0.0, %v2633
        %2635 = vmatmul.f32.gmra.mxu0 %v2596
        %v2636 = vpop.f32.mrf.mxu0
        %v2637 = vadd.f32 0.0, %v2636
        %2638 = vmatmul.f32.gmra.mxu0 %v2599
        %v2639 = vpop.f32.mrf.mxu0
        %v2640 = vadd.f32 0.0, %v2639
        %2641 = vmatmul.f32.gmra.mxu0 %v2602
        %v2642 = vpop.f32.mrf.mxu0
        %v2643 = vadd.f32 0.0, %v2642
        %2644 = vmatmul.f32.gmra.mxu0 %v2605
        %v2645 = vpop.f32.mrf.mxu0
        %v2646 = vadd.f32 0.0, %v2645
        %2647 = vdwg.mxu0
        %v2648 = vadd.f32 %v2562, %v2625
        %v2649 = vadd.f32 %v2563, %v2628
        %v2650 = vadd.f32 %v2564, %v2631
        %v2651 = vadd.f32 %v2565, %v2634
        %v2652 = vadd.f32 %v2566, %v2637
        %v2653 = vadd.f32 %v2567, %v2640
        %v2654 = vadd.f32 %v2568, %v2643
        %v2655 = vadd.f32 %v2569, %v2646
        %v2656 = vmul.f32 %v2039, %v1374
        %v2657 = vmul.f32 %v2040, %v1379
        %v2658 = vmul.f32 %v2041, %v1384
        %v2659 = vmul.f32 %v2042, %v1389
        %v2660 = vmul.f32 %v2043, %v1394
        %v2661 = vmul.f32 %v2044, %v1399
        %v2662 = vmul.f32 %v2045, %v1404
        %v2663 = vmul.f32 %v2038, %v1409
        %s2664 = scalar_lea.vmem [#allocation5], 800
        %v2665 = vld [vmem:[%s2664] sm:$0xff]
        %v2666 = vld [vmem:[%s2664 + $0x8] sm:$0xff]
        %v2667 = vld [vmem:[%s2664 + $0x10] sm:$0xff]
        %v2668 = vld [vmem:[%s2664 + $0x18] sm:$0xff]
        %v2670 = vsel %vm596, %v2656, 0
        %v2673 = vsel %vm596, %v2657, 0
        %v2676 = vsel %vm596, %v2658, 0
        %v2679 = vsel %vm596, %v2659, 0
        %v2682 = vsel %vm596, %v2660, 0
        %v2685 = vsel %vm596, %v2661, 0
        %v2688 = vsel %vm596, %v2662, 0
        %v2691 = vsel %vm596, %v2663, 0
        %2693 = vmatpush.msra.mxu0 0.0
        %2694 = vmatpush.msra.mxu0 0.0
        %2695 = vmatpush.msra.mxu0 0.0
        %2696 = vmatpush.msra.mxu0 0.0
        %2697 = vmatpush.msra.mxu0 0.0
        %2698 = vmatpush.msra.mxu0 0.0
        %2699 = vmatpush.msra.mxu0 0.0
        %2700 = vmatpush.msra.mxu0 0.0
        %2701 = vmatpush.msra.mxu0 0.0
        %2702 = vmatpush.msra.mxu0 0.0
        %2703 = vmatpush.msra.mxu0 0.0
        %2704 = vmatpush.msra.mxu0 0.0
        %2705 = vmatpush.msra.mxu0 %v2668
        %2706 = vmatpush.msra.mxu0 %v2667
        %2707 = vmatpush.msra.mxu0 %v2666
        %2708 = vmatpush.msra.mxu0 %v2665
        %2709 = vmatmul.f32.gmra.mxu0 %v2670
        %v2710 = vpop.f32.mrf.mxu0
        %v2711 = vadd.f32 0.0, %v2710
        %2712 = vmatmul.f32.gmra.mxu0 %v2673
        %v2713 = vpop.f32.mrf.mxu0
        %v2714 = vadd.f32 0.0, %v2713
        %2715 = vmatmul.f32.gmra.mxu0 %v2676
        %v2716 = vpop.f32.mrf.mxu0
        %v2717 = vadd.f32 0.0, %v2716
        %2718 = vmatmul.f32.gmra.mxu0 %v2679
        %v2719 = vpop.f32.mrf.mxu0
        %v2720 = vadd.f32 0.0, %v2719
        %2721 = vmatmul.f32.gmra.mxu0 %v2682
        %v2722 = vpop.f32.mrf.mxu0
        %v2723 = vadd.f32 0.0, %v2722
        %2724 = vmatmul.f32.gmra.mxu0 %v2685
        %v2725 = vpop.f32.mrf.mxu0
        %v2726 = vadd.f32 0.0, %v2725
        %2727 = vmatmul.f32.gmra.mxu0 %v2688
        %v2728 = vpop.f32.mrf.mxu0
        %v2729 = vadd.f32 0.0, %v2728
        %2730 = vmatmul.f32.gmra.mxu0 %v2691
        %v2731 = vpop.f32.mrf.mxu0
        %v2732 = vadd.f32 0.0, %v2731
        %2733 = vdwg.mxu0
        %v2734 = vadd.f32 %v2648, %v2711
        %v2735 = vadd.f32 %v2649, %v2714
        %v2736 = vadd.f32 %v2650, %v2717
        %v2737 = vadd.f32 %v2651, %v2720
        %v2738 = vadd.f32 %v2652, %v2723
        %v2739 = vadd.f32 %v2653, %v2726
        %v2740 = vadd.f32 %v2654, %v2729
        %v2741 = vadd.f32 %v2655, %v2732
        %v2742 = vmul.f32 %v2231, %v1509
        %v2743 = vmul.f32 %v2230, %v1514
        %v2744 = vmul.f32 %v2229, %v1519
        %v2745 = vmul.f32 %v2228, %v1524
        %v2746 = vmul.f32 %v2227, %v1529
        %v2747 = vmul.f32 %v2226, %v1534
        %v2748 = vmul.f32 %v2233, %v1539
        %v2749 = vmul.f32 %v2232, %v1544
        %s2750 = scalar_lea.vmem [#allocation5], 832
        %v2751 = vld [vmem:[%s2750] sm:$0xff]
        %v2752 = vld [vmem:[%s2750 + $0x8] sm:$0xff]
        %v2753 = vld [vmem:[%s2750 + $0x10] sm:$0xff]
        %v2754 = vld [vmem:[%s2750 + $0x18] sm:$0xff]
        %v2756 = vsel %vm596, %v2742, 0
        %v2759 = vsel %vm596, %v2743, 0
        %v2762 = vsel %vm596, %v2744, 0
        %v2765 = vsel %vm596, %v2745, 0
        %v2768 = vsel %vm596, %v2746, 0
        %v2771 = vsel %vm596, %v2747, 0
        %v2774 = vsel %vm596, %v2748, 0
        %v2777 = vsel %vm596, %v2749, 0
        %2779 = vmatpush.msra.mxu0 0.0
        %2780 = vmatpush.msra.mxu0 0.0
        %2781 = vmatpush.msra.mxu0 0.0
        %2782 = vmatpush.msra.mxu0 0.0
        %2783 = vmatpush.msra.mxu0 0.0
        %2784 = vmatpush.msra.mxu0 0.0
        %2785 = vmatpush.msra.mxu0 0.0
        %2786 = vmatpush.msra.mxu0 0.0
        %2787 = vmatpush.msra.mxu0 0.0
        %2788 = vmatpush.msra.mxu0 0.0
        %2789 = vmatpush.msra.mxu0 0.0
        %2790 = vmatpush.msra.mxu0 0.0
        %2791 = vmatpush.msra.mxu0 %v2754
        %2792 = vmatpush.msra.mxu0 %v2753
        %2793 = vmatpush.msra.mxu0 %v2752
        %2794 = vmatpush.msra.mxu0 %v2751
        %2795 = vmatmul.f32.gmra.mxu0 %v2756
        %v2796 = vpop.f32.mrf.mxu0
        %v2797 = vadd.f32 0.0, %v2796
        %2798 = vmatmul.f32.gmra.mxu0 %v2759
        %v2799 = vpop.f32.mrf.mxu0
        %v2800 = vadd.f32 0.0, %v2799
        %2801 = vmatmul.f32.gmra.mxu0 %v2762
        %v2802 = vpop.f32.mrf.mxu0
        %v2803 = vadd.f32 0.0, %v2802
        %2804 = vmatmul.f32.gmra.mxu0 %v2765
        %v2805 = vpop.f32.mrf.mxu0
        %v2806 = vadd.f32 0.0, %v2805
        %2807 = vmatmul.f32.gmra.mxu0 %v2768
        %v2808 = vpop.f32.mrf.mxu0
        %v2809 = vadd.f32 0.0, %v2808
        %2810 = vmatmul.f32.gmra.mxu0 %v2771
        %v2811 = vpop.f32.mrf.mxu0
        %v2812 = vadd.f32 0.0, %v2811
        %2813 = vmatmul.f32.gmra.mxu0 %v2774
        %v2814 = vpop.f32.mrf.mxu0
        %v2815 = vadd.f32 0.0, %v2814
        %2816 = vmatmul.f32.gmra.mxu0 %v2777
        %v2817 = vpop.f32.mrf.mxu0
        %v2818 = vadd.f32 0.0, %v2817
        %2819 = vdwg.mxu0
        %v2820 = vadd.f32 %v2734, %v2797
        %v2821 = vadd.f32 %v2735, %v2800
        %v2822 = vadd.f32 %v2736, %v2803
        %v2823 = vadd.f32 %v2737, %v2806
        %v2824 = vadd.f32 %v2738, %v2809
        %v2825 = vadd.f32 %v2739, %v2812
        %v2826 = vadd.f32 %v2740, %v2815
        %v2827 = vadd.f32 %v2741, %v2818
        %s2828 = scalar_lea.vmem %s4, 2
        %v2829 = vld [vmem:[%s2828] sm:$0x1]
        %v2831 = vperm.slane %v2829, 0
        %v2833 = vmul.f32 %v2820, %v2831
        %v2834 = vmul.f32 %v2821, %v2831
        %v2835 = vmul.f32 %v2822, %v2831
        %v2836 = vmul.f32 %v2823, %v2831
        %v2837 = vmul.f32 %v2824, %v2831
        %v2838 = vmul.f32 %v2825, %v2831
        %v2839 = vmul.f32 %v2826, %v2831
        %v2840 = vmul.f32 %v2827, %v2831
        %s2841 = scalar_lea.vmem %s5, 2
        %v2842 = vld [vmem:[%s2841] sm:$0x1]
        %v2844 = vperm.slane %v2842, 0
        %v2846 = vadd.f32 %v2833, %v2844
        %v2847 = vadd.f32 %v2834, %v2844
        %v2848 = vadd.f32 %v2835, %v2844
        %v2849 = vadd.f32 %v2836, %v2844
        %v2850 = vadd.f32 %v2837, %v2844
        %v2851 = vadd.f32 %v2838, %v2844
        %v2852 = vadd.f32 %v2839, %v2844
        %v2853 = vadd.f32 %v2840, %v2844
        %v2854 = vmax.f32 %v2846, 0.0
        %v2855 = vmax.f32 %v2847, 0.0
        %v2856 = vmax.f32 %v2848, 0.0
        %v2857 = vmax.f32 %v2849, 0.0
        %v2858 = vmax.f32 %v2850, 0.0
        %v2859 = vmax.f32 %v2851, 0.0
        %v2860 = vmax.f32 %v2852, 0.0
        %v2861 = vmax.f32 %v2853, 0.0
        %s2862 = scalar_lea.vmem [#allocation5], 288
        %v2863 = vld [vmem:[%s2862] sm:$0xff]
        %v2864 = vld [vmem:[%s2862 + $0x8] sm:$0xff]
        %v2865 = vld [vmem:[%s2862 + $0x10] sm:$0xff]
        %v2866 = vld [vmem:[%s2862 + $0x18] sm:$0xff]
        %s2867 = scalar_lea.vmem [#allocation5], 320
        %v2868 = vld [vmem:[%s2867] sm:$0xff]
        %v2869 = vld [vmem:[%s2867 + $0x8] sm:$0xff]
        %v2870 = vld [vmem:[%s2867 + $0x10] sm:$0xff]
        %v2871 = vld [vmem:[%s2867 + $0x18] sm:$0xff]
        %2872 = vmatpush.msra.mxu0 0.0
        %2873 = vmatpush.msra.mxu0 0.0
        %2874 = vmatpush.msra.mxu0 0.0
        %2875 = vmatpush.msra.mxu0 0.0
        %2876 = vmatpush.msra.mxu0 0.0
        %2877 = vmatpush.msra.mxu0 0.0
        %2878 = vmatpush.msra.mxu0 0.0
        %2879 = vmatpush.msra.mxu0 0.0
        %2880 = vmatpush.msra.mxu0 0.0
        %2881 = vmatpush.msra.mxu0 0.0
        %2882 = vmatpush.msra.mxu0 0.0
        %2883 = vmatpush.msra.mxu0 0.0
        %2884 = vmatpush.msra.mxu0 %v2871
        %2885 = vmatpush.msra.mxu0 %v2870
        %2886 = vmatpush.msra.mxu0 %v2869
        %2887 = vmatpush.msra.mxu0 %v2868
        %2888 = vmatmul.f32.gmra.mxu0 %v598
        %v2889 = vpop.f32.mrf.mxu0
        %v2890 = vadd.f32 0.0, %v2889
        %2891 = vmatmul.f32.gmra.mxu0 %v601
        %v2892 = vpop.f32.mrf.mxu0
        %v2893 = vadd.f32 0.0, %v2892
        %2894 = vmatmul.f32.gmra.mxu0 %v604
        %v2895 = vpop.f32.mrf.mxu0
        %v2896 = vadd.f32 0.0, %v2895
        %2897 = vmatmul.f32.gmra.mxu0 %v607
        %v2898 = vpop.f32.mrf.mxu0
        %v2899 = vadd.f32 0.0, %v2898
        %2900 = vmatmul.f32.gmra.mxu0 %v610
        %v2901 = vpop.f32.mrf.mxu0
        %v2902 = vadd.f32 0.0, %v2901
        %2903 = vmatmul.f32.gmra.mxu0 %v613
        %v2904 = vpop.f32.mrf.mxu0
        %v2905 = vadd.f32 0.0, %v2904
        %2906 = vmatmul.f32.gmra.mxu0 %v616
        %v2907 = vpop.f32.mrf.mxu0
        %v2908 = vadd.f32 0.0, %v2907
        %2909 = vmatmul.f32.gmra.mxu0 %v619
        %v2910 = vpop.f32.mrf.mxu0
        %v2911 = vadd.f32 0.0, %v2910
        %2912 = vdwg.mxu0
        %2913 = vmatpush.msra.mxu0 0.0
        %2914 = vmatpush.msra.mxu0 0.0
        %2915 = vmatpush.msra.mxu0 0.0
        %2916 = vmatpush.msra.mxu0 0.0
        %2917 = vmatpush.msra.mxu0 0.0
        %2918 = vmatpush.msra.mxu0 0.0
        %2919 = vmatpush.msra.mxu0 0.0
        %2920 = vmatpush.msra.mxu0 0.0
        %2921 = vmatpush.msra.mxu0 0.0
        %2922 = vmatpush.msra.mxu0 0.0
        %2923 = vmatpush.msra.mxu0 0.0
        %2924 = vmatpush.msra.mxu0 0.0
        %2925 = vmatpush.msra.mxu0 %v2866
        %2926 = vmatpush.msra.mxu0 %v2865
        %2927 = vmatpush.msra.mxu0 %v2864
        %2928 = vmatpush.msra.mxu0 %v2863
        %2929 = vmatmul.f32.gmra.mxu0 %v663
        %v2930 = vpop.f32.mrf.mxu0
        %v2931 = vadd.f32 %v2890, %v2930
        %2932 = vmatmul.f32.gmra.mxu0 %v666
        %v2933 = vpop.f32.mrf.mxu0
        %v2934 = vadd.f32 %v2893, %v2933
        %2935 = vmatmul.f32.gmra.mxu0 %v669
        %v2936 = vpop.f32.mrf.mxu0
        %v2937 = vadd.f32 %v2896, %v2936
        %2938 = vmatmul.f32.gmra.mxu0 %v672
        %v2939 = vpop.f32.mrf.mxu0
        %v2940 = vadd.f32 %v2899, %v2939
        %2941 = vmatmul.f32.gmra.mxu0 %v675
        %v2942 = vpop.f32.mrf.mxu0
        %v2943 = vadd.f32 %v2902, %v2942
        %2944 = vmatmul.f32.gmra.mxu0 %v678
        %v2945 = vpop.f32.mrf.mxu0
        %v2946 = vadd.f32 %v2905, %v2945
        %2947 = vmatmul.f32.gmra.mxu0 %v681
        %v2948 = vpop.f32.mrf.mxu0
        %v2949 = vadd.f32 %v2908, %v2948
        %2950 = vmatmul.f32.gmra.mxu0 %v684
        %v2951 = vpop.f32.mrf.mxu0
        %v2952 = vadd.f32 %v2911, %v2951
        %2953 = vdwg.mxu0
        %s2954 = scalar_lea.vmem [#allocation5], 352
        %v2955 = vld [vmem:[%s2954] sm:$0xff]
        %v2956 = vld [vmem:[%s2954 + $0x8] sm:$0xff]
        %v2957 = vld [vmem:[%s2954 + $0x10] sm:$0xff]
        %v2958 = vld [vmem:[%s2954 + $0x18] sm:$0xff]
        %2959 = vmatpush.msra.mxu0 0.0
        %2960 = vmatpush.msra.mxu0 0.0
        %2961 = vmatpush.msra.mxu0 0.0
        %2962 = vmatpush.msra.mxu0 0.0
        %2963 = vmatpush.msra.mxu0 0.0
        %2964 = vmatpush.msra.mxu0 0.0
        %2965 = vmatpush.msra.mxu0 0.0
        %2966 = vmatpush.msra.mxu0 0.0
        %2967 = vmatpush.msra.mxu0 0.0
        %2968 = vmatpush.msra.mxu0 0.0
        %2969 = vmatpush.msra.mxu0 0.0
        %2970 = vmatpush.msra.mxu0 0.0
        %2971 = vmatpush.msra.mxu0 %v2958
        %2972 = vmatpush.msra.mxu0 %v2957
        %2973 = vmatpush.msra.mxu0 %v2956
        %2974 = vmatpush.msra.mxu0 %v2955
        %2975 = vmatmul.f32.gmra.mxu0 %v807
        %v2976 = vpop.f32.mrf.mxu0
        %v2977 = vadd.f32 0.0, %v2976
        %2978 = vmatmul.f32.gmra.mxu0 %v810
        %v2979 = vpop.f32.mrf.mxu0
        %v2980 = vadd.f32 0.0, %v2979
        %2981 = vmatmul.f32.gmra.mxu0 %v813
        %v2982 = vpop.f32.mrf.mxu0
        %v2983 = vadd.f32 0.0, %v2982
        %2984 = vmatmul.f32.gmra.mxu0 %v816
        %v2985 = vpop.f32.mrf.mxu0
        %v2986 = vadd.f32 0.0, %v2985
        %2987 = vmatmul.f32.gmra.mxu0 %v819
        %v2988 = vpop.f32.mrf.mxu0
        %v2989 = vadd.f32 0.0, %v2988
        %2990 = vmatmul.f32.gmra.mxu0 %v822
        %v2991 = vpop.f32.mrf.mxu0
        %v2992 = vadd.f32 0.0, %v2991
        %2993 = vmatmul.f32.gmra.mxu0 %v825
        %v2994 = vpop.f32.mrf.mxu0
        %v2995 = vadd.f32 0.0, %v2994
        %2996 = vmatmul.f32.gmra.mxu0 %v828
        %v2997 = vpop.f32.mrf.mxu0
        %v2998 = vadd.f32 0.0, %v2997
        %2999 = vdwg.mxu0
        %v3000 = vadd.f32 %v2931, %v2977
        %v3001 = vadd.f32 %v2934, %v2980
        %v3002 = vadd.f32 %v2937, %v2983
        %v3003 = vadd.f32 %v2940, %v2986
        %v3004 = vadd.f32 %v2943, %v2989
        %v3005 = vadd.f32 %v2946, %v2992
        %v3006 = vadd.f32 %v2949, %v2995
        %v3007 = vadd.f32 %v2952, %v2998
        %s3008 = scalar_lea.vmem [#allocation5], 384
        %v3009 = vld [vmem:[%s3008] sm:$0xff]
        %v3010 = vld [vmem:[%s3008 + $0x8] sm:$0xff]
        %v3011 = vld [vmem:[%s3008 + $0x10] sm:$0xff]
        %v3012 = vld [vmem:[%s3008 + $0x18] sm:$0xff]
        %3013 = vmatpush.msra.mxu0 0.0
        %3014 = vmatpush.msra.mxu0 0.0
        %3015 = vmatpush.msra.mxu0 0.0
        %3016 = vmatpush.msra.mxu0 0.0
        %3017 = vmatpush.msra.mxu0 0.0
        %3018 = vmatpush.msra.mxu0 0.0
        %3019 = vmatpush.msra.mxu0 0.0
        %3020 = vmatpush.msra.mxu0 0.0
        %3021 = vmatpush.msra.mxu0 0.0
        %3022 = vmatpush.msra.mxu0 0.0
        %3023 = vmatpush.msra.mxu0 0.0
        %3024 = vmatpush.msra.mxu0 0.0
        %3025 = vmatpush.msra.mxu0 %v3012
        %3026 = vmatpush.msra.mxu0 %v3011
        %3027 = vmatpush.msra.mxu0 %v3010
        %3028 = vmatpush.msra.mxu0 %v3009
        %3029 = vmatmul.f32.gmra.mxu0 %v942
        %v3030 = vpop.f32.mrf.mxu0
        %v3031 = vadd.f32 0.0, %v3030
        %3032 = vmatmul.f32.gmra.mxu0 %v945
        %v3033 = vpop.f32.mrf.mxu0
        %v3034 = vadd.f32 0.0, %v3033
        %3035 = vmatmul.f32.gmra.mxu0 %v948
        %v3036 = vpop.f32.mrf.mxu0
        %v3037 = vadd.f32 0.0, %v3036
        %3038 = vmatmul.f32.gmra.mxu0 %v951
        %v3039 = vpop.f32.mrf.mxu0
        %v3040 = vadd.f32 0.0, %v3039
        %3041 = vmatmul.f32.gmra.mxu0 %v954
        %v3042 = vpop.f32.mrf.mxu0
        %v3043 = vadd.f32 0.0, %v3042
        %3044 = vmatmul.f32.gmra.mxu0 %v957
        %v3045 = vpop.f32.mrf.mxu0
        %v3046 = vadd.f32 0.0, %v3045
        %3047 = vmatmul.f32.gmra.mxu0 %v960
        %v3048 = vpop.f32.mrf.mxu0
        %v3049 = vadd.f32 0.0, %v3048
        %3050 = vmatmul.f32.gmra.mxu0 %v963
        %v3051 = vpop.f32.mrf.mxu0
        %v3052 = vadd.f32 0.0, %v3051
        %3053 = vdwg.mxu0
        %v3054 = vadd.f32 %v3000, %v3031
        %v3055 = vadd.f32 %v3001, %v3034
        %v3056 = vadd.f32 %v3002, %v3037
        %v3057 = vadd.f32 %v3003, %v3040
        %v3058 = vadd.f32 %v3004, %v3043
        %v3059 = vadd.f32 %v3005, %v3046
        %v3060 = vadd.f32 %v3006, %v3049
        %v3061 = vadd.f32 %v3007, %v3052
        %s3062 = scalar_lea.vmem [#allocation5], 416
        %v3063 = vld [vmem:[%s3062] sm:$0xff]
        %v3064 = vld [vmem:[%s3062 + $0x8] sm:$0xff]
        %v3065 = vld [vmem:[%s3062 + $0x10] sm:$0xff]
        %v3066 = vld [vmem:[%s3062 + $0x18] sm:$0xff]
        %3067 = vmatpush.msra.mxu0 0.0
        %3068 = vmatpush.msra.mxu0 0.0
        %3069 = vmatpush.msra.mxu0 0.0
        %3070 = vmatpush.msra.mxu0 0.0
        %3071 = vmatpush.msra.mxu0 0.0
        %3072 = vmatpush.msra.mxu0 0.0
        %3073 = vmatpush.msra.mxu0 0.0
        %3074 = vmatpush.msra.mxu0 0.0
        %3075 = vmatpush.msra.mxu0 0.0
        %3076 = vmatpush.msra.mxu0 0.0
        %3077 = vmatpush.msra.mxu0 0.0
        %3078 = vmatpush.msra.mxu0 0.0
        %3079 = vmatpush.msra.mxu0 %v3066
        %3080 = vmatpush.msra.mxu0 %v3065
        %3081 = vmatpush.msra.mxu0 %v3064
        %3082 = vmatpush.msra.mxu0 %v3063
        %3083 = vmatmul.f32.gmra.mxu0 %v1020
        %v3084 = vpop.f32.mrf.mxu0
        %v3085 = vadd.f32 0.0, %v3084
        %3086 = vmatmul.f32.gmra.mxu0 %v1023
        %v3087 = vpop.f32.mrf.mxu0
        %v3088 = vadd.f32 0.0, %v3087
        %3089 = vmatmul.f32.gmra.mxu0 %v1026
        %v3090 = vpop.f32.mrf.mxu0
        %v3091 = vadd.f32 0.0, %v3090
        %3092 = vmatmul.f32.gmra.mxu0 %v1029
        %v3093 = vpop.f32.mrf.mxu0
        %v3094 = vadd.f32 0.0, %v3093
        %3095 = vmatmul.f32.gmra.mxu0 %v1032
        %v3096 = vpop.f32.mrf.mxu0
        %v3097 = vadd.f32 0.0, %v3096
        %3098 = vmatmul.f32.gmra.mxu0 %v1035
        %v3099 = vpop.f32.mrf.mxu0
        %v3100 = vadd.f32 0.0, %v3099
        %3101 = vmatmul.f32.gmra.mxu0 %v1038
        %v3102 = vpop.f32.mrf.mxu0
        %v3103 = vadd.f32 0.0, %v3102
        %3104 = vmatmul.f32.gmra.mxu0 %v1041
        %v3105 = vpop.f32.mrf.mxu0
        %v3106 = vadd.f32 0.0, %v3105
        %3107 = vdwg.mxu0
        %v3108 = vadd.f32 %v3054, %v3085
        %v3109 = vadd.f32 %v3055, %v3088
        %v3110 = vadd.f32 %v3056, %v3091
        %v3111 = vadd.f32 %v3057, %v3094
        %v3112 = vadd.f32 %v3058, %v3097
        %v3113 = vadd.f32 %v3059, %v3100
        %v3114 = vadd.f32 %v3060, %v3103
        %v3115 = vadd.f32 %v3061, %v3106
        %s3116 = scalar_lea.vmem [#allocation5], 448
        %v3117 = vld [vmem:[%s3116] sm:$0xff]
        %v3118 = vld [vmem:[%s3116 + $0x8] sm:$0xff]
        %v3119 = vld [vmem:[%s3116 + $0x10] sm:$0xff]
        %v3120 = vld [vmem:[%s3116 + $0x18] sm:$0xff]
        %3121 = vmatpush.msra.mxu0 0.0
        %3122 = vmatpush.msra.mxu0 0.0
        %3123 = vmatpush.msra.mxu0 0.0
        %3124 = vmatpush.msra.mxu0 0.0
        %3125 = vmatpush.msra.mxu0 0.0
        %3126 = vmatpush.msra.mxu0 0.0
        %3127 = vmatpush.msra.mxu0 0.0
        %3128 = vmatpush.msra.mxu0 0.0
        %3129 = vmatpush.msra.mxu0 0.0
        %3130 = vmatpush.msra.mxu0 0.0
        %3131 = vmatpush.msra.mxu0 0.0
        %3132 = vmatpush.msra.mxu0 0.0
        %3133 = vmatpush.msra.mxu0 %v3120
        %3134 = vmatpush.msra.mxu0 %v3119
        %3135 = vmatpush.msra.mxu0 %v3118
        %3136 = vmatpush.msra.mxu0 %v3117
        %3137 = vmatmul.f32.gmra.mxu0 %v1155
        %v3138 = vpop.f32.mrf.mxu0
        %v3139 = vadd.f32 0.0, %v3138
        %3140 = vmatmul.f32.gmra.mxu0 %v1158
        %v3141 = vpop.f32.mrf.mxu0
        %v3142 = vadd.f32 0.0, %v3141
        %3143 = vmatmul.f32.gmra.mxu0 %v1161
        %v3144 = vpop.f32.mrf.mxu0
        %v3145 = vadd.f32 0.0, %v3144
        %3146 = vmatmul.f32.gmra.mxu0 %v1164
        %v3147 = vpop.f32.mrf.mxu0
        %v3148 = vadd.f32 0.0, %v3147
        %3149 = vmatmul.f32.gmra.mxu0 %v1167
        %v3150 = vpop.f32.mrf.mxu0
        %v3151 = vadd.f32 0.0, %v3150
        %3152 = vmatmul.f32.gmra.mxu0 %v1170
        %v3153 = vpop.f32.mrf.mxu0
        %v3154 = vadd.f32 0.0, %v3153
        %3155 = vmatmul.f32.gmra.mxu0 %v1173
        %v3156 = vpop.f32.mrf.mxu0
        %v3157 = vadd.f32 0.0, %v3156
        %3158 = vmatmul.f32.gmra.mxu0 %v1176
        %v3159 = vpop.f32.mrf.mxu0
        %v3160 = vadd.f32 0.0, %v3159
        %3161 = vdwg.mxu0
        %v3162 = vadd.f32 %v3108, %v3139
        %v3163 = vadd.f32 %v3109, %v3142
        %v3164 = vadd.f32 %v3110, %v3145
        %v3165 = vadd.f32 %v3111, %v3148
        %v3166 = vadd.f32 %v3112, %v3151
        %v3167 = vadd.f32 %v3113, %v3154
        %v3168 = vadd.f32 %v3114, %v3157
        %v3169 = vadd.f32 %v3115, %v3160
        %s3170 = scalar_lea.vmem [#allocation5], 480
        %v3171 = vld [vmem:[%s3170] sm:$0xff]
        %v3172 = vld [vmem:[%s3170 + $0x8] sm:$0xff]
        %v3173 = vld [vmem:[%s3170 + $0x10] sm:$0xff]
        %v3174 = vld [vmem:[%s3170 + $0x18] sm:$0xff]
        %3175 = vmatpush.msra.mxu0 0.0
        %3176 = vmatpush.msra.mxu0 0.0
        %3177 = vmatpush.msra.mxu0 0.0
        %3178 = vmatpush.msra.mxu0 0.0
        %3179 = vmatpush.msra.mxu0 0.0
        %3180 = vmatpush.msra.mxu0 0.0
        %3181 = vmatpush.msra.mxu0 0.0
        %3182 = vmatpush.msra.mxu0 0.0
        %3183 = vmatpush.msra.mxu0 0.0
        %3184 = vmatpush.msra.mxu0 0.0
        %3185 = vmatpush.msra.mxu0 0.0
        %3186 = vmatpush.msra.mxu0 0.0
        %3187 = vmatpush.msra.mxu0 %v3174
        %3188 = vmatpush.msra.mxu0 %v3173
        %3189 = vmatpush.msra.mxu0 %v3172
        %3190 = vmatpush.msra.mxu0 %v3171
        %3191 = vmatmul.f32.gmra.mxu0 %v1290
        %v3192 = vpop.f32.mrf.mxu0
        %v3193 = vadd.f32 0.0, %v3192
        %3194 = vmatmul.f32.gmra.mxu0 %v1293
        %v3195 = vpop.f32.mrf.mxu0
        %v3196 = vadd.f32 0.0, %v3195
        %3197 = vmatmul.f32.gmra.mxu0 %v1296
        %v3198 = vpop.f32.mrf.mxu0
        %v3199 = vadd.f32 0.0, %v3198
        %3200 = vmatmul.f32.gmra.mxu0 %v1299
        %v3201 = vpop.f32.mrf.mxu0
        %v3202 = vadd.f32 0.0, %v3201
        %3203 = vmatmul.f32.gmra.mxu0 %v1302
        %v3204 = vpop.f32.mrf.mxu0
        %v3205 = vadd.f32 0.0, %v3204
        %3206 = vmatmul.f32.gmra.mxu0 %v1305
        %v3207 = vpop.f32.mrf.mxu0
        %v3208 = vadd.f32 0.0, %v3207
        %3209 = vmatmul.f32.gmra.mxu0 %v1308
        %v3210 = vpop.f32.mrf.mxu0
        %v3211 = vadd.f32 0.0, %v3210
        %3212 = vmatmul.f32.gmra.mxu0 %v1311
        %v3213 = vpop.f32.mrf.mxu0
        %v3214 = vadd.f32 0.0, %v3213
        %3215 = vdwg.mxu0
        %v3216 = vadd.f32 %v3162, %v3193
        %v3217 = vadd.f32 %v3163, %v3196
        %v3218 = vadd.f32 %v3164, %v3199
        %v3219 = vadd.f32 %v3165, %v3202
        %v3220 = vadd.f32 %v3166, %v3205
        %v3221 = vadd.f32 %v3167, %v3208
        %v3222 = vadd.f32 %v3168, %v3211
        %v3223 = vadd.f32 %v3169, %v3214
        %s3224 = scalar_lea.vmem [#allocation5], 512
        %v3225 = vld [vmem:[%s3224] sm:$0xff]
        %v3226 = vld [vmem:[%s3224 + $0x8] sm:$0xff]
        %v3227 = vld [vmem:[%s3224 + $0x10] sm:$0xff]
        %v3228 = vld [vmem:[%s3224 + $0x18] sm:$0xff]
        %3229 = vmatpush.msra.mxu0 0.0
        %3230 = vmatpush.msra.mxu0 0.0
        %3231 = vmatpush.msra.mxu0 0.0
        %3232 = vmatpush.msra.mxu0 0.0
        %3233 = vmatpush.msra.mxu0 0.0
        %3234 = vmatpush.msra.mxu0 0.0
        %3235 = vmatpush.msra.mxu0 0.0
        %3236 = vmatpush.msra.mxu0 0.0
        %3237 = vmatpush.msra.mxu0 0.0
        %3238 = vmatpush.msra.mxu0 0.0
        %3239 = vmatpush.msra.mxu0 0.0
        %3240 = vmatpush.msra.mxu0 0.0
        %3241 = vmatpush.msra.mxu0 %v3228
        %3242 = vmatpush.msra.mxu0 %v3227
        %3243 = vmatpush.msra.mxu0 %v3226
        %3244 = vmatpush.msra.mxu0 %v3225
        %3245 = vmatmul.f32.gmra.mxu0 %v1425
        %v3246 = vpop.f32.mrf.mxu0
        %v3247 = vadd.f32 0.0, %v3246
        %3248 = vmatmul.f32.gmra.mxu0 %v1428
        %v3249 = vpop.f32.mrf.mxu0
        %v3250 = vadd.f32 0.0, %v3249
        %3251 = vmatmul.f32.gmra.mxu0 %v1431
        %v3252 = vpop.f32.mrf.mxu0
        %v3253 = vadd.f32 0.0, %v3252
        %3254 = vmatmul.f32.gmra.mxu0 %v1434
        %v3255 = vpop.f32.mrf.mxu0
        %v3256 = vadd.f32 0.0, %v3255
        %3257 = vmatmul.f32.gmra.mxu0 %v1437
        %v3258 = vpop.f32.mrf.mxu0
        %v3259 = vadd.f32 0.0, %v3258
        %3260 = vmatmul.f32.gmra.mxu0 %v1440
        %v3261 = vpop.f32.mrf.mxu0
        %v3262 = vadd.f32 0.0, %v3261
        %3263 = vmatmul.f32.gmra.mxu0 %v1443
        %v3264 = vpop.f32.mrf.mxu0
        %v3265 = vadd.f32 0.0, %v3264
        %3266 = vmatmul.f32.gmra.mxu0 %v1446
        %v3267 = vpop.f32.mrf.mxu0
        %v3268 = vadd.f32 0.0, %v3267
        %3269 = vdwg.mxu0
        %v3270 = vadd.f32 %v3216, %v3247
        %v3271 = vadd.f32 %v3217, %v3250
        %v3272 = vadd.f32 %v3218, %v3253
        %v3273 = vadd.f32 %v3219, %v3256
        %v3274 = vadd.f32 %v3220, %v3259
        %v3275 = vadd.f32 %v3221, %v3262
        %v3276 = vadd.f32 %v3222, %v3265
        %v3277 = vadd.f32 %v3223, %v3268
        %s3278 = scalar_lea.vmem [#allocation5], 544
        %v3279 = vld [vmem:[%s3278] sm:$0xff]
        %v3280 = vld [vmem:[%s3278 + $0x8] sm:$0xff]
        %v3281 = vld [vmem:[%s3278 + $0x10] sm:$0xff]
        %v3282 = vld [vmem:[%s3278 + $0x18] sm:$0xff]
        %3283 = vmatpush.msra.mxu0 0.0
        %3284 = vmatpush.msra.mxu0 0.0
        %3285 = vmatpush.msra.mxu0 0.0
        %3286 = vmatpush.msra.mxu0 0.0
        %3287 = vmatpush.msra.mxu0 0.0
        %3288 = vmatpush.msra.mxu0 0.0
        %3289 = vmatpush.msra.mxu0 0.0
        %3290 = vmatpush.msra.mxu0 0.0
        %3291 = vmatpush.msra.mxu0 0.0
        %3292 = vmatpush.msra.mxu0 0.0
        %3293 = vmatpush.msra.mxu0 0.0
        %3294 = vmatpush.msra.mxu0 0.0
        %3295 = vmatpush.msra.mxu0 %v3282
        %3296 = vmatpush.msra.mxu0 %v3281
        %3297 = vmatpush.msra.mxu0 %v3280
        %3298 = vmatpush.msra.mxu0 %v3279
        %3299 = vmatmul.f32.gmra.mxu0 %v1560
        %v3300 = vpop.f32.mrf.mxu0
        %v3301 = vadd.f32 0.0, %v3300
        %3302 = vmatmul.f32.gmra.mxu0 %v1563
        %v3303 = vpop.f32.mrf.mxu0
        %v3304 = vadd.f32 0.0, %v3303
        %3305 = vmatmul.f32.gmra.mxu0 %v1566
        %v3306 = vpop.f32.mrf.mxu0
        %v3307 = vadd.f32 0.0, %v3306
        %3308 = vmatmul.f32.gmra.mxu0 %v1569
        %v3309 = vpop.f32.mrf.mxu0
        %v3310 = vadd.f32 0.0, %v3309
        %3311 = vmatmul.f32.gmra.mxu0 %v1572
        %v3312 = vpop.f32.mrf.mxu0
        %v3313 = vadd.f32 0.0, %v3312
        %3314 = vmatmul.f32.gmra.mxu0 %v1575
        %v3315 = vpop.f32.mrf.mxu0
        %v3316 = vadd.f32 0.0, %v3315
        %3317 = vmatmul.f32.gmra.mxu0 %v1578
        %v3318 = vpop.f32.mrf.mxu0
        %v3319 = vadd.f32 0.0, %v3318
        %3320 = vmatmul.f32.gmra.mxu0 %v1581
        %v3321 = vpop.f32.mrf.mxu0
        %v3322 = vadd.f32 0.0, %v3321
        %3323 = vdwg.mxu0
        %v3324 = vadd.f32 %v3270, %v3301
        %v3325 = vadd.f32 %v3271, %v3304
        %v3326 = vadd.f32 %v3272, %v3307
        %v3327 = vadd.f32 %v3273, %v3310
        %v3328 = vadd.f32 %v3274, %v3313
        %v3329 = vadd.f32 %v3275, %v3316
        %v3330 = vadd.f32 %v3276, %v3319
        %v3331 = vadd.f32 %v3277, %v3322
        %s3332 = scalar_lea.vmem %s4, 1
        %v3333 = vld [vmem:[%s3332] sm:$0x1]
        %v3335 = vperm.slane %v3333, 0
        %v3337 = vmul.f32 %v3324, %v3335
        %v3338 = vmul.f32 %v3325, %v3335
        %v3339 = vmul.f32 %v3326, %v3335
        %v3340 = vmul.f32 %v3327, %v3335
        %v3341 = vmul.f32 %v3328, %v3335
        %v3342 = vmul.f32 %v3329, %v3335
        %v3343 = vmul.f32 %v3330, %v3335
        %v3344 = vmul.f32 %v3331, %v3335
        %s3345 = scalar_lea.vmem %s5, 1
        %v3346 = vld [vmem:[%s3345] sm:$0x1]
        %v3348 = vperm.slane %v3346, 0
        %v3350 = vadd.f32 %v3337, %v3348
        %v3351 = vadd.f32 %v3338, %v3348
        %v3352 = vadd.f32 %v3339, %v3348
        %v3353 = vadd.f32 %v3340, %v3348
        %v3354 = vadd.f32 %v3341, %v3348
        %v3355 = vadd.f32 %v3342, %v3348
        %v3356 = vadd.f32 %v3343, %v3348
        %v3357 = vadd.f32 %v3344, %v3348
        %v3358 = vmax.f32 %v3350, 0.0
        %v3359 = vmax.f32 %v3351, 0.0
        %v3360 = vmax.f32 %v3352, 0.0
        %v3361 = vmax.f32 %v3353, 0.0
        %v3362 = vmax.f32 %v3354, 0.0
        %v3363 = vmax.f32 %v3355, 0.0
        %v3364 = vmax.f32 %v3356, 0.0
        %v3365 = vmax.f32 %v3357, 0.0
        %3366 = vxpose.xlu0.b32.start [1/16] %v3358, 128
        %3367 = vxpose.xlu0.b32.cont [2/16] %v3359, 128
        %3368 = vxpose.xlu0.b32.cont [3/16] %v3360, 128
        %3369 = vxpose.xlu0.b32.cont [4/16] %v3361, 128
        %3370 = vxpose.xlu0.b32.cont [5/16] %v3362, 128
        %3371 = vxpose.xlu0.b32.cont [6/16] %v3363, 128
        %3372 = vxpose.xlu0.b32.cont [7/16] %v3364, 128
        %3373 = vxpose.xlu0.b32.cont [8/16] %v3365, 128
        %3374 = vxpose.xlu0.b32.cont [9/16] 0.0, 128
        %3375 = vxpose.xlu0.b32.cont [10/16] 0.0, 128
        %3376 = vxpose.xlu0.b32.cont [11/16] 0.0, 128
        %3377 = vxpose.xlu0.b32.cont [12/16] 0.0, 128
        %3378 = vxpose.xlu0.b32.cont [13/16] 0.0, 128
        %3379 = vxpose.xlu0.b32.cont [14/16] 0.0, 128
        %3380 = vxpose.xlu0.b32.cont [15/16] 0.0, 128
        %3381 = vxpose.xlu0.b32.end [16/16] 0.0, 128
        %v3382 = vpop.trf.xlu0
        %v3383 = vpop.trf.xlu0
        %v3384 = vpop.trf.xlu0
        %v3385 = vpop.trf.xlu0
        %v3386 = vpop.trf.xlu0
        %v3387 = vpop.trf.xlu0
        %v3388 = vpop.trf.xlu0
        %v3389 = vpop.trf.xlu0
        %v3390 = vpop.trf.xlu0
        %v3391 = vpop.trf.xlu0
        %v3392 = vpop.trf.xlu0
        %v3393 = vpop.trf.xlu0
        %v3394 = vpop.trf.xlu0
        %v3395 = vpop.trf.xlu0
        %v3396 = vpop.trf.xlu0
        %v3397 = vpop.trf.xlu0
        %v3399 = vsel %vm1851, %v3382, 0
        %v3402 = vsel %vm1851, %v3383, 0
        %v3405 = vsel %vm1851, %v3384, 0
        %v3408 = vsel %vm1851, %v3385, 0
        %3410 = vmatpush.msra.mxu0 0.0
        %3411 = vmatpush.msra.mxu0 0.0
        %3412 = vmatpush.msra.mxu0 0.0
        %3413 = vmatpush.msra.mxu0 0.0
        %3414 = vmatpush.msra.mxu0 0.0
        %3415 = vmatpush.msra.mxu0 0.0
        %3416 = vmatpush.msra.mxu0 0.0
        %3417 = vmatpush.msra.mxu0 0.0
        %3418 = vmatpush.msra.mxu0 %v3365
        %3419 = vmatpush.msra.mxu0 %v3364
        %3420 = vmatpush.msra.mxu0 %v3363
        %3421 = vmatpush.msra.mxu0 %v3362
        %3422 = vmatpush.msra.mxu0 %v3361
        %3423 = vmatpush.msra.mxu0 %v3360
        %3424 = vmatpush.msra.mxu0 %v3359
        %3425 = vmatpush.msra.mxu0 %v3358
        %3426 = vmatmul.f32.gmra.mxu0 %v3399
        %v3427 = vpop.f32.mrf.mxu0
        %v3428 = vadd.f32 0.0, %v3427
        %3429 = vmatmul.f32.gmra.mxu0 %v3402
        %v3430 = vpop.f32.mrf.mxu0
        %v3431 = vadd.f32 0.0, %v3430
        %3432 = vmatmul.f32.gmra.mxu0 %v3405
        %v3433 = vpop.f32.mrf.mxu0
        %v3434 = vadd.f32 0.0, %v3433
        %3435 = vmatmul.f32.gmra.mxu0 %v3408
        %v3436 = vpop.f32.mrf.mxu0
        %v3437 = vadd.f32 0.0, %v3436
        %3438 = vdwg.mxu0
        %v3439 = vsel %vm596, %v3428, -inf
        %3440 = vmax.xlane.f32.xlu0 %v3439
        %v3441 = vpop.xlane.xlu0 %3440
        %v3442 = vsel %vm596, %v3431, -inf
        %3443 = vmax.xlane.f32.xlu0 %v3442
        %v3444 = vpop.xlane.xlu0 %3443
        %v3445 = vsel %vm596, %v3434, -inf
        %3446 = vmax.xlane.f32.xlu0 %v3445
        %v3447 = vpop.xlane.xlu0 %3446
        %v3448 = vsel %vm596, %v3437, -inf
        %3449 = vmax.xlane.f32.xlu0 %v3448
        %v3450 = vpop.xlane.xlu0 %3449
        %v3451 = vsub.f32 %v3441, %v3428
        %v3452 = vsub.f32 %v3444, %v3431
        %v3453 = vsub.f32 %v3447, %v3434
        %v3454 = vsub.f32 %v3450, %v3437
        %v3455 = vsel %vm596, %v3451, -inf
        %3456 = vmax.xlane.f32.xlu0 %v3455
        %v3457 = vpop.xlane.xlu0 %3456
        %v3458 = vsel %vm596, %v3452, -inf
        %3459 = vmax.xlane.f32.xlu0 %v3458
        %v3460 = vpop.xlane.xlu0 %3459
        %v3461 = vsel %vm596, %v3453, -inf
        %3462 = vmax.xlane.f32.xlu0 %v3461
        %v3463 = vpop.xlane.xlu0 %3462
        %v3464 = vsel %vm596, %v3454, -inf
        %3465 = vmax.xlane.f32.xlu0 %v3464
        %v3466 = vpop.xlane.xlu0 %3465
        %v3467 = vsub.f32 %v3451, %v3457
        %v3468 = vsub.f32 %v3452, %v3460
        %v3469 = vsub.f32 %v3453, %v3463
        %v3470 = vsub.f32 %v3454, %v3466
        %v3471 = vmul.f32 %v3467, 1.442695
        %v3472 = vpow.pop %v3471
        %v3473 = vmul.f32 %v3468, 1.442695
        %v3474 = vpow.pop %v3473
        %v3475 = vmul.f32 %v3469, 1.442695
        %v3476 = vpow.pop %v3475
        %v3477 = vmul.f32 %v3470, 1.442695
        %v3478 = vpow.pop %v3477
        %v3479 = vsel %vm596, %v3472, 0.0
        %3480 = vadd.xlane.f32.xlu0 %v3479
        %v3481 = vpop.xlane.xlu0 %3480
        %v3482 = vsel %vm596, %v3474, 0.0
        %3483 = vadd.xlane.f32.xlu0 %v3482
        %v3484 = vpop.xlane.xlu0 %3483
        %v3485 = vsel %vm596, %v3476, 0.0
        %3486 = vadd.xlane.f32.xlu0 %v3485
        %v3487 = vpop.xlane.xlu0 %3486
        %v3488 = vsel %vm596, %v3478, 0.0
        %3489 = vadd.xlane.f32.xlu0 %v3488
        %v3490 = vpop.xlane.xlu0 %3489
        %v3491 = vrcp.pop %v3481
        %v3492 = vrcp.pop %v3484
        %v3493 = vrcp.pop %v3487
        %v3494 = vrcp.pop %v3490
        %v3495 = vmul.f32 %v3481, %v3491
        %v3496 = vmul.f32 %v3484, %v3492
        %v3497 = vmul.f32 %v3487, %v3493
        %v3498 = vmul.f32 %v3490, %v3494
        %v3499 = vsub.f32 2.0, %v3495
        %v3500 = vsub.f32 2.0, %v3496
        %v3501 = vsub.f32 2.0, %v3497
        %v3502 = vsub.f32 2.0, %v3498
        %v3503 = vmul.f32 %v3491, %v3499
        %v3504 = vmul.f32 %v3492, %v3500
        %v3505 = vmul.f32 %v3493, %v3501
        %v3506 = vmul.f32 %v3494, %v3502
        %v3507 = vmul.f32 %v3472, %v3503
        %v3508 = vmul.f32 %v3474, %v3504
        %v3509 = vmul.f32 %v3476, %v3505
        %v3510 = vmul.f32 %v3478, %v3506
        %v3512 = vsel %vm596, %v3358, 0
        %v3515 = vsel %vm596, %v3359, 0
        %v3518 = vsel %vm596, %v3360, 0
        %v3521 = vsel %vm596, %v3361, 0
        %v3524 = vsel %vm596, %v3362, 0
        %v3527 = vsel %vm596, %v3363, 0
        %v3530 = vsel %vm596, %v3364, 0
        %v3533 = vsel %vm596, %v3365, 0
        %v3536 = vsel %vm596, %v3507, 0
        %v3539 = vsel %vm596, %v3508, 0
        %v3542 = vsel %vm596, %v3509, 0
        %v3545 = vsel %vm596, %v3510, 0
        %3547 = vmatpush.xpose.msra.mxu0 0.0
        %3548 = vmatpush.xpose.msra.mxu0 0.0
        %3549 = vmatpush.xpose.msra.mxu0 0.0
        %3550 = vmatpush.xpose.msra.mxu0 0.0
        %3551 = vmatpush.xpose.msra.mxu0 0.0
        %3552 = vmatpush.xpose.msra.mxu0 0.0
        %3553 = vmatpush.xpose.msra.mxu0 0.0
        %3554 = vmatpush.xpose.msra.mxu0 0.0
        %3555 = vmatpush.xpose.msra.mxu0 0.0
        %3556 = vmatpush.xpose.msra.mxu0 0.0
        %3557 = vmatpush.xpose.msra.mxu0 0.0
        %3558 = vmatpush.xpose.msra.mxu0 0.0
        %3559 = vmatpush.xpose.msra.mxu0 %v3545
        %3560 = vmatpush.xpose.msra.mxu0 %v3542
        %3561 = vmatpush.xpose.msra.mxu0 %v3539
        %3562 = vmatpush.xpose.msra.mxu0 %v3536
        %3563 = vmatmul.f32.gmra.mxu0 %v3512
        %v3564 = vpop.f32.mrf.mxu0
        %v3565 = vadd.f32 0.0, %v3564
        %3566 = vmatmul.f32.gmra.mxu0 %v3515
        %v3567 = vpop.f32.mrf.mxu0
        %v3568 = vadd.f32 0.0, %v3567
        %3569 = vmatmul.f32.gmra.mxu0 %v3518
        %v3570 = vpop.f32.mrf.mxu0
        %v3571 = vadd.f32 0.0, %v3570
        %3572 = vmatmul.f32.gmra.mxu0 %v3521
        %v3573 = vpop.f32.mrf.mxu0
        %v3574 = vadd.f32 0.0, %v3573
        %3575 = vmatmul.f32.gmra.mxu0 %v3524
        %v3576 = vpop.f32.mrf.mxu0
        %v3577 = vadd.f32 0.0, %v3576
        %3578 = vmatmul.f32.gmra.mxu0 %v3527
        %v3579 = vpop.f32.mrf.mxu0
        %v3580 = vadd.f32 0.0, %v3579
        %3581 = vmatmul.f32.gmra.mxu0 %v3530
        %v3582 = vpop.f32.mrf.mxu0
        %v3583 = vadd.f32 0.0, %v3582
        %3584 = vmatmul.f32.gmra.mxu0 %v3533
        %v3585 = vpop.f32.mrf.mxu0
        %v3586 = vadd.f32 0.0, %v3585
        %3587 = vdwg.mxu0
        %v3588 = vstv %s454
        %v3589 = vmul.f32 %v3588, %v3565
        %v3590 = vmul.f32 %v3588, %v3568
        %v3591 = vmul.f32 %v3588, %v3571
        %v3592 = vmul.f32 %v3588, %v3574
        %v3593 = vmul.f32 %v3588, %v3577
        %v3594 = vmul.f32 %v3588, %v3580
        %v3595 = vmul.f32 %v3588, %v3583
        %v3596 = vmul.f32 %v3588, %v3586
        %v3597 = vadd.f32 %v3589, %v3358
        %v3598 = vadd.f32 %v3590, %v3359
        %v3599 = vadd.f32 %v3591, %v3360
        %v3600 = vadd.f32 %v3592, %v3361
        %v3601 = vadd.f32 %v3593, %v3362
        %v3602 = vadd.f32 %v3594, %v3363
        %v3603 = vadd.f32 %v3595, %v3364
        %v3604 = vadd.f32 %v3596, %v3365
        %v3605 = vrot.slane %v3597, 7
        %v3606 = vrot.slane %v3598, 7
        %v3607 = vrot.slane %v3599, 7
        %v3608 = vrot.slane %v3600, 7
        %v3609 = vrot.slane %v3601, 7
        %v3610 = vrot.slane %v3602, 7
        %v3611 = vrot.slane %v3603, 7
        %v3612 = vrot.slane %v3604, 7
        %v3613 = vsel %vm465, %v3611, %v3612
        %v3614 = vsel %vm465, %v3610, %v3611
        %v3615 = vsel %vm465, %v3609, %v3610
        %v3616 = vsel %vm465, %v3608, %v3609
        %v3617 = vsel %vm465, %v3607, %v3608
        %v3618 = vsel %vm465, %v3606, %v3607
        %v3619 = vsel %vm465, %v3605, %v3606
        %v3620 = vsel %vm465, %v3612, %v3605
        %v3621 = vmul.f32 %v3613, %v485
        %v3622 = vmul.f32 %v3620, %v490
        %v3623 = vmul.f32 %v3619, %v495
        %v3624 = vmul.f32 %v3618, %v500
        %v3625 = vmul.f32 %v3617, %v505
        %v3626 = vmul.f32 %v3616, %v510
        %v3627 = vmul.f32 %v3615, %v515
        %v3628 = vmul.f32 %v3614, %v520
        %s3629 = scalar_lea.vmem [#allocation5], 864
        %v3630 = vld [vmem:[%s3629] sm:$0xff]
        %v3631 = vld [vmem:[%s3629 + $0x8] sm:$0xff]
        %v3632 = vld [vmem:[%s3629 + $0x10] sm:$0xff]
        %v3633 = vld [vmem:[%s3629 + $0x18] sm:$0xff]
        %v3634 = vmul.f32 %v3604, %v546
        %v3635 = vmul.f32 %v3597, %v551
        %v3636 = vmul.f32 %v3598, %v556
        %v3637 = vmul.f32 %v3599, %v561
        %v3638 = vmul.f32 %v3600, %v566
        %v3639 = vmul.f32 %v3601, %v571
        %v3640 = vmul.f32 %v3602, %v576
        %v3641 = vmul.f32 %v3603, %v581
        %s3642 = scalar_lea.vmem [#allocation5], 896
        %v3643 = vld [vmem:[%s3642] sm:$0xff]
        %v3644 = vld [vmem:[%s3642 + $0x8] sm:$0xff]
        %v3645 = vld [vmem:[%s3642 + $0x10] sm:$0xff]
        %v3646 = vld [vmem:[%s3642 + $0x18] sm:$0xff]
        %v3648 = vsel %vm596, %v3634, 0
        %v3651 = vsel %vm596, %v3635, 0
        %v3654 = vsel %vm596, %v3636, 0
        %v3657 = vsel %vm596, %v3637, 0
        %v3660 = vsel %vm596, %v3638, 0
        %v3663 = vsel %vm596, %v3639, 0
        %v3666 = vsel %vm596, %v3640, 0
        %v3669 = vsel %vm596, %v3641, 0
        %3671 = vmatpush.msra.mxu0 0.0
        %3672 = vmatpush.msra.mxu0 0.0
        %3673 = vmatpush.msra.mxu0 0.0
        %3674 = vmatpush.msra.mxu0 0.0
        %3675 = vmatpush.msra.mxu0 0.0
        %3676 = vmatpush.msra.mxu0 0.0
        %3677 = vmatpush.msra.mxu0 0.0
        %3678 = vmatpush.msra.mxu0 0.0
        %3679 = vmatpush.msra.mxu0 0.0
        %3680 = vmatpush.msra.mxu0 0.0
        %3681 = vmatpush.msra.mxu0 0.0
        %3682 = vmatpush.msra.mxu0 0.0
        %3683 = vmatpush.msra.mxu0 %v3646
        %3684 = vmatpush.msra.mxu0 %v3645
        %3685 = vmatpush.msra.mxu0 %v3644
        %3686 = vmatpush.msra.mxu0 %v3643
        %3687 = vmatmul.f32.gmra.mxu0 %v3648
        %v3688 = vpop.f32.mrf.mxu0
        %v3689 = vadd.f32 0.0, %v3688
        %3690 = vmatmul.f32.gmra.mxu0 %v3651
        %v3691 = vpop.f32.mrf.mxu0
        %v3692 = vadd.f32 0.0, %v3691
        %3693 = vmatmul.f32.gmra.mxu0 %v3654
        %v3694 = vpop.f32.mrf.mxu0
        %v3695 = vadd.f32 0.0, %v3694
        %3696 = vmatmul.f32.gmra.mxu0 %v3657
        %v3697 = vpop.f32.mrf.mxu0
        %v3698 = vadd.f32 0.0, %v3697
        %3699 = vmatmul.f32.gmra.mxu0 %v3660
        %v3700 = vpop.f32.mrf.mxu0
        %v3701 = vadd.f32 0.0, %v3700
        %3702 = vmatmul.f32.gmra.mxu0 %v3663
        %v3703 = vpop.f32.mrf.mxu0
        %v3704 = vadd.f32 0.0, %v3703
        %3705 = vmatmul.f32.gmra.mxu0 %v3666
        %v3706 = vpop.f32.mrf.mxu0
        %v3707 = vadd.f32 0.0, %v3706
        %3708 = vmatmul.f32.gmra.mxu0 %v3669
        %v3709 = vpop.f32.mrf.mxu0
        %v3710 = vadd.f32 0.0, %v3709
        %3711 = vdwg.mxu0
        %v3713 = vsel %vm596, %v3621, 0
        %v3716 = vsel %vm596, %v3622, 0
        %v3719 = vsel %vm596, %v3623, 0
        %v3722 = vsel %vm596, %v3624, 0
        %v3725 = vsel %vm596, %v3625, 0
        %v3728 = vsel %vm596, %v3626, 0
        %v3731 = vsel %vm596, %v3627, 0
        %v3734 = vsel %vm596, %v3628, 0
        %3736 = vmatpush.msra.mxu0 0.0
        %3737 = vmatpush.msra.mxu0 0.0
        %3738 = vmatpush.msra.mxu0 0.0
        %3739 = vmatpush.msra.mxu0 0.0
        %3740 = vmatpush.msra.mxu0 0.0
        %3741 = vmatpush.msra.mxu0 0.0
        %3742 = vmatpush.msra.mxu0 0.0
        %3743 = vmatpush.msra.mxu0 0.0
        %3744 = vmatpush.msra.mxu0 0.0
        %3745 = vmatpush.msra.mxu0 0.0
        %3746 = vmatpush.msra.mxu0 0.0
        %3747 = vmatpush.msra.mxu0 0.0
        %3748 = vmatpush.msra.mxu0 %v3633
        %3749 = vmatpush.msra.mxu0 %v3632
        %3750 = vmatpush.msra.mxu0 %v3631
        %3751 = vmatpush.msra.mxu0 %v3630
        %3752 = vmatmul.f32.gmra.mxu0 %v3713
        %v3753 = vpop.f32.mrf.mxu0
        %v3754 = vadd.f32 %v3689, %v3753
        %3755 = vmatmul.f32.gmra.mxu0 %v3716
        %v3756 = vpop.f32.mrf.mxu0
        %v3757 = vadd.f32 %v3692, %v3756
        %3758 = vmatmul.f32.gmra.mxu0 %v3719
        %v3759 = vpop.f32.mrf.mxu0
        %v3760 = vadd.f32 %v3695, %v3759
        %3761 = vmatmul.f32.gmra.mxu0 %v3722
        %v3762 = vpop.f32.mrf.mxu0
        %v3763 = vadd.f32 %v3698, %v3762
        %3764 = vmatmul.f32.gmra.mxu0 %v3725
        %v3765 = vpop.f32.mrf.mxu0
        %v3766 = vadd.f32 %v3701, %v3765
        %3767 = vmatmul.f32.gmra.mxu0 %v3728
        %v3768 = vpop.f32.mrf.mxu0
        %v3769 = vadd.f32 %v3704, %v3768
        %3770 = vmatmul.f32.gmra.mxu0 %v3731
        %v3771 = vpop.f32.mrf.mxu0
        %v3772 = vadd.f32 %v3707, %v3771
        %3773 = vmatmul.f32.gmra.mxu0 %v3734
        %v3774 = vpop.f32.mrf.mxu0
        %v3775 = vadd.f32 %v3710, %v3774
        %3776 = vdwg.mxu0
        %v3777 = vrot.slane %v3597, 1
        %v3778 = vrot.slane %v3598, 1
        %v3779 = vrot.slane %v3599, 1
        %v3780 = vrot.slane %v3600, 1
        %v3781 = vrot.slane %v3601, 1
        %v3782 = vrot.slane %v3602, 1
        %v3783 = vrot.slane %v3603, 1
        %v3784 = vrot.slane %v3604, 1
        %v3785 = vsel %vm735, %v3783, %v3784
        %v3786 = vsel %vm735, %v3782, %v3783
        %v3787 = vsel %vm735, %v3781, %v3782
        %v3788 = vsel %vm735, %v3780, %v3781
        %v3789 = vsel %vm735, %v3779, %v3780
        %v3790 = vsel %vm735, %v3778, %v3779
        %v3791 = vsel %vm735, %v3777, %v3778
        %v3792 = vsel %vm735, %v3784, %v3777
        %v3793 = vmul.f32 %v3792, %v756
        %v3794 = vmul.f32 %v3791, %v761
        %v3795 = vmul.f32 %v3790, %v766
        %v3796 = vmul.f32 %v3789, %v771
        %v3797 = vmul.f32 %v3788, %v776
        %v3798 = vmul.f32 %v3787, %v781
        %v3799 = vmul.f32 %v3786, %v786
        %v3800 = vmul.f32 %v3785, %v791
        %s3801 = scalar_lea.vmem [#allocation5], 928
        %v3802 = vld [vmem:[%s3801] sm:$0xff]
        %v3803 = vld [vmem:[%s3801 + $0x8] sm:$0xff]
        %v3804 = vld [vmem:[%s3801 + $0x10] sm:$0xff]
        %v3805 = vld [vmem:[%s3801 + $0x18] sm:$0xff]
        %v3807 = vsel %vm596, %v3793, 0
        %v3810 = vsel %vm596, %v3794, 0
        %v3813 = vsel %vm596, %v3795, 0
        %v3816 = vsel %vm596, %v3796, 0
        %v3819 = vsel %vm596, %v3797, 0
        %v3822 = vsel %vm596, %v3798, 0
        %v3825 = vsel %vm596, %v3799, 0
        %v3828 = vsel %vm596, %v3800, 0
        %3830 = vmatpush.msra.mxu0 0.0
        %3831 = vmatpush.msra.mxu0 0.0
        %3832 = vmatpush.msra.mxu0 0.0
        %3833 = vmatpush.msra.mxu0 0.0
        %3834 = vmatpush.msra.mxu0 0.0
        %3835 = vmatpush.msra.mxu0 0.0
        %3836 = vmatpush.msra.mxu0 0.0
        %3837 = vmatpush.msra.mxu0 0.0
        %3838 = vmatpush.msra.mxu0 0.0
        %3839 = vmatpush.msra.mxu0 0.0
        %3840 = vmatpush.msra.mxu0 0.0
        %3841 = vmatpush.msra.mxu0 0.0
        %3842 = vmatpush.msra.mxu0 %v3805
        %3843 = vmatpush.msra.mxu0 %v3804
        %3844 = vmatpush.msra.mxu0 %v3803
        %3845 = vmatpush.msra.mxu0 %v3802
        %3846 = vmatmul.f32.gmra.mxu0 %v3807
        %v3847 = vpop.f32.mrf.mxu0
        %v3848 = vadd.f32 0.0, %v3847
        %3849 = vmatmul.f32.gmra.mxu0 %v3810
        %v3850 = vpop.f32.mrf.mxu0
        %v3851 = vadd.f32 0.0, %v3850
        %3852 = vmatmul.f32.gmra.mxu0 %v3813
        %v3853 = vpop.f32.mrf.mxu0
        %v3854 = vadd.f32 0.0, %v3853
        %3855 = vmatmul.f32.gmra.mxu0 %v3816
        %v3856 = vpop.f32.mrf.mxu0
        %v3857 = vadd.f32 0.0, %v3856
        %3858 = vmatmul.f32.gmra.mxu0 %v3819
        %v3859 = vpop.f32.mrf.mxu0
        %v3860 = vadd.f32 0.0, %v3859
        %3861 = vmatmul.f32.gmra.mxu0 %v3822
        %v3862 = vpop.f32.mrf.mxu0
        %v3863 = vadd.f32 0.0, %v3862
        %3864 = vmatmul.f32.gmra.mxu0 %v3825
        %v3865 = vpop.f32.mrf.mxu0
        %v3866 = vadd.f32 0.0, %v3865
        %3867 = vmatmul.f32.gmra.mxu0 %v3828
        %v3868 = vpop.f32.mrf.mxu0
        %v3869 = vadd.f32 0.0, %v3868
        %3870 = vdwg.mxu0
        %v3871 = vadd.f32 %v3754, %v3848
        %v3872 = vadd.f32 %v3757, %v3851
        %v3873 = vadd.f32 %v3760, %v3854
        %v3874 = vadd.f32 %v3763, %v3857
        %v3875 = vadd.f32 %v3766, %v3860
        %v3876 = vadd.f32 %v3769, %v3863
        %v3877 = vadd.f32 %v3772, %v3866
        %v3878 = vadd.f32 %v3775, %v3869
        %v3879 = vmul.f32 %v3620, %v891
        %v3880 = vmul.f32 %v3619, %v896
        %v3881 = vmul.f32 %v3618, %v901
        %v3882 = vmul.f32 %v3617, %v906
        %v3883 = vmul.f32 %v3616, %v911
        %v3884 = vmul.f32 %v3615, %v916
        %v3885 = vmul.f32 %v3614, %v921
        %v3886 = vmul.f32 %v3613, %v926
        %s3887 = scalar_lea.vmem [#allocation5], 960
        %v3888 = vld [vmem:[%s3887] sm:$0xff]
        %v3889 = vld [vmem:[%s3887 + $0x8] sm:$0xff]
        %v3890 = vld [vmem:[%s3887 + $0x10] sm:$0xff]
        %v3891 = vld [vmem:[%s3887 + $0x18] sm:$0xff]
        %v3893 = vsel %vm596, %v3879, 0
        %v3896 = vsel %vm596, %v3880, 0
        %v3899 = vsel %vm596, %v3881, 0
        %v3902 = vsel %vm596, %v3882, 0
        %v3905 = vsel %vm596, %v3883, 0
        %v3908 = vsel %vm596, %v3884, 0
        %v3911 = vsel %vm596, %v3885, 0
        %v3914 = vsel %vm596, %v3886, 0
        %3916 = vmatpush.msra.mxu0 0.0
        %3917 = vmatpush.msra.mxu0 0.0
        %3918 = vmatpush.msra.mxu0 0.0
        %3919 = vmatpush.msra.mxu0 0.0
        %3920 = vmatpush.msra.mxu0 0.0
        %3921 = vmatpush.msra.mxu0 0.0
        %3922 = vmatpush.msra.mxu0 0.0
        %3923 = vmatpush.msra.mxu0 0.0
        %3924 = vmatpush.msra.mxu0 0.0
        %3925 = vmatpush.msra.mxu0 0.0
        %3926 = vmatpush.msra.mxu0 0.0
        %3927 = vmatpush.msra.mxu0 0.0
        %3928 = vmatpush.msra.mxu0 %v3891
        %3929 = vmatpush.msra.mxu0 %v3890
        %3930 = vmatpush.msra.mxu0 %v3889
        %3931 = vmatpush.msra.mxu0 %v3888
        %3932 = vmatmul.f32.gmra.mxu0 %v3893
        %v3933 = vpop.f32.mrf.mxu0
        %v3934 = vadd.f32 0.0, %v3933
        %3935 = vmatmul.f32.gmra.mxu0 %v3896
        %v3936 = vpop.f32.mrf.mxu0
        %v3937 = vadd.f32 0.0, %v3936
        %3938 = vmatmul.f32.gmra.mxu0 %v3899
        %v3939 = vpop.f32.mrf.mxu0
        %v3940 = vadd.f32 0.0, %v3939
        %3941 = vmatmul.f32.gmra.mxu0 %v3902
        %v3942 = vpop.f32.mrf.mxu0
        %v3943 = vadd.f32 0.0, %v3942
        %3944 = vmatmul.f32.gmra.mxu0 %v3905
        %v3945 = vpop.f32.mrf.mxu0
        %v3946 = vadd.f32 0.0, %v3945
        %3947 = vmatmul.f32.gmra.mxu0 %v3908
        %v3948 = vpop.f32.mrf.mxu0
        %v3949 = vadd.f32 0.0, %v3948
        %3950 = vmatmul.f32.gmra.mxu0 %v3911
        %v3951 = vpop.f32.mrf.mxu0
        %v3952 = vadd.f32 0.0, %v3951
        %3953 = vmatmul.f32.gmra.mxu0 %v3914
        %v3954 = vpop.f32.mrf.mxu0
        %v3955 = vadd.f32 0.0, %v3954
        %3956 = vdwg.mxu0
        %v3957 = vadd.f32 %v3871, %v3934
        %v3958 = vadd.f32 %v3872, %v3937
        %v3959 = vadd.f32 %v3873, %v3940
        %v3960 = vadd.f32 %v3874, %v3943
        %v3961 = vadd.f32 %v3875, %v3946
        %v3962 = vadd.f32 %v3876, %v3949
        %v3963 = vadd.f32 %v3877, %v3952
        %v3964 = vadd.f32 %v3878, %v3955
        %s3965 = scalar_lea.vmem [#allocation5], 992
        %v3966 = vld [vmem:[%s3965] sm:$0xff]
        %v3967 = vld [vmem:[%s3965 + $0x8] sm:$0xff]
        %v3968 = vld [vmem:[%s3965 + $0x10] sm:$0xff]
        %v3969 = vld [vmem:[%s3965 + $0x18] sm:$0xff]
        %v3971 = vsel %vm596, %v3597, 0
        %v3974 = vsel %vm596, %v3598, 0
        %v3977 = vsel %vm596, %v3599, 0
        %v3980 = vsel %vm596, %v3600, 0
        %v3983 = vsel %vm596, %v3601, 0
        %v3986 = vsel %vm596, %v3602, 0
        %v3989 = vsel %vm596, %v3603, 0
        %v3992 = vsel %vm596, %v3604, 0
        %3994 = vmatpush.msra.mxu0 0.0
        %3995 = vmatpush.msra.mxu0 0.0
        %3996 = vmatpush.msra.mxu0 0.0
        %3997 = vmatpush.msra.mxu0 0.0
        %3998 = vmatpush.msra.mxu0 0.0
        %3999 = vmatpush.msra.mxu0 0.0
        %4000 = vmatpush.msra.mxu0 0.0
        %4001 = vmatpush.msra.mxu0 0.0
        %4002 = vmatpush.msra.mxu0 0.0
        %4003 = vmatpush.msra.mxu0 0.0
        %4004 = vmatpush.msra.mxu0 0.0
        %4005 = vmatpush.msra.mxu0 0.0
        %4006 = vmatpush.msra.mxu0 %v3969
        %4007 = vmatpush.msra.mxu0 %v3968
        %4008 = vmatpush.msra.mxu0 %v3967
        %4009 = vmatpush.msra.mxu0 %v3966
        %4010 = vmatmul.f32.gmra.mxu0 %v3971
        %v4011 = vpop.f32.mrf.mxu0
        %v4012 = vadd.f32 0.0, %v4011
        %4013 = vmatmul.f32.gmra.mxu0 %v3974
        %v4014 = vpop.f32.mrf.mxu0
        %v4015 = vadd.f32 0.0, %v4014
        %4016 = vmatmul.f32.gmra.mxu0 %v3977
        %v4017 = vpop.f32.mrf.mxu0
        %v4018 = vadd.f32 0.0, %v4017
        %4019 = vmatmul.f32.gmra.mxu0 %v3980
        %v4020 = vpop.f32.mrf.mxu0
        %v4021 = vadd.f32 0.0, %v4020
        %4022 = vmatmul.f32.gmra.mxu0 %v3983
        %v4023 = vpop.f32.mrf.mxu0
        %v4024 = vadd.f32 0.0, %v4023
        %4025 = vmatmul.f32.gmra.mxu0 %v3986
        %v4026 = vpop.f32.mrf.mxu0
        %v4027 = vadd.f32 0.0, %v4026
        %4028 = vmatmul.f32.gmra.mxu0 %v3989
        %v4029 = vpop.f32.mrf.mxu0
        %v4030 = vadd.f32 0.0, %v4029
        %4031 = vmatmul.f32.gmra.mxu0 %v3992
        %v4032 = vpop.f32.mrf.mxu0
        %v4033 = vadd.f32 0.0, %v4032
        %4034 = vdwg.mxu0
        %v4035 = vadd.f32 %v3957, %v4012
        %v4036 = vadd.f32 %v3958, %v4015
        %v4037 = vadd.f32 %v3959, %v4018
        %v4038 = vadd.f32 %v3960, %v4021
        %v4039 = vadd.f32 %v3961, %v4024
        %v4040 = vadd.f32 %v3962, %v4027
        %v4041 = vadd.f32 %v3963, %v4030
        %v4042 = vadd.f32 %v3964, %v4033
        %v4043 = vmul.f32 %v3791, %v1104
        %v4044 = vmul.f32 %v3790, %v1109
        %v4045 = vmul.f32 %v3789, %v1114
        %v4046 = vmul.f32 %v3788, %v1119
        %v4047 = vmul.f32 %v3787, %v1124
        %v4048 = vmul.f32 %v3786, %v1129
        %v4049 = vmul.f32 %v3785, %v1134
        %v4050 = vmul.f32 %v3792, %v1139
        %s4051 = scalar_lea.vmem [#allocation5], 1024
        %v4052 = vld [vmem:[%s4051] sm:$0xff]
        %v4053 = vld [vmem:[%s4051 + $0x8] sm:$0xff]
        %v4054 = vld [vmem:[%s4051 + $0x10] sm:$0xff]
        %v4055 = vld [vmem:[%s4051 + $0x18] sm:$0xff]
        %v4057 = vsel %vm596, %v4043, 0
        %v4060 = vsel %vm596, %v4044, 0
        %v4063 = vsel %vm596, %v4045, 0
        %v4066 = vsel %vm596, %v4046, 0
        %v4069 = vsel %vm596, %v4047, 0
        %v4072 = vsel %vm596, %v4048, 0
        %v4075 = vsel %vm596, %v4049, 0
        %v4078 = vsel %vm596, %v4050, 0
        %4080 = vmatpush.msra.mxu0 0.0
        %4081 = vmatpush.msra.mxu0 0.0
        %4082 = vmatpush.msra.mxu0 0.0
        %4083 = vmatpush.msra.mxu0 0.0
        %4084 = vmatpush.msra.mxu0 0.0
        %4085 = vmatpush.msra.mxu0 0.0
        %4086 = vmatpush.msra.mxu0 0.0
        %4087 = vmatpush.msra.mxu0 0.0
        %4088 = vmatpush.msra.mxu0 0.0
        %4089 = vmatpush.msra.mxu0 0.0
        %4090 = vmatpush.msra.mxu0 0.0
        %4091 = vmatpush.msra.mxu0 0.0
        %4092 = vmatpush.msra.mxu0 %v4055
        %4093 = vmatpush.msra.mxu0 %v4054
        %4094 = vmatpush.msra.mxu0 %v4053
        %4095 = vmatpush.msra.mxu0 %v4052
        %4096 = vmatmul.f32.gmra.mxu0 %v4057
        %v4097 = vpop.f32.mrf.mxu0
        %v4098 = vadd.f32 0.0, %v4097
        %4099 = vmatmul.f32.gmra.mxu0 %v4060
        %v4100 = vpop.f32.mrf.mxu0
        %v4101 = vadd.f32 0.0, %v4100
        %4102 = vmatmul.f32.gmra.mxu0 %v4063
        %v4103 = vpop.f32.mrf.mxu0
        %v4104 = vadd.f32 0.0, %v4103
        %4105 = vmatmul.f32.gmra.mxu0 %v4066
        %v4106 = vpop.f32.mrf.mxu0
        %v4107 = vadd.f32 0.0, %v4106
        %4108 = vmatmul.f32.gmra.mxu0 %v4069
        %v4109 = vpop.f32.mrf.mxu0
        %v4110 = vadd.f32 0.0, %v4109
        %4111 = vmatmul.f32.gmra.mxu0 %v4072
        %v4112 = vpop.f32.mrf.mxu0
        %v4113 = vadd.f32 0.0, %v4112
        %4114 = vmatmul.f32.gmra.mxu0 %v4075
        %v4115 = vpop.f32.mrf.mxu0
        %v4116 = vadd.f32 0.0, %v4115
        %4117 = vmatmul.f32.gmra.mxu0 %v4078
        %v4118 = vpop.f32.mrf.mxu0
        %v4119 = vadd.f32 0.0, %v4118
        %4120 = vdwg.mxu0
        %v4121 = vadd.f32 %v4035, %v4098
        %v4122 = vadd.f32 %v4036, %v4101
        %v4123 = vadd.f32 %v4037, %v4104
        %v4124 = vadd.f32 %v4038, %v4107
        %v4125 = vadd.f32 %v4039, %v4110
        %v4126 = vadd.f32 %v4040, %v4113
        %v4127 = vadd.f32 %v4041, %v4116
        %v4128 = vadd.f32 %v4042, %v4119
        %v4129 = vmul.f32 %v3619, %v1239
        %v4130 = vmul.f32 %v3618, %v1244
        %v4131 = vmul.f32 %v3617, %v1249
        %v4132 = vmul.f32 %v3616, %v1254
        %v4133 = vmul.f32 %v3615, %v1259
        %v4134 = vmul.f32 %v3614, %v1264
        %v4135 = vmul.f32 %v3613, %v1269
        %v4136 = vmul.f32 %v3620, %v1274
        %s4137 = scalar_lea.vmem [#allocation5], 1056
        %v4138 = vld [vmem:[%s4137] sm:$0xff]
        %v4139 = vld [vmem:[%s4137 + $0x8] sm:$0xff]
        %v4140 = vld [vmem:[%s4137 + $0x10] sm:$0xff]
        %v4141 = vld [vmem:[%s4137 + $0x18] sm:$0xff]
        %v4143 = vsel %vm596, %v4129, 0
        %v4146 = vsel %vm596, %v4130, 0
        %v4149 = vsel %vm596, %v4131, 0
        %v4152 = vsel %vm596, %v4132, 0
        %v4155 = vsel %vm596, %v4133, 0
        %v4158 = vsel %vm596, %v4134, 0
        %v4161 = vsel %vm596, %v4135, 0
        %v4164 = vsel %vm596, %v4136, 0
        %4166 = vmatpush.msra.mxu0 0.0
        %4167 = vmatpush.msra.mxu0 0.0
        %4168 = vmatpush.msra.mxu0 0.0
        %4169 = vmatpush.msra.mxu0 0.0
        %4170 = vmatpush.msra.mxu0 0.0
        %4171 = vmatpush.msra.mxu0 0.0
        %4172 = vmatpush.msra.mxu0 0.0
        %4173 = vmatpush.msra.mxu0 0.0
        %4174 = vmatpush.msra.mxu0 0.0
        %4175 = vmatpush.msra.mxu0 0.0
        %4176 = vmatpush.msra.mxu0 0.0
        %4177 = vmatpush.msra.mxu0 0.0
        %4178 = vmatpush.msra.mxu0 %v4141
        %4179 = vmatpush.msra.mxu0 %v4140
        %4180 = vmatpush.msra.mxu0 %v4139
        %4181 = vmatpush.msra.mxu0 %v4138
        %4182 = vmatmul.f32.gmra.mxu0 %v4143
        %v4183 = vpop.f32.mrf.mxu0
        %v4184 = vadd.f32 0.0, %v4183
        %4185 = vmatmul.f32.gmra.mxu0 %v4146
        %v4186 = vpop.f32.mrf.mxu0
        %v4187 = vadd.f32 0.0, %v4186
        %4188 = vmatmul.f32.gmra.mxu0 %v4149
        %v4189 = vpop.f32.mrf.mxu0
        %v4190 = vadd.f32 0.0, %v4189
        %4191 = vmatmul.f32.gmra.mxu0 %v4152
        %v4192 = vpop.f32.mrf.mxu0
        %v4193 = vadd.f32 0.0, %v4192
        %4194 = vmatmul.f32.gmra.mxu0 %v4155
        %v4195 = vpop.f32.mrf.mxu0
        %v4196 = vadd.f32 0.0, %v4195
        %4197 = vmatmul.f32.gmra.mxu0 %v4158
        %v4198 = vpop.f32.mrf.mxu0
        %v4199 = vadd.f32 0.0, %v4198
        %4200 = vmatmul.f32.gmra.mxu0 %v4161
        %v4201 = vpop.f32.mrf.mxu0
        %v4202 = vadd.f32 0.0, %v4201
        %4203 = vmatmul.f32.gmra.mxu0 %v4164
        %v4204 = vpop.f32.mrf.mxu0
        %v4205 = vadd.f32 0.0, %v4204
        %4206 = vdwg.mxu0
        %v4207 = vadd.f32 %v4121, %v4184
        %v4208 = vadd.f32 %v4122, %v4187
        %v4209 = vadd.f32 %v4123, %v4190
        %v4210 = vadd.f32 %v4124, %v4193
        %v4211 = vadd.f32 %v4125, %v4196
        %v4212 = vadd.f32 %v4126, %v4199
        %v4213 = vadd.f32 %v4127, %v4202
        %v4214 = vadd.f32 %v4128, %v4205
        %v4215 = vmul.f32 %v3598, %v1374
        %v4216 = vmul.f32 %v3599, %v1379
        %v4217 = vmul.f32 %v3600, %v1384
        %v4218 = vmul.f32 %v3601, %v1389
        %v4219 = vmul.f32 %v3602, %v1394
        %v4220 = vmul.f32 %v3603, %v1399
        %v4221 = vmul.f32 %v3604, %v1404
        %v4222 = vmul.f32 %v3597, %v1409
        %s4223 = scalar_lea.vmem [#allocation5], 1088
        %v4224 = vld [vmem:[%s4223] sm:$0xff]
        %v4225 = vld [vmem:[%s4223 + $0x8] sm:$0xff]
        %v4226 = vld [vmem:[%s4223 + $0x10] sm:$0xff]
        %v4227 = vld [vmem:[%s4223 + $0x18] sm:$0xff]
        %v4229 = vsel %vm596, %v4215, 0
        %v4232 = vsel %vm596, %v4216, 0
        %v4235 = vsel %vm596, %v4217, 0
        %v4238 = vsel %vm596, %v4218, 0
        %v4241 = vsel %vm596, %v4219, 0
        %v4244 = vsel %vm596, %v4220, 0
        %v4247 = vsel %vm596, %v4221, 0
        %v4250 = vsel %vm596, %v4222, 0
        %4252 = vmatpush.msra.mxu0 0.0
        %4253 = vmatpush.msra.mxu0 0.0
        %4254 = vmatpush.msra.mxu0 0.0
        %4255 = vmatpush.msra.mxu0 0.0
        %4256 = vmatpush.msra.mxu0 0.0
        %4257 = vmatpush.msra.mxu0 0.0
        %4258 = vmatpush.msra.mxu0 0.0
        %4259 = vmatpush.msra.mxu0 0.0
        %4260 = vmatpush.msra.mxu0 0.0
        %4261 = vmatpush.msra.mxu0 0.0
        %4262 = vmatpush.msra.mxu0 0.0
        %4263 = vmatpush.msra.mxu0 0.0
        %4264 = vmatpush.msra.mxu0 %v4227
        %4265 = vmatpush.msra.mxu0 %v4226
        %4266 = vmatpush.msra.mxu0 %v4225
        %4267 = vmatpush.msra.mxu0 %v4224
        %4268 = vmatmul.f32.gmra.mxu0 %v4229
        %v4269 = vpop.f32.mrf.mxu0
        %v4270 = vadd.f32 0.0, %v4269
        %4271 = vmatmul.f32.gmra.mxu0 %v4232
        %v4272 = vpop.f32.mrf.mxu0
        %v4273 = vadd.f32 0.0, %v4272
        %4274 = vmatmul.f32.gmra.mxu0 %v4235
        %v4275 = vpop.f32.mrf.mxu0
        %v4276 = vadd.f32 0.0, %v4275
        %4277 = vmatmul.f32.gmra.mxu0 %v4238
        %v4278 = vpop.f32.mrf.mxu0
        %v4279 = vadd.f32 0.0, %v4278
        %4280 = vmatmul.f32.gmra.mxu0 %v4241
        %v4281 = vpop.f32.mrf.mxu0
        %v4282 = vadd.f32 0.0, %v4281
        %4283 = vmatmul.f32.gmra.mxu0 %v4244
        %v4284 = vpop.f32.mrf.mxu0
        %v4285 = vadd.f32 0.0, %v4284
        %4286 = vmatmul.f32.gmra.mxu0 %v4247
        %v4287 = vpop.f32.mrf.mxu0
        %v4288 = vadd.f32 0.0, %v4287
        %4289 = vmatmul.f32.gmra.mxu0 %v4250
        %v4290 = vpop.f32.mrf.mxu0
        %v4291 = vadd.f32 0.0, %v4290
        %4292 = vdwg.mxu0
        %v4293 = vadd.f32 %v4207, %v4270
        %v4294 = vadd.f32 %v4208, %v4273
        %v4295 = vadd.f32 %v4209, %v4276
        %v4296 = vadd.f32 %v4210, %v4279
        %v4297 = vadd.f32 %v4211, %v4282
        %v4298 = vadd.f32 %v4212, %v4285
        %v4299 = vadd.f32 %v4213, %v4288
        %v4300 = vadd.f32 %v4214, %v4291
        %v4301 = vmul.f32 %v3790, %v1509
        %v4302 = vmul.f32 %v3789, %v1514
        %v4303 = vmul.f32 %v3788, %v1519
        %v4304 = vmul.f32 %v3787, %v1524
        %v4305 = vmul.f32 %v3786, %v1529
        %v4306 = vmul.f32 %v3785, %v1534
        %v4307 = vmul.f32 %v3792, %v1539
        %v4308 = vmul.f32 %v3791, %v1544
        %s4309 = scalar_lea.vmem [#allocation5], 1120
        %v4310 = vld [vmem:[%s4309] sm:$0xff]
        %v4311 = vld [vmem:[%s4309 + $0x8] sm:$0xff]
        %v4312 = vld [vmem:[%s4309 + $0x10] sm:$0xff]
        %v4313 = vld [vmem:[%s4309 + $0x18] sm:$0xff]
        %v4315 = vsel %vm596, %v4301, 0
        %v4318 = vsel %vm596, %v4302, 0
        %v4321 = vsel %vm596, %v4303, 0
        %v4324 = vsel %vm596, %v4304, 0
        %v4327 = vsel %vm596, %v4305, 0
        %v4330 = vsel %vm596, %v4306, 0
        %v4333 = vsel %vm596, %v4307, 0
        %v4336 = vsel %vm596, %v4308, 0
        %4338 = vmatpush.msra.mxu0 0.0
        %4339 = vmatpush.msra.mxu0 0.0
        %4340 = vmatpush.msra.mxu0 0.0
        %4341 = vmatpush.msra.mxu0 0.0
        %4342 = vmatpush.msra.mxu0 0.0
        %4343 = vmatpush.msra.mxu0 0.0
        %4344 = vmatpush.msra.mxu0 0.0
        %4345 = vmatpush.msra.mxu0 0.0
        %4346 = vmatpush.msra.mxu0 0.0
        %4347 = vmatpush.msra.mxu0 0.0
        %4348 = vmatpush.msra.mxu0 0.0
        %4349 = vmatpush.msra.mxu0 0.0
        %4350 = vmatpush.msra.mxu0 %v4313
        %4351 = vmatpush.msra.mxu0 %v4312
        %4352 = vmatpush.msra.mxu0 %v4311
        %4353 = vmatpush.msra.mxu0 %v4310
        %4354 = vmatmul.f32.gmra.mxu0 %v4315
        %v4355 = vpop.f32.mrf.mxu0
        %v4356 = vadd.f32 0.0, %v4355
        %4357 = vmatmul.f32.gmra.mxu0 %v4318
        %v4358 = vpop.f32.mrf.mxu0
        %v4359 = vadd.f32 0.0, %v4358
        %4360 = vmatmul.f32.gmra.mxu0 %v4321
        %v4361 = vpop.f32.mrf.mxu0
        %v4362 = vadd.f32 0.0, %v4361
        %4363 = vmatmul.f32.gmra.mxu0 %v4324
        %v4364 = vpop.f32.mrf.mxu0
        %v4365 = vadd.f32 0.0, %v4364
        %4366 = vmatmul.f32.gmra.mxu0 %v4327
        %v4367 = vpop.f32.mrf.mxu0
        %v4368 = vadd.f32 0.0, %v4367
        %4369 = vmatmul.f32.gmra.mxu0 %v4330
        %v4370 = vpop.f32.mrf.mxu0
        %v4371 = vadd.f32 0.0, %v4370
        %4372 = vmatmul.f32.gmra.mxu0 %v4333
        %v4373 = vpop.f32.mrf.mxu0
        %v4374 = vadd.f32 0.0, %v4373
        %4375 = vmatmul.f32.gmra.mxu0 %v4336
        %v4376 = vpop.f32.mrf.mxu0
        %v4377 = vadd.f32 0.0, %v4376
        %4378 = vdwg.mxu0
        %v4379 = vadd.f32 %v4293, %v4356
        %v4380 = vadd.f32 %v4294, %v4359
        %v4381 = vadd.f32 %v4295, %v4362
        %v4382 = vadd.f32 %v4296, %v4365
        %v4383 = vadd.f32 %v4297, %v4368
        %v4384 = vadd.f32 %v4298, %v4371
        %v4385 = vadd.f32 %v4299, %v4374
        %v4386 = vadd.f32 %v4300, %v4377
        %s4387 = scalar_lea.vmem %s4, 3
        %v4388 = vld [vmem:[%s4387] sm:$0x1]
        %v4390 = vperm.slane %v4388, 0
        %v4392 = vmul.f32 %v4379, %v4390
        %v4393 = vmul.f32 %v4380, %v4390
        %v4394 = vmul.f32 %v4381, %v4390
        %v4395 = vmul.f32 %v4382, %v4390
        %v4396 = vmul.f32 %v4383, %v4390
        %v4397 = vmul.f32 %v4384, %v4390
        %v4398 = vmul.f32 %v4385, %v4390
        %v4399 = vmul.f32 %v4386, %v4390
        %s4400 = scalar_lea.vmem %s5, 3
        %v4401 = vld [vmem:[%s4400] sm:$0x1]
        %v4403 = vperm.slane %v4401, 0
        %v4405 = vadd.f32 %v4392, %v4403
        %v4406 = vadd.f32 %v4393, %v4403
        %v4407 = vadd.f32 %v4394, %v4403
        %v4408 = vadd.f32 %v4395, %v4403
        %v4409 = vadd.f32 %v4396, %v4403
        %v4410 = vadd.f32 %v4397, %v4403
        %v4411 = vadd.f32 %v4398, %v4403
        %v4412 = vadd.f32 %v4399, %v4403
        %v4413 = vmax.f32 %v4405, 0.0
        %v4414 = vmax.f32 %v4406, 0.0
        %v4415 = vmax.f32 %v4407, 0.0
        %v4416 = vmax.f32 %v4408, 0.0
        %v4417 = vmax.f32 %v4409, 0.0
        %v4418 = vmax.f32 %v4410, 0.0
        %v4419 = vmax.f32 %v4411, 0.0
        %v4420 = vmax.f32 %v4412, 0.0
        %v4421 = vadd.f32 %v2854, %v4413
        %v4422 = vadd.f32 %v2855, %v4414
        %v4423 = vadd.f32 %v2856, %v4415
        %v4424 = vadd.f32 %v2857, %v4416
        %v4425 = vadd.f32 %v2858, %v4417
        %v4426 = vadd.f32 %v2859, %v4418
        %v4427 = vadd.f32 %v2860, %v4419
        %v4428 = vadd.f32 %v2861, %v4420
        %v4429 = vld [vmem:[%s10] sm:$0xff]
        %v4430 = vld [vmem:[%s10 + $0x8] sm:$0xff]
        %v4431 = vld [vmem:[%s10 + $0x10] sm:$0xff]
        %v4432 = vld [vmem:[%s10 + $0x18] sm:$0xff]
        %v4433 = vld [vmem:[%s11] sm:$0x1]
        %v4435 = vperm.slane %v4433, 0
        %v4438 = vsel %vm596, %v4421, 0
        %v4441 = vsel %vm596, %v4422, 0
        %v4444 = vsel %vm596, %v4423, 0
        %v4447 = vsel %vm596, %v4424, 0
        %v4450 = vsel %vm596, %v4425, 0
        %v4453 = vsel %vm596, %v4426, 0
        %v4456 = vsel %vm596, %v4427, 0
        %v4459 = vsel %vm596, %v4428, 0
        %4461 = vmatpush.msra.mxu0 0.0
        %4462 = vmatpush.msra.mxu0 0.0
        %4463 = vmatpush.msra.mxu0 0.0
        %4464 = vmatpush.msra.mxu0 0.0
        %4465 = vmatpush.msra.mxu0 0.0
        %4466 = vmatpush.msra.mxu0 0.0
        %4467 = vmatpush.msra.mxu0 0.0
        %4468 = vmatpush.msra.mxu0 0.0
        %4469 = vmatpush.msra.mxu0 0.0
        %4470 = vmatpush.msra.mxu0 0.0
        %4471 = vmatpush.msra.mxu0 0.0
        %4472 = vmatpush.msra.mxu0 0.0
        %4473 = vmatpush.msra.mxu0 %v4432
        %4474 = vmatpush.msra.mxu0 %v4431
        %4475 = vmatpush.msra.mxu0 %v4430
        %4476 = vmatpush.msra.mxu0 %v4429
        %4477 = vmatmul.f32.gmra.mxu0 %v4438
        %v4478 = vpop.f32.mrf.mxu0
        %v4479 = vadd.f32 %v4435, %v4478
        %4480 = vmatmul.f32.gmra.mxu0 %v4441
        %v4481 = vpop.f32.mrf.mxu0
        %v4482 = vadd.f32 %v4435, %v4481
        %4483 = vmatmul.f32.gmra.mxu0 %v4444
        %v4484 = vpop.f32.mrf.mxu0
        %v4485 = vadd.f32 %v4435, %v4484
        %4486 = vmatmul.f32.gmra.mxu0 %v4447
        %v4487 = vpop.f32.mrf.mxu0
        %v4488 = vadd.f32 %v4435, %v4487
        %4489 = vmatmul.f32.gmra.mxu0 %v4450
        %v4490 = vpop.f32.mrf.mxu0
        %v4491 = vadd.f32 %v4435, %v4490
        %4492 = vmatmul.f32.gmra.mxu0 %v4453
        %v4493 = vpop.f32.mrf.mxu0
        %v4494 = vadd.f32 %v4435, %v4493
        %4495 = vmatmul.f32.gmra.mxu0 %v4456
        %v4496 = vpop.f32.mrf.mxu0
        %v4497 = vadd.f32 %v4435, %v4496
        %4498 = vmatmul.f32.gmra.mxu0 %v4459
        %v4499 = vpop.f32.mrf.mxu0
        %v4500 = vadd.f32 %v4435, %v4499
        %4501 = vdwg.mxu0
        %vm4502 = vcmask 64512
        %4503 = vst.msk [vmem:[%s444] sm:$0xff] %vm4502, %v4479
        %4504 = vst.msk [vmem:[%s444 + $0x8] sm:$0xff] %vm4502, %v4482
        %4505 = vst.msk [vmem:[%s444 + $0x10] sm:$0xff] %vm4502, %v4485
        %4506 = vst.msk [vmem:[%s444 + $0x18] sm:$0xff] %vm4502, %v4488
        %4507 = vst.msk [vmem:[%s444 + $0x20] sm:$0xff] %vm4502, %v4491
        %4508 = vst.msk [vmem:[%s444 + $0x28] sm:$0xff] %vm4502, %v4494
        %4509 = vst.msk [vmem:[%s444 + $0x30] sm:$0xff] %vm4502, %v4497
        %4510 = vst.msk [vmem:[%s444 + $0x38] sm:$0xff] %vm4502, %v4500
        %p4511 = scmp.lt.s32.totalorder %s25, 1
        %s4512 = scalar_select %p4511, %s25, 1
        %s4513 = smul.addr %s4512, 8
        %s4514 = smul.addr %s4513, 8
        %s4515 = scalar_lea.vmem %s12, %s4514
        // Predicated region
        $region77: #{tpu_custom_call.1} parent=67 // pred_check
          %p4516 = pneg %p300
        $region78: #{tpu_custom_call.1} parent=67 // pred_check_branch
          %4518 = sbr.rel (%p4516) target = $region80
        $region79: #{tpu_custom_call.1} parent=67 // pred_region
          _
        $region80: #{tpu_custom_call.1} parent=67 // pred_fallthru
          _
      $region68: #{tpu_custom_call.1} parent=5 // pred_fallthru
        _
      %p4519 = scmp.le.s32.totalorder 2, %s20
      // Predicated region
      $region81: #{tpu_custom_call.1} parent=5 // pred_check
        %p4520 = pneg %p4519
      $region82: #{tpu_custom_call.1} parent=5 // pred_check_branch
        %4522 = sbr.rel (%p4520) target = $region84
      $region83: #{tpu_custom_call.1} parent=5 // pred_region
        %s4523 = ssub.s32 %s20, 2
        // Predicated region
        $region85: #{tpu_custom_call.1} parent=83 // pred_check
          %p4524 = pneg %p306
        $region86: #{tpu_custom_call.1} parent=83 // pred_check_branch
          %4526 = sbr.rel (%p4524) target = $region88
        $region87: #{tpu_custom_call.1} parent=83 // pred_region
          %p4527 = scmp.lt.s32.totalorder %s26, 1
          %s4528 = scalar_select %p4527, %s26, 1
          %s4529 = smul.addr %s4528, 8
          %s4530 = smul.addr %s4529, 8
          %s4531 = scalar_lea.vmem %s12, %s4530
        $region88: #{tpu_custom_call.1} parent=83 // pred_fallthru
          _
      $region84: #{tpu_custom_call.1} parent=5 // pred_fallthru
        _
    $region6: #{tpu_custom_call.1} parent=1 // loop_footer
      %s24 = sadd.s32 1, %s20
    $region7: #{tpu_custom_call.1} parent=1 // loop_footer_branch
      %19 = sbr.rel target = $region3
    $region8: #{tpu_custom_call.1} parent=1 // loop_exit
      _
    %4532 = vsyncpa [#allocation3], 1
    %s4533 = scalar_lea.sflag [#allocation3], 1
    %4534 = vsyncpa %s4533, 1
    %4535 = vsyncpa [#allocation4], 1
    %s4536 = scalar_lea.sflag [#allocation4], 1
    %4537 = vsyncpa %s4536, 1

</llo_original>
